<compile_context>
chip_gen: v6e
topology: v6e:2x2x1
jax: 0.10.0
libtpu: 0.0.40
codegen_flags: <defaults>
</compile_context>

<pallas_src>
import functools

import jax
import jax.numpy as jnp
from jax.experimental import pallas as pl
from jax.experimental.pallas import tpu as pltpu

_K = 7     # involution kernel size (fixed by the module)
_GC = 16   # involution group_channels (fixed by the module)


# ------------------------------------------------------------------ kernel ----
def _coord_att_kernel(
        x_ref, pmat_ref, emat_ref,
        w1_ref, b1_ref,
        wa0_ref, ba0_ref, wb0_ref, bb0_ref,
        bns_ref, bnb_ref,
        wahw_ref, bahw_ref,
        wbh_ref, bbh_ref, wbw_ref, bbw_ref,
        wchw_ref, bchw_ref,
        o_ref, *, h, w):
    bf16, f32 = jnp.bfloat16, jnp.float32

    x = x_ref[...]                                   # (B, c, h*w) f32, lane-dense
    B, c, hw = x.shape
    mip = w1_ref.shape[1]
    cr = wa0_ref.shape[1]
    tap_c = wb0_ref.shape[1] // _K                   # 128-padded per-tap block width
    oup = wchw_ref.shape[1] // 2
    L = h + w

    def mmb(a_bf, w_bf):                             # bf16 x bf16 MXU, f32 accumulate
        return jnp.dot(a_bf, w_bf, preferred_element_type=f32)

    def mmf(a, b):                                   # exact f32 matmul (tiny K; 0/1 or 1/n mats)
        return jnp.dot(a, b, preferred_element_type=f32)

    def involution(y3, t_small, wb_ref, bb_ref):
        # Involution(kernel=7, stride=1) on a width-1 spatial map == per-position,
        # per-group dynamic 7-tap 1-D conv along the sequence axis.  The group->channel
        # broadcast is folded into the expanded weights; the 7 taps' weight maps come
        # from ONE matmul against the concatenated (128-lane padded) weight matrix.
        Bb, Ls, C = y3.shape
        wmap = mmb(t_small.astype(bf16), wb_ref[...]) + bb_ref[...]     # (Bb*Ls, 7*tap_c)
        wmap = wmap.reshape(Bb, Ls, _K * tap_c)
        zpad = jnp.zeros((Bb, _K // 2, C), f32)
        ypad = jnp.concatenate([zpad, y3, zpad], axis=1)                # per-image zero pad
        acc = jnp.zeros((Bb, Ls, C), f32)
        for t in range(_K):                                             # static unroll
            acc = acc + wmap[:, :, t * tap_c: t * tap_c + C] * ypad[:, t: t + Ls, :]
        return acc

    # --- coordinate pooling: mean over W and over H via a constant averaging matrix
    #     (stays flat / lane-dense; one MXU push over the whole block of images).
    pooled = mmf(x.reshape(B * c, hw), pmat_ref[...])                   # (B*c, h+w)
    y0 = jnp.swapaxes(pooled.reshape(B, c, L), 1, 2).reshape(B * L, c)  # channels-last seq

    # --- conv1 (1x1) -> Involution -> BatchNorm (inference affine) -> h_swish
    y1 = mmb(y0.astype(bf16), w1_ref[...]) + b1_ref[...]                # (B*L, mip)
    ts0 = mmb(y1.astype(bf16), wa0_ref[...]) + ba0_ref[...]             # (B*L, cr)
    y2 = involution(y1.reshape(B, L, mip), ts0, wb0_ref, bb0_ref)       # (B, L, mip)
    y3 = y2 * bns_ref[...] + bnb_ref[...]
    y3 = y3 * (jnp.clip(y3 + 3.0, 0.0, 6.0) * (1.0 / 6.0))              # h_swish

    # --- h / w branches: both branch reduce-matmuls merged into one (concat on N)
    y3_bf = y3.reshape(B * L, mip).astype(bf16)
    ts_hw = (mmb(y3_bf, wahw_ref[...]) + bahw_ref[...]).reshape(B, L, 2 * cr)
    th = involution(y3[:, :h, :], ts_hw[:, :h, :cr].reshape(B * h, cr), wbh_ref, bbh_ref)
    tw = involution(y3[:, h:, :], ts_hw[:, h:, cr:].reshape(B * w, cr), wbw_ref, bbw_ref)

    # --- both final 1x1 convs merged (concat rows + concat N), exact sigmoid
    t_cat = jnp.concatenate([th, tw], axis=1).reshape(B * L, mip)
    logits = (mmb(t_cat.astype(bf16), wchw_ref[...]) + bchw_ref[...]).reshape(B, L, 2 * oup)
    a_h = 1.0 / (1.0 + jnp.exp(-logits[:, :h, :oup]))                   # (B, h, oup)
    a_w = 1.0 / (1.0 + jnp.exp(-logits[:, h:, oup:]))                   # (B, w, oup)

    # --- gate expansion back to the flat (oup, h*w) layout via exact 0/1 matmuls,
    #     then lane-dense gating multiply and unmasked store.
    emat = emat_ref[...]                                                # (h+w, h*w) f32
    gate_h = mmf(jnp.swapaxes(a_h, 1, 2).reshape(B * oup, h), emat[:h, :])
    gate_w = mmf(jnp.swapaxes(a_w, 1, 2).reshape(B * oup, w), emat[h:, :])
    gate = (gate_h * gate_w).reshape(B, oup, hw)

    o_ref[...] = (x * gate).astype(o_ref.dtype)


_WEIGHT_ORDER = ("w1", "b1", "wa0", "ba0", "wb0", "bb0", "bns", "bnb",
                 "wahw", "bahw", "wbh", "bbh", "wbw", "bbw", "wchw", "bchw")


def _pool_expand_mats(h, w):
    hw = h * w
    k = jnp.arange(hw)
    row, col = k // w, k % w
    lh, lw = jnp.arange(h), jnp.arange(w)
    p_h = (row[:, None] == lh[None, :]).astype(jnp.float32) / w        # (hw, h) mean over W
    p_w = (col[:, None] == lw[None, :]).astype(jnp.float32) / h        # (hw, w) mean over H
    pmat = jnp.concatenate([p_h, p_w], axis=1)                          # (hw, h+w)
    emat = jnp.concatenate(
        [(lh[:, None] == row[None, :]).astype(jnp.float32),             # (h, hw)
         (lw[:, None] == col[None, :]).astype(jnp.float32)], axis=0)    # (w, hw)
    return pmat, emat


def _pick_block_b(n, max_blk=8):
    divs = [d for d in range(1, min(n, max_blk) + 1) if n % d == 0]
    par = [d for d in divs if n // d >= 2]          # keep >=2 grid steps when possible (megacore)
    return max(par) if par else max(divs)


def _coord_att_pallas(x_nchw, kp, block_b=None):
    n, c, h, w = x_nchw.shape
    hw = h * w
    oup = kp["wchw"].shape[1] // 2
    assert oup == c, "CoordAtt final broadcast requires oup == inp"
    if block_b is None:
        block_b = _pick_block_b(n)

    x3 = x_nchw.reshape(n, c, hw)                    # free, contiguous; lane-dense last dim
    pmat, emat = _pool_expand_mats(h, w)
    weights = [pmat, emat] + [kp[k] for k in _WEIGHT_ORDER]

    def full_spec(a):
        nd = a.ndim
        return pl.BlockSpec(a.shape, lambda b, _nd=nd: (0,) * _nd)      # resident across grid

    in_specs = ([pl.BlockSpec((block_b, c, hw), lambda b: (b, 0, 0))]
                + [full_spec(a) for a in weights])

    # rough VMEM budget: double-buffered x/out blocks + intermediates + resident weights
    blk_bytes = block_b * c * hw * 4
    mip = kp["w1"].shape[1]
    tap_c = kp["wb0"].shape[1] // _K
    interm = block_b * (h + w) * (_K * tap_c + 8 * mip) * 4
    wbytes = sum(int(a.size) * a.dtype.itemsize for a in weights)
    vmem_limit = int(min(48 * 1024 * 1024,
                         max(32 * 1024 * 1024,
                             4 * blk_bytes + 2 * interm + 2 * wbytes + 4 * 1024 * 1024)))

    kernel = functools.partial(_coord_att_kernel, h=h, w=w)
    out3 = pl.pallas_call(
        kernel,
        out_shape=jax.ShapeDtypeStruct((n, c, hw), x_nchw.dtype),
        grid=(n // block_b,),
        in_specs=in_specs,
        out_specs=pl.BlockSpec((block_b, c, hw), lambda b: (b, 0, 0)),
        compiler_params=pltpu.CompilerParams(
            dimension_semantics=("parallel",),
            vmem_limit_bytes=vmem_limit),
    )(x3, *weights)
    return out3.reshape(n, c, h, w)


@jax.jit
def coord_att_forward(x_nchw, kernel_params):
    return _coord_att_pallas(x_nchw, kernel_params)


# ------------------------------------------------------- parameter handling ----
def init_params(key, inp, oup, reduction=8):
    mip = max(64, inp // reduction)
    assert mip % _GC == 0
    ks = iter(jax.random.split(key, 32))

    def wmat(shape, scale=0.1):
        return scale * jax.random.normal(next(ks), shape, jnp.float32)

    def inv(c1):
        cr, g = c1 // 4, c1 // _GC
        return dict(wa=wmat((c1, cr)), ba=wmat((cr,)),
                    wb=wmat((cr, _K * _K * g)), bb=wmat((_K * _K * g,)))

    return dict(
        conv1_w=wmat((inp, mip)), conv1_b=wmat((mip,)),
        inv0=inv(mip), invh=inv(mip), invw=inv(mip),
        bn_gamma=1.0 + 0.1 * jax.random.normal(next(ks), (mip,), jnp.float32),
        bn_beta=wmat((mip,)),
        bn_mean=wmat((mip,)),
        bn_var=1.0 + jnp.abs(wmat((mip,))),
        convh_w=wmat((mip, oup)), convh_b=wmat((oup,)),
        convw_w=wmat((mip, oup)), convw_b=wmat((oup,)),
    )


def _expand_inv_conv2_cat(wb, bb, c1, orientation, tap_c):
    # Keep only the 7 kernel positions that survive a width-1 spatial map (centre column
    # for an (L,1) map, centre row for a (1,L) map), expand each per-group weight to its 16
    # channels, zero-pad each tap block to tap_c (=128-multiple) lanes, and concatenate all
    # 7 taps along N so the kernel needs ONE matmul for all tap weight maps.
    g = c1 // _GC
    cr = wb.shape[0]
    wb_r = wb.reshape(cr, g, _K * _K)
    bb_r = bb.reshape(g, _K * _K)
    w_blocks, b_blocks = [], []
    for t in range(_K):
        k = t * _K + _K // 2 if orientation == "v" else (_K // 2) * _K + t
        w_t = jnp.repeat(wb_r[:, :, k], _GC, axis=1)                     # (cr, c1)
        b_t = jnp.repeat(bb_r[:, k], _GC, axis=0)                        # (c1,)
        if tap_c > c1:
            w_t = jnp.pad(w_t, ((0, 0), (0, tap_c - c1)))
            b_t = jnp.pad(b_t, ((0, tap_c - c1),))
        w_blocks.append(w_t)
        b_blocks.append(b_t)
    return (jnp.concatenate(w_blocks, axis=1).astype(jnp.bfloat16),      # (cr, 7*tap_c)
            jnp.concatenate(b_blocks, axis=0)[None, :])                  # (1, 7*tap_c) f32


def prepare_kernel_params(p, eps=1e-5):
    mip = p["conv1_w"].shape[1]
    tap_c = ((mip + 127) // 128) * 128
    bns = p["bn_gamma"] / jnp.sqrt(p["bn_var"] + eps)
    bnb = p["bn_beta"] - p["bn_mean"] * bns
    wb0, bb0 = _expand_inv_conv2_cat(p["inv0"]["wb"], p["inv0"]["bb"], mip, "v", tap_c)
    wbh, bbh = _expand_inv_conv2_cat(p["invh"]["wb"], p["invh"]["bb"], mip, "v", tap_c)
    wbw, bbw = _expand_inv_conv2_cat(p["invw"]["wb"], p["invw"]["bb"], mip, "h", tap_c)
    return dict(
        w1=p["conv1_w"].astype(jnp.bfloat16), b1=p["conv1_b"][None, :],
        wa0=p["inv0"]["wa"].astype(jnp.bfloat16), ba0=p["inv0"]["ba"][None, :],
        wb0=wb0, bb0=bb0,
        bns=bns[None, :], bnb=bnb[None, :],
        # h/w branch reduce-convs merged on N, final 1x1 convs merged on N:
        wahw=jnp.concatenate([p["invh"]["wa"], p["invw"]["wa"]], axis=1).astype(jnp.bfloat16),
        bahw=jnp.concatenate([p["invh"]["ba"], p["invw"]["ba"]], axis=0)[None, :],
        wbh=wbh, bbh=bbh, wbw=wbw, bbw=bbw,
        wchw=jnp.concatenate([p["convh_w"], p["convw_w"]], axis=1).astype(jnp.bfloat16),
        bchw=jnp.concatenate([p["convh_b"], p["convw_b"]], axis=0)[None, :],
    )


# ---------------------------------------------- pure-JAX reference (f32, NCHW) ----
def _ref_involution(x, wa, ba, wb, bb):
    # Exact PyTorch Involution(kernel=7, stride=1) forward (full 7x7 unfold).
    n, c1, H, W = x.shape
    g = c1 // _GC
    t = jnp.einsum("nchw,cd->ndhw", x, wa) + ba[None, :, None, None]
    wgt = jnp.einsum("ndhw,de->nehw", t, wb) + bb[None, :, None, None]
    wgt = wgt.reshape(n, g, _K * _K, H, W)
    xp = jnp.pad(x, ((0, 0), (0, 0), (3, 3), (3, 3))).reshape(n, g, _GC, H + 6, W + 6)
    out = jnp.zeros((n, g, _GC, H, W), jnp.float32)
    for ki in range(_K):
        for kj in range(_K):
            out = out + wgt[:, :, None, ki * _K + kj] * xp[:, :, :, ki:ki + H, kj:kj + W]
    return out.reshape(n, c1, H, W)


def ref_coord_att(x, p, eps=1e-5):
    n, c, h, w = x.shape
    x_h = jnp.mean(x, axis=3, keepdims=True)                                   # (n,c,h,1)
    x_w = jnp.transpose(jnp.mean(x, axis=2, keepdims=True), (0, 1, 3, 2))      # (n,c,w,1)
    y = jnp.concatenate([x_h, x_w], axis=2)
    y = jnp.einsum("nchw,cd->ndhw", y, p["conv1_w"]) + p["conv1_b"][None, :, None, None]
    y = _ref_involution(y, p["inv0"]["wa"], p["inv0"]["ba"], p["inv0"]["wb"], p["inv0"]["bb"])
    sc = p["bn_gamma"] / jnp.sqrt(p["bn_var"] + eps)
    y = (y - p["bn_mean"][None, :, None, None]) * sc[None, :, None, None] \
        + p["bn_beta"][None, :, None, None]
    y = y * jnp.clip(y + 3.0, 0.0, 6.0) / 6.0
    xh, xw = y[:, :, :h, :], y[:, :, h:, :]
    xw = jnp.transpose(xw, (0, 1, 3, 2))
    ah = _ref_involution(xh, p["invh"]["wa"], p["invh"]["ba"], p["invh"]["wb"], p["invh"]["bb"])
    ah = jax.nn.sigmoid(jnp.einsum("nchw,cd->ndhw", ah, p["convh_w"])
                        + p["convh_b"][None, :, None, None])
    aw = _ref_involution(xw, p["invw"]["wa"], p["invw"]["ba"], p["invw"]["wb"], p["invw"]["bb"])
    aw = jax.nn.sigmoid(jnp.einsum("nchw,cd->ndhw", aw, p["convw_w"])
                        + p["convw_b"][None, :, None, None])
    return x * aw * ah


if __name__ == "__main__":
    bs, inp, h, w = 4, 64, 16, 16        # mip = max(64, inp // 8) = 64; block_b=2, grid=2
    oup = inp
    key = jax.random.PRNGKey(0)
    kx, kp = jax.random.split(key)
    x = jax.random.normal(kx, (bs, inp, h, w), jnp.float32)
    params = init_params(kp, inp, oup, reduction=8)
    kparams = prepare_kernel_params(params)

    y = coord_att_forward(x, kparams)
    jax.block_until_ready(y)
    assert y.shape == (bs, inp, h, w) and y.dtype == jnp.float32
    assert bool(jnp.all(jnp.isfinite(y)))

    # validate against a pure-JAX f32 reference of the exact PyTorch forward
    y_ref = jax.jit(ref_coord_att)(x, params)
    err = float(jnp.max(jnp.abs(y - y_ref)))
    assert err < 5e-2, f"max abs err vs reference: {err}"
    print("KERNEL_OK")
</pallas_src>

<mosaic_0001>
module attributes {stable_mosaic.version = 11 : i64} {
  func.func @_coord_att_kernel(%arg0: i32, %arg1: memref<2x64x256xf32, #tpu.memory_space<vmem>>, %arg2: memref<256x32xf32, #tpu.memory_space<vmem>>, %arg3: memref<32x256xf32, #tpu.memory_space<vmem>>, %arg4: memref<64x64xbf16, #tpu.memory_space<vmem>>, %arg5: memref<1x64xf32, #tpu.memory_space<vmem>>, %arg6: memref<64x16xbf16, #tpu.memory_space<vmem>>, %arg7: memref<1x16xf32, #tpu.memory_space<vmem>>, %arg8: memref<16x896xbf16, #tpu.memory_space<vmem>>, %arg9: memref<1x896xf32, #tpu.memory_space<vmem>>, %arg10: memref<1x64xf32, #tpu.memory_space<vmem>>, %arg11: memref<1x64xf32, #tpu.memory_space<vmem>>, %arg12: memref<64x32xbf16, #tpu.memory_space<vmem>>, %arg13: memref<1x32xf32, #tpu.memory_space<vmem>>, %arg14: memref<16x896xbf16, #tpu.memory_space<vmem>>, %arg15: memref<1x896xf32, #tpu.memory_space<vmem>>, %arg16: memref<16x896xbf16, #tpu.memory_space<vmem>>, %arg17: memref<1x896xf32, #tpu.memory_space<vmem>>, %arg18: memref<64x128xbf16, #tpu.memory_space<vmem>>, %arg19: memref<1x128xf32, #tpu.memory_space<vmem>>, %arg20: memref<2x64x256xf32, #tpu.memory_space<vmem>>) attributes {dimension_semantics = [#tpu.dimension_semantics<parallel>], iteration_bounds = array<i64: 2>, scalar_prefetch = 0 : i64, scratch_operands = 0 : i64, tpu.core_type = #tpu.core_type<tc>, window_params = [{transform_indices = @transform_0, window_bounds = array<i64: 2, 64, 256>}, {pipeline_mode = #tpu.pipeline_mode<synchronous>, transform_indices = @transform_1, window_bounds = array<i64: 256, 32>}, {pipeline_mode = #tpu.pipeline_mode<synchronous>, transform_indices = @transform_2, window_bounds = array<i64: 32, 256>}, {pipeline_mode = #tpu.pipeline_mode<synchronous>, transform_indices = @transform_3, window_bounds = array<i64: 64, 64>}, {pipeline_mode = #tpu.pipeline_mode<synchronous>, transform_indices = @transform_4, window_bounds = array<i64: 1, 64>}, {pipeline_mode = #tpu.pipeline_mode<synchronous>, transform_indices = @transform_5, window_bounds = array<i64: 64, 16>}, {pipeline_mode = #tpu.pipeline_mode<synchronous>, transform_indices = @transform_6, window_bounds = array<i64: 1, 16>}, {pipeline_mode = #tpu.pipeline_mode<synchronous>, transform_indices = @transform_7, window_bounds = array<i64: 16, 896>}, {pipeline_mode = #tpu.pipeline_mode<synchronous>, transform_indices = @transform_8, window_bounds = array<i64: 1, 896>}, {pipeline_mode = #tpu.pipeline_mode<synchronous>, transform_indices = @transform_9, window_bounds = array<i64: 1, 64>}, {pipeline_mode = #tpu.pipeline_mode<synchronous>, transform_indices = @transform_10, window_bounds = array<i64: 1, 64>}, {pipeline_mode = #tpu.pipeline_mode<synchronous>, transform_indices = @transform_11, window_bounds = array<i64: 64, 32>}, {pipeline_mode = #tpu.pipeline_mode<synchronous>, transform_indices = @transform_12, window_bounds = array<i64: 1, 32>}, {pipeline_mode = #tpu.pipeline_mode<synchronous>, transform_indices = @transform_13, window_bounds = array<i64: 16, 896>}, {pipeline_mode = #tpu.pipeline_mode<synchronous>, transform_indices = @transform_14, window_bounds = array<i64: 1, 896>}, {pipeline_mode = #tpu.pipeline_mode<synchronous>, transform_indices = @transform_15, window_bounds = array<i64: 16, 896>}, {pipeline_mode = #tpu.pipeline_mode<synchronous>, transform_indices = @transform_16, window_bounds = array<i64: 1, 896>}, {pipeline_mode = #tpu.pipeline_mode<synchronous>, transform_indices = @transform_17, window_bounds = array<i64: 64, 128>}, {pipeline_mode = #tpu.pipeline_mode<synchronous>, transform_indices = @transform_18, window_bounds = array<i64: 1, 128>}, {transform_indices = @transform_19, window_bounds = array<i64: 2, 64, 256>}]} {
    %c0 = arith.constant 0 : index
    %c0_0 = arith.constant 0 : index
    %c0_1 = arith.constant 0 : index
    %0 = vector.load %arg1[%c0, %c0_0, %c0_1] : memref<2x64x256xf32, #tpu.memory_space<vmem>>, vector<2x64x256xf32>
    %1 = vector.shape_cast %0 : vector<2x64x256xf32> to vector<128x256xf32>
    %c0_2 = arith.constant 0 : index
    %c0_3 = arith.constant 0 : index
    %2 = vector.load %arg2[%c0_2, %c0_3] : memref<256x32xf32, #tpu.memory_space<vmem>>, vector<256x32xf32>
    %cst = arith.constant dense<0.000000e+00> : vector<128x32xf32>
    %3 = tpu.matmul %1, %2, %cst {dimension_numbers = #tpu.dot_dimension_numbers<[1], [0], [0], [1], [0, 0, 1, 1], [], []>} : vector<128x256xf32>, vector<256x32xf32>, vector<128x32xf32> -> vector<128x32xf32>
    %4 = vector.shape_cast %3 : vector<128x32xf32> to vector<2x64x32xf32>
    %5 = tpu.transpose %4, [0, 2, 1] : vector<2x64x32xf32> -> vector<2x32x64xf32>
    %6 = vector.shape_cast %5 : vector<2x32x64xf32> to vector<64x64xf32>
    %7 = arith.truncf %6 : vector<64x64xf32> to vector<64x64xbf16>
    %c0_4 = arith.constant 0 : index
    %c0_5 = arith.constant 0 : index
    %8 = vector.load %arg4[%c0_4, %c0_5] : memref<64x64xbf16, #tpu.memory_space<vmem>>, vector<64x64xbf16>
    %cst_6 = arith.constant dense<0.000000e+00> : vector<64x64xf32>
    %9 = tpu.matmul %7, %8, %cst_6 {dimension_numbers = #tpu.dot_dimension_numbers<[1], [0], [0], [1], [0, 0, 1, 1], [], []>} : vector<64x64xbf16>, vector<64x64xbf16>, vector<64x64xf32> -> vector<64x64xf32>
    %c0_7 = arith.constant 0 : index
    %c0_8 = arith.constant 0 : index
    %10 = vector.load %arg5[%c0_7, %c0_8] : memref<1x64xf32, #tpu.memory_space<vmem>>, vector<1x64xf32>
    %11 = vector.broadcast %10 : vector<1x64xf32> to vector<64x64xf32>
    %12 = arith.addf %9, %11 : vector<64x64xf32>
    %13 = arith.truncf %12 : vector<64x64xf32> to vector<64x64xbf16>
    %c0_9 = arith.constant 0 : index
    %c0_10 = arith.constant 0 : index
    %14 = vector.load %arg6[%c0_9, %c0_10] : memref<64x16xbf16, #tpu.memory_space<vmem>>, vector<64x16xbf16>
    %cst_11 = arith.constant dense<0.000000e+00> : vector<64x16xf32>
    %15 = tpu.matmul %13, %14, %cst_11 {dimension_numbers = #tpu.dot_dimension_numbers<[1], [0], [0], [1], [0, 0, 1, 1], [], []>} : vector<64x64xbf16>, vector<64x16xbf16>, vector<64x16xf32> -> vector<64x16xf32>
    %c0_12 = arith.constant 0 : index
    %c0_13 = arith.constant 0 : index
    %16 = vector.load %arg7[%c0_12, %c0_13] : memref<1x16xf32, #tpu.memory_space<vmem>>, vector<1x16xf32>
    %17 = vector.broadcast %16 : vector<1x16xf32> to vector<64x16xf32>
    %18 = arith.addf %15, %17 : vector<64x16xf32>
    %19 = vector.shape_cast %12 : vector<64x64xf32> to vector<2x32x64xf32>
    %20 = arith.truncf %18 : vector<64x16xf32> to vector<64x16xbf16>
    %c0_14 = arith.constant 0 : index
    %c0_15 = arith.constant 0 : index
    %21 = vector.load %arg8[%c0_14, %c0_15] : memref<16x896xbf16, #tpu.memory_space<vmem>>, vector<16x896xbf16>
    %cst_16 = arith.constant dense<0.000000e+00> : vector<64x896xf32>
    %22 = tpu.matmul %20, %21, %cst_16 {dimension_numbers = #tpu.dot_dimension_numbers<[1], [0], [0], [1], [0, 0, 1, 1], [], []>} : vector<64x16xbf16>, vector<16x896xbf16>, vector<64x896xf32> -> vector<64x896xf32>
    %c0_17 = arith.constant 0 : index
    %c0_18 = arith.constant 0 : index
    %23 = vector.load %arg9[%c0_17, %c0_18] : memref<1x896xf32, #tpu.memory_space<vmem>>, vector<1x896xf32>
    %24 = vector.broadcast %23 : vector<1x896xf32> to vector<64x896xf32>
    %25 = arith.addf %22, %24 : vector<64x896xf32>
    %26 = vector.shape_cast %25 : vector<64x896xf32> to vector<2x32x896xf32>
    %cst_19 = arith.constant 0.000000e+00 : f32
    %27 = vector.broadcast %cst_19 : f32 to vector<2x3x64xf32>
    %28 = tpu.concatenate %27, %19, %27 in 1 : vector<2x3x64xf32>, vector<2x32x64xf32>, vector<2x3x64xf32> -> vector<2x38x64xf32>
    %cst_20 = arith.constant 0.000000e+00 : f32
    %29 = vector.broadcast %cst_20 : f32 to vector<2x32x64xf32>
    %30 = vector.extract_strided_slice %26 {offsets = [0, 0, 0], sizes = [2, 32, 64], strides = [1, 1, 1]} : vector<2x32x896xf32> to vector<2x32x64xf32>
    %31 = vector.extract_strided_slice %28 {offsets = [0, 0, 0], sizes = [2, 32, 64], strides = [1, 1, 1]} : vector<2x38x64xf32> to vector<2x32x64xf32>
    %32 = arith.mulf %30, %31 : vector<2x32x64xf32>
    %33 = arith.addf %29, %32 : vector<2x32x64xf32>
    %34 = vector.extract_strided_slice %26 {offsets = [0, 0, 128], sizes = [2, 32, 64], strides = [1, 1, 1]} : vector<2x32x896xf32> to vector<2x32x64xf32>
    %35 = vector.extract_strided_slice %28 {offsets = [0, 1, 0], sizes = [2, 32, 64], strides = [1, 1, 1]} : vector<2x38x64xf32> to vector<2x32x64xf32>
    %36 = arith.mulf %34, %35 : vector<2x32x64xf32>
    %37 = arith.addf %33, %36 : vector<2x32x64xf32>
    %38 = vector.extract_strided_slice %26 {offsets = [0, 0, 256], sizes = [2, 32, 64], strides = [1, 1, 1]} : vector<2x32x896xf32> to vector<2x32x64xf32>
    %39 = vector.extract_strided_slice %28 {offsets = [0, 2, 0], sizes = [2, 32, 64], strides = [1, 1, 1]} : vector<2x38x64xf32> to vector<2x32x64xf32>
    %40 = arith.mulf %38, %39 : vector<2x32x64xf32>
    %41 = arith.addf %37, %40 : vector<2x32x64xf32>
    %42 = vector.extract_strided_slice %26 {offsets = [0, 0, 384], sizes = [2, 32, 64], strides = [1, 1, 1]} : vector<2x32x896xf32> to vector<2x32x64xf32>
    %43 = vector.extract_strided_slice %28 {offsets = [0, 3, 0], sizes = [2, 32, 64], strides = [1, 1, 1]} : vector<2x38x64xf32> to vector<2x32x64xf32>
    %44 = arith.mulf %42, %43 : vector<2x32x64xf32>
    %45 = arith.addf %41, %44 : vector<2x32x64xf32>
    %46 = vector.extract_strided_slice %26 {offsets = [0, 0, 512], sizes = [2, 32, 64], strides = [1, 1, 1]} : vector<2x32x896xf32> to vector<2x32x64xf32>
    %47 = vector.extract_strided_slice %28 {offsets = [0, 4, 0], sizes = [2, 32, 64], strides = [1, 1, 1]} : vector<2x38x64xf32> to vector<2x32x64xf32>
    %48 = arith.mulf %46, %47 : vector<2x32x64xf32>
    %49 = arith.addf %45, %48 : vector<2x32x64xf32>
    %50 = vector.extract_strided_slice %26 {offsets = [0, 0, 640], sizes = [2, 32, 64], strides = [1, 1, 1]} : vector<2x32x896xf32> to vector<2x32x64xf32>
    %51 = vector.extract_strided_slice %28 {offsets = [0, 5, 0], sizes = [2, 32, 64], strides = [1, 1, 1]} : vector<2x38x64xf32> to vector<2x32x64xf32>
    %52 = arith.mulf %50, %51 : vector<2x32x64xf32>
    %53 = arith.addf %49, %52 : vector<2x32x64xf32>
    %54 = vector.extract_strided_slice %26 {offsets = [0, 0, 768], sizes = [2, 32, 64], strides = [1, 1, 1]} : vector<2x32x896xf32> to vector<2x32x64xf32>
    %55 = vector.extract_strided_slice %28 {offsets = [0, 6, 0], sizes = [2, 32, 64], strides = [1, 1, 1]} : vector<2x38x64xf32> to vector<2x32x64xf32>
    %56 = arith.mulf %54, %55 : vector<2x32x64xf32>
    %57 = arith.addf %53, %56 : vector<2x32x64xf32>
    %c0_21 = arith.constant 0 : index
    %c0_22 = arith.constant 0 : index
    %58 = vector.load %arg10[%c0_21, %c0_22] : memref<1x64xf32, #tpu.memory_space<vmem>>, vector<1x64xf32>
    %59 = vector.shape_cast %58 : vector<1x64xf32> to vector<1x1x64xf32>
    %60 = vector.broadcast %59 : vector<1x1x64xf32> to vector<2x32x64xf32>
    %61 = arith.mulf %57, %60 : vector<2x32x64xf32>
    %c0_23 = arith.constant 0 : index
    %c0_24 = arith.constant 0 : index
    %62 = vector.load %arg11[%c0_23, %c0_24] : memref<1x64xf32, #tpu.memory_space<vmem>>, vector<1x64xf32>
    %63 = vector.shape_cast %62 : vector<1x64xf32> to vector<1x1x64xf32>
    %64 = vector.broadcast %63 : vector<1x1x64xf32> to vector<2x32x64xf32>
    %65 = arith.addf %61, %64 : vector<2x32x64xf32>
    %cst_25 = arith.constant 3.000000e+00 : f32
    %66 = vector.broadcast %cst_25 : f32 to vector<2x32x64xf32>
    %67 = arith.addf %65, %66 : vector<2x32x64xf32>
    %cst_26 = arith.constant 0.000000e+00 : f32
    %cst_27 = arith.constant 6.000000e+00 : f32
    %68 = vector.broadcast %cst_26 : f32 to vector<2x32x64xf32>
    %69 = arith.maximumf %68, %67 : vector<2x32x64xf32>
    %70 = vector.broadcast %cst_27 : f32 to vector<2x32x64xf32>
    %71 = arith.minimumf %70, %69 : vector<2x32x64xf32>
    %cst_28 = arith.constant 0.166666672 : f32
    %72 = vector.broadcast %cst_28 : f32 to vector<2x32x64xf32>
    %73 = arith.mulf %71, %72 : vector<2x32x64xf32>
    %74 = arith.mulf %65, %73 : vector<2x32x64xf32>
    %75 = vector.shape_cast %74 : vector<2x32x64xf32> to vector<64x64xf32>
    %76 = arith.truncf %75 : vector<64x64xf32> to vector<64x64xbf16>
    %c0_29 = arith.constant 0 : index
    %c0_30 = arith.constant 0 : index
    %77 = vector.load %arg12[%c0_29, %c0_30] : memref<64x32xbf16, #tpu.memory_space<vmem>>, vector<64x32xbf16>
    %cst_31 = arith.constant dense<0.000000e+00> : vector<64x32xf32>
    %78 = tpu.matmul %76, %77, %cst_31 {dimension_numbers = #tpu.dot_dimension_numbers<[1], [0], [0], [1], [0, 0, 1, 1], [], []>} : vector<64x64xbf16>, vector<64x32xbf16>, vector<64x32xf32> -> vector<64x32xf32>
    %c0_32 = arith.constant 0 : index
    %c0_33 = arith.constant 0 : index
    %79 = vector.load %arg13[%c0_32, %c0_33] : memref<1x32xf32, #tpu.memory_space<vmem>>, vector<1x32xf32>
    %80 = vector.broadcast %79 : vector<1x32xf32> to vector<64x32xf32>
    %81 = arith.addf %78, %80 : vector<64x32xf32>
    %82 = vector.shape_cast %81 : vector<64x32xf32> to vector<2x32x32xf32>
    %83 = vector.extract_strided_slice %74 {offsets = [0, 0, 0], sizes = [2, 16, 64], strides = [1, 1, 1]} : vector<2x32x64xf32> to vector<2x16x64xf32>
    %84 = vector.extract_strided_slice %82 {offsets = [0, 0, 0], sizes = [2, 16, 16], strides = [1, 1, 1]} : vector<2x32x32xf32> to vector<2x16x16xf32>
    %85 = vector.shape_cast %84 : vector<2x16x16xf32> to vector<32x16xf32>
    %86 = arith.truncf %85 : vector<32x16xf32> to vector<32x16xbf16>
    %c0_34 = arith.constant 0 : index
    %c0_35 = arith.constant 0 : index
    %87 = vector.load %arg14[%c0_34, %c0_35] : memref<16x896xbf16, #tpu.memory_space<vmem>>, vector<16x896xbf16>
    %cst_36 = arith.constant dense<0.000000e+00> : vector<32x896xf32>
    %88 = tpu.matmul %86, %87, %cst_36 {dimension_numbers = #tpu.dot_dimension_numbers<[1], [0], [0], [1], [0, 0, 1, 1], [], []>} : vector<32x16xbf16>, vector<16x896xbf16>, vector<32x896xf32> -> vector<32x896xf32>
    %c0_37 = arith.constant 0 : index
    %c0_38 = arith.constant 0 : index
    %89 = vector.load %arg15[%c0_37, %c0_38] : memref<1x896xf32, #tpu.memory_space<vmem>>, vector<1x896xf32>
    %90 = vector.broadcast %89 : vector<1x896xf32> to vector<32x896xf32>
    %91 = arith.addf %88, %90 : vector<32x896xf32>
    %92 = vector.shape_cast %91 : vector<32x896xf32> to vector<2x16x896xf32>
    %cst_39 = arith.constant 0.000000e+00 : f32
    %93 = vector.broadcast %cst_39 : f32 to vector<2x3x64xf32>
    %94 = tpu.concatenate %93, %83, %93 in 1 : vector<2x3x64xf32>, vector<2x16x64xf32>, vector<2x3x64xf32> -> vector<2x22x64xf32>
    %cst_40 = arith.constant 0.000000e+00 : f32
    %95 = vector.broadcast %cst_40 : f32 to vector<2x16x64xf32>
    %96 = vector.extract_strided_slice %92 {offsets = [0, 0, 0], sizes = [2, 16, 64], strides = [1, 1, 1]} : vector<2x16x896xf32> to vector<2x16x64xf32>
    %97 = vector.extract_strided_slice %94 {offsets = [0, 0, 0], sizes = [2, 16, 64], strides = [1, 1, 1]} : vector<2x22x64xf32> to vector<2x16x64xf32>
    %98 = arith.mulf %96, %97 : vector<2x16x64xf32>
    %99 = arith.addf %95, %98 : vector<2x16x64xf32>
    %100 = vector.extract_strided_slice %92 {offsets = [0, 0, 128], sizes = [2, 16, 64], strides = [1, 1, 1]} : vector<2x16x896xf32> to vector<2x16x64xf32>
    %101 = vector.extract_strided_slice %94 {offsets = [0, 1, 0], sizes = [2, 16, 64], strides = [1, 1, 1]} : vector<2x22x64xf32> to vector<2x16x64xf32>
    %102 = arith.mulf %100, %101 : vector<2x16x64xf32>
    %103 = arith.addf %99, %102 : vector<2x16x64xf32>
    %104 = vector.extract_strided_slice %92 {offsets = [0, 0, 256], sizes = [2, 16, 64], strides = [1, 1, 1]} : vector<2x16x896xf32> to vector<2x16x64xf32>
    %105 = vector.extract_strided_slice %94 {offsets = [0, 2, 0], sizes = [2, 16, 64], strides = [1, 1, 1]} : vector<2x22x64xf32> to vector<2x16x64xf32>
    %106 = arith.mulf %104, %105 : vector<2x16x64xf32>
    %107 = arith.addf %103, %106 : vector<2x16x64xf32>
    %108 = vector.extract_strided_slice %92 {offsets = [0, 0, 384], sizes = [2, 16, 64], strides = [1, 1, 1]} : vector<2x16x896xf32> to vector<2x16x64xf32>
    %109 = vector.extract_strided_slice %94 {offsets = [0, 3, 0], sizes = [2, 16, 64], strides = [1, 1, 1]} : vector<2x22x64xf32> to vector<2x16x64xf32>
    %110 = arith.mulf %108, %109 : vector<2x16x64xf32>
    %111 = arith.addf %107, %110 : vector<2x16x64xf32>
    %112 = vector.extract_strided_slice %92 {offsets = [0, 0, 512], sizes = [2, 16, 64], strides = [1, 1, 1]} : vector<2x16x896xf32> to vector<2x16x64xf32>
    %113 = vector.extract_strided_slice %94 {offsets = [0, 4, 0], sizes = [2, 16, 64], strides = [1, 1, 1]} : vector<2x22x64xf32> to vector<2x16x64xf32>
    %114 = arith.mulf %112, %113 : vector<2x16x64xf32>
    %115 = arith.addf %111, %114 : vector<2x16x64xf32>
    %116 = vector.extract_strided_slice %92 {offsets = [0, 0, 640], sizes = [2, 16, 64], strides = [1, 1, 1]} : vector<2x16x896xf32> to vector<2x16x64xf32>
    %117 = vector.extract_strided_slice %94 {offsets = [0, 5, 0], sizes = [2, 16, 64], strides = [1, 1, 1]} : vector<2x22x64xf32> to vector<2x16x64xf32>
    %118 = arith.mulf %116, %117 : vector<2x16x64xf32>
    %119 = arith.addf %115, %118 : vector<2x16x64xf32>
    %120 = vector.extract_strided_slice %92 {offsets = [0, 0, 768], sizes = [2, 16, 64], strides = [1, 1, 1]} : vector<2x16x896xf32> to vector<2x16x64xf32>
    %121 = vector.extract_strided_slice %94 {offsets = [0, 6, 0], sizes = [2, 16, 64], strides = [1, 1, 1]} : vector<2x22x64xf32> to vector<2x16x64xf32>
    %122 = arith.mulf %120, %121 : vector<2x16x64xf32>
    %123 = arith.addf %119, %122 : vector<2x16x64xf32>
    %124 = vector.extract_strided_slice %74 {offsets = [0, 16, 0], sizes = [2, 16, 64], strides = [1, 1, 1]} : vector<2x32x64xf32> to vector<2x16x64xf32>
    %125 = vector.extract_strided_slice %82 {offsets = [0, 16, 16], sizes = [2, 16, 16], strides = [1, 1, 1]} : vector<2x32x32xf32> to vector<2x16x16xf32>
    %126 = vector.shape_cast %125 : vector<2x16x16xf32> to vector<32x16xf32>
    %127 = arith.truncf %126 : vector<32x16xf32> to vector<32x16xbf16>
    %c0_41 = arith.constant 0 : index
    %c0_42 = arith.constant 0 : index
    %128 = vector.load %arg16[%c0_41, %c0_42] : memref<16x896xbf16, #tpu.memory_space<vmem>>, vector<16x896xbf16>
    %cst_43 = arith.constant dense<0.000000e+00> : vector<32x896xf32>
    %129 = tpu.matmul %127, %128, %cst_43 {dimension_numbers = #tpu.dot_dimension_numbers<[1], [0], [0], [1], [0, 0, 1, 1], [], []>} : vector<32x16xbf16>, vector<16x896xbf16>, vector<32x896xf32> -> vector<32x896xf32>
    %c0_44 = arith.constant 0 : index
    %c0_45 = arith.constant 0 : index
    %130 = vector.load %arg17[%c0_44, %c0_45] : memref<1x896xf32, #tpu.memory_space<vmem>>, vector<1x896xf32>
    %131 = vector.broadcast %130 : vector<1x896xf32> to vector<32x896xf32>
    %132 = arith.addf %129, %131 : vector<32x896xf32>
    %133 = vector.shape_cast %132 : vector<32x896xf32> to vector<2x16x896xf32>
    %cst_46 = arith.constant 0.000000e+00 : f32
    %134 = vector.broadcast %cst_46 : f32 to vector<2x3x64xf32>
    %135 = tpu.concatenate %134, %124, %134 in 1 : vector<2x3x64xf32>, vector<2x16x64xf32>, vector<2x3x64xf32> -> vector<2x22x64xf32>
    %cst_47 = arith.constant 0.000000e+00 : f32
    %136 = vector.broadcast %cst_47 : f32 to vector<2x16x64xf32>
    %137 = vector.extract_strided_slice %133 {offsets = [0, 0, 0], sizes = [2, 16, 64], strides = [1, 1, 1]} : vector<2x16x896xf32> to vector<2x16x64xf32>
    %138 = vector.extract_strided_slice %135 {offsets = [0, 0, 0], sizes = [2, 16, 64], strides = [1, 1, 1]} : vector<2x22x64xf32> to vector<2x16x64xf32>
    %139 = arith.mulf %137, %138 : vector<2x16x64xf32>
    %140 = arith.addf %136, %139 : vector<2x16x64xf32>
    %141 = vector.extract_strided_slice %133 {offsets = [0, 0, 128], sizes = [2, 16, 64], strides = [1, 1, 1]} : vector<2x16x896xf32> to vector<2x16x64xf32>
    %142 = vector.extract_strided_slice %135 {offsets = [0, 1, 0], sizes = [2, 16, 64], strides = [1, 1, 1]} : vector<2x22x64xf32> to vector<2x16x64xf32>
    %143 = arith.mulf %141, %142 : vector<2x16x64xf32>
    %144 = arith.addf %140, %143 : vector<2x16x64xf32>
    %145 = vector.extract_strided_slice %133 {offsets = [0, 0, 256], sizes = [2, 16, 64], strides = [1, 1, 1]} : vector<2x16x896xf32> to vector<2x16x64xf32>
    %146 = vector.extract_strided_slice %135 {offsets = [0, 2, 0], sizes = [2, 16, 64], strides = [1, 1, 1]} : vector<2x22x64xf32> to vector<2x16x64xf32>
    %147 = arith.mulf %145, %146 : vector<2x16x64xf32>
    %148 = arith.addf %144, %147 : vector<2x16x64xf32>
    %149 = vector.extract_strided_slice %133 {offsets = [0, 0, 384], sizes = [2, 16, 64], strides = [1, 1, 1]} : vector<2x16x896xf32> to vector<2x16x64xf32>
    %150 = vector.extract_strided_slice %135 {offsets = [0, 3, 0], sizes = [2, 16, 64], strides = [1, 1, 1]} : vector<2x22x64xf32> to vector<2x16x64xf32>
    %151 = arith.mulf %149, %150 : vector<2x16x64xf32>
    %152 = arith.addf %148, %151 : vector<2x16x64xf32>
    %153 = vector.extract_strided_slice %133 {offsets = [0, 0, 512], sizes = [2, 16, 64], strides = [1, 1, 1]} : vector<2x16x896xf32> to vector<2x16x64xf32>
    %154 = vector.extract_strided_slice %135 {offsets = [0, 4, 0], sizes = [2, 16, 64], strides = [1, 1, 1]} : vector<2x22x64xf32> to vector<2x16x64xf32>
    %155 = arith.mulf %153, %154 : vector<2x16x64xf32>
    %156 = arith.addf %152, %155 : vector<2x16x64xf32>
    %157 = vector.extract_strided_slice %133 {offsets = [0, 0, 640], sizes = [2, 16, 64], strides = [1, 1, 1]} : vector<2x16x896xf32> to vector<2x16x64xf32>
    %158 = vector.extract_strided_slice %135 {offsets = [0, 5, 0], sizes = [2, 16, 64], strides = [1, 1, 1]} : vector<2x22x64xf32> to vector<2x16x64xf32>
    %159 = arith.mulf %157, %158 : vector<2x16x64xf32>
    %160 = arith.addf %156, %159 : vector<2x16x64xf32>
    %161 = vector.extract_strided_slice %133 {offsets = [0, 0, 768], sizes = [2, 16, 64], strides = [1, 1, 1]} : vector<2x16x896xf32> to vector<2x16x64xf32>
    %162 = vector.extract_strided_slice %135 {offsets = [0, 6, 0], sizes = [2, 16, 64], strides = [1, 1, 1]} : vector<2x22x64xf32> to vector<2x16x64xf32>
    %163 = arith.mulf %161, %162 : vector<2x16x64xf32>
    %164 = arith.addf %160, %163 : vector<2x16x64xf32>
    %165 = tpu.concatenate %123, %164 in 1 : vector<2x16x64xf32>, vector<2x16x64xf32> -> vector<2x32x64xf32>
    %166 = vector.shape_cast %165 : vector<2x32x64xf32> to vector<64x64xf32>
    %167 = arith.truncf %166 : vector<64x64xf32> to vector<64x64xbf16>
    %c0_48 = arith.constant 0 : index
    %c0_49 = arith.constant 0 : index
    %168 = vector.load %arg18[%c0_48, %c0_49] : memref<64x128xbf16, #tpu.memory_space<vmem>>, vector<64x128xbf16>
    %cst_50 = arith.constant dense<0.000000e+00> : vector<64x128xf32>
    %169 = tpu.matmul %167, %168, %cst_50 {dimension_numbers = #tpu.dot_dimension_numbers<[1], [0], [0], [1], [0, 0, 1, 1], [], []>} : vector<64x64xbf16>, vector<64x128xbf16>, vector<64x128xf32> -> vector<64x128xf32>
    %c0_51 = arith.constant 0 : index
    %c0_52 = arith.constant 0 : index
    %170 = vector.load %arg19[%c0_51, %c0_52] : memref<1x128xf32, #tpu.memory_space<vmem>>, vector<1x128xf32>
    %171 = vector.broadcast %170 : vector<1x128xf32> to vector<64x128xf32>
    %172 = arith.addf %169, %171 : vector<64x128xf32>
    %173 = vector.shape_cast %172 : vector<64x128xf32> to vector<2x32x128xf32>
    %174 = vector.extract_strided_slice %173 {offsets = [0, 0, 0], sizes = [2, 16, 64], strides = [1, 1, 1]} : vector<2x32x128xf32> to vector<2x16x64xf32>
    %cst_53 = arith.constant 0.000000e+00 : f32
    %175 = vector.broadcast %cst_53 : f32 to vector<2x16x64xf32>
    %176 = arith.subf %175, %174 : vector<2x16x64xf32>
    %177 = math.exp %176 : vector<2x16x64xf32>
    %cst_54 = arith.constant 1.000000e+00 : f32
    %178 = vector.broadcast %cst_54 : f32 to vector<2x16x64xf32>
    %179 = arith.addf %178, %177 : vector<2x16x64xf32>
    %cst_55 = arith.constant 1.000000e+00 : f32
    %180 = vector.broadcast %cst_55 : f32 to vector<2x16x64xf32>
    %181 = arith.divf %180, %179 : vector<2x16x64xf32>
    %182 = vector.extract_strided_slice %173 {offsets = [0, 16, 64], sizes = [2, 16, 64], strides = [1, 1, 1]} : vector<2x32x128xf32> to vector<2x16x64xf32>
    %cst_56 = arith.constant 0.000000e+00 : f32
    %183 = vector.broadcast %cst_56 : f32 to vector<2x16x64xf32>
    %184 = arith.subf %183, %182 : vector<2x16x64xf32>
    %185 = math.exp %184 : vector<2x16x64xf32>
    %cst_57 = arith.constant 1.000000e+00 : f32
    %186 = vector.broadcast %cst_57 : f32 to vector<2x16x64xf32>
    %187 = arith.addf %186, %185 : vector<2x16x64xf32>
    %cst_58 = arith.constant 1.000000e+00 : f32
    %188 = vector.broadcast %cst_58 : f32 to vector<2x16x64xf32>
    %189 = arith.divf %188, %187 : vector<2x16x64xf32>
    %c0_59 = arith.constant 0 : index
    %c0_60 = arith.constant 0 : index
    %190 = vector.load %arg3[%c0_59, %c0_60] : memref<32x256xf32, #tpu.memory_space<vmem>>, vector<32x256xf32>
    %191 = tpu.transpose %181, [0, 2, 1] : vector<2x16x64xf32> -> vector<2x64x16xf32>
    %192 = vector.shape_cast %191 : vector<2x64x16xf32> to vector<128x16xf32>
    %193 = vector.extract_strided_slice %190 {offsets = [0, 0], sizes = [16, 256], strides = [1, 1]} : vector<32x256xf32> to vector<16x256xf32>
    %cst_61 = arith.constant dense<0.000000e+00> : vector<128x256xf32>
    %194 = tpu.matmul %192, %193, %cst_61 {dimension_numbers = #tpu.dot_dimension_numbers<[1], [0], [0], [1], [0, 0, 1, 1], [], []>} : vector<128x16xf32>, vector<16x256xf32>, vector<128x256xf32> -> vector<128x256xf32>
    %195 = tpu.transpose %189, [0, 2, 1] : vector<2x16x64xf32> -> vector<2x64x16xf32>
    %196 = vector.shape_cast %195 : vector<2x64x16xf32> to vector<128x16xf32>
    %197 = vector.extract_strided_slice %190 {offsets = [16, 0], sizes = [16, 256], strides = [1, 1]} : vector<32x256xf32> to vector<16x256xf32>
    %cst_62 = arith.constant dense<0.000000e+00> : vector<128x256xf32>
    %198 = tpu.matmul %196, %197, %cst_62 {dimension_numbers = #tpu.dot_dimension_numbers<[1], [0], [0], [1], [0, 0, 1, 1], [], []>} : vector<128x16xf32>, vector<16x256xf32>, vector<128x256xf32> -> vector<128x256xf32>
    %199 = arith.mulf %194, %198 : vector<128x256xf32>
    %200 = vector.shape_cast %199 : vector<128x256xf32> to vector<2x64x256xf32>
    %201 = arith.mulf %0, %200 : vector<2x64x256xf32>
    %c0_63 = arith.constant 0 : index
    %c0_64 = arith.constant 0 : index
    %c0_65 = arith.constant 0 : index
    %202 = vector.load %arg20[%c0_63, %c0_64, %c0_65] : memref<2x64x256xf32, #tpu.memory_space<vmem>>, vector<2x64x256xf32>
    tpu.vector_store %arg20[%c0_63, %c0_64, %c0_65], %201 {strides = array<i32>} : memref<2x64x256xf32, #tpu.memory_space<vmem>>, vector<2x64x256xf32>,
    return
  }
  func.func @transform_0(%arg0: i32) -> (i32, i32, i32) {
    %c0_i32 = arith.constant 0 : i32
    %c0_i32_0 = arith.constant 0 : i32
    %c0_i32_1 = arith.constant 0 : i32
    return %arg0, %c0_i32, %c0_i32_0 : i32, i32, i32
  }
  func.func @transform_1(%arg0: i32) -> (i32, i32) {
    %c0_i32 = arith.constant 0 : i32
    %c0_i32_0 = arith.constant 0 : i32
    %c0_i32_1 = arith.constant 0 : i32
    return %c0_i32, %c0_i32_0 : i32, i32
  }
  func.func @transform_2(%arg0: i32) -> (i32, i32) {
    %c0_i32 = arith.constant 0 : i32
    %c0_i32_0 = arith.constant 0 : i32
    %c0_i32_1 = arith.constant 0 : i32
    return %c0_i32, %c0_i32_0 : i32, i32
  }
  func.func @transform_3(%arg0: i32) -> (i32, i32) {
    %c0_i32 = arith.constant 0 : i32
    %c0_i32_0 = arith.constant 0 : i32
    %c0_i32_1 = arith.constant 0 : i32
    return %c0_i32, %c0_i32_0 : i32, i32
  }
  func.func @transform_4(%arg0: i32) -> (i32, i32) {
    %c0_i32 = arith.constant 0 : i32
    %c0_i32_0 = arith.constant 0 : i32
    %c0_i32_1 = arith.constant 0 : i32
    return %c0_i32, %c0_i32_0 : i32, i32
  }
  func.func @transform_5(%arg0: i32) -> (i32, i32) {
    %c0_i32 = arith.constant 0 : i32
    %c0_i32_0 = arith.constant 0 : i32
    %c0_i32_1 = arith.constant 0 : i32
    return %c0_i32, %c0_i32_0 : i32, i32
  }
  func.func @transform_6(%arg0: i32) -> (i32, i32) {
    %c0_i32 = arith.constant 0 : i32
    %c0_i32_0 = arith.constant 0 : i32
    %c0_i32_1 = arith.constant 0 : i32
    return %c0_i32, %c0_i32_0 : i32, i32
  }
  func.func @transform_7(%arg0: i32) -> (i32, i32) {
    %c0_i32 = arith.constant 0 : i32
    %c0_i32_0 = arith.constant 0 : i32
    %c0_i32_1 = arith.constant 0 : i32
    return %c0_i32, %c0_i32_0 : i32, i32
  }
  func.func @transform_8(%arg0: i32) -> (i32, i32) {
    %c0_i32 = arith.constant 0 : i32
    %c0_i32_0 = arith.constant 0 : i32
    %c0_i32_1 = arith.constant 0 : i32
    return %c0_i32, %c0_i32_0 : i32, i32
  }
  func.func @transform_9(%arg0: i32) -> (i32, i32) {
    %c0_i32 = arith.constant 0 : i32
    %c0_i32_0 = arith.constant 0 : i32
    %c0_i32_1 = arith.constant 0 : i32
    return %c0_i32, %c0_i32_0 : i32, i32
  }
  func.func @transform_10(%arg0: i32) -> (i32, i32) {
    %c0_i32 = arith.constant 0 : i32
    %c0_i32_0 = arith.constant 0 : i32
    %c0_i32_1 = arith.constant 0 : i32
    return %c0_i32, %c0_i32_0 : i32, i32
  }
  func.func @transform_11(%arg0: i32) -> (i32, i32) {
    %c0_i32 = arith.constant 0 : i32
    %c0_i32_0 = arith.constant 0 : i32
    %c0_i32_1 = arith.constant 0 : i32
    return %c0_i32, %c0_i32_0 : i32, i32
  }
  func.func @transform_12(%arg0: i32) -> (i32, i32) {
    %c0_i32 = arith.constant 0 : i32
    %c0_i32_0 = arith.constant 0 : i32
    %c0_i32_1 = arith.constant 0 : i32
    return %c0_i32, %c0_i32_0 : i32, i32
  }
  func.func @transform_13(%arg0: i32) -> (i32, i32) {
    %c0_i32 = arith.constant 0 : i32
    %c0_i32_0 = arith.constant 0 : i32
    %c0_i32_1 = arith.constant 0 : i32
    return %c0_i32, %c0_i32_0 : i32, i32
  }
  func.func @transform_14(%arg0: i32) -> (i32, i32) {
    %c0_i32 = arith.constant 0 : i32
    %c0_i32_0 = arith.constant 0 : i32
    %c0_i32_1 = arith.constant 0 : i32
    return %c0_i32, %c0_i32_0 : i32, i32
  }
  func.func @transform_15(%arg0: i32) -> (i32, i32) {
    %c0_i32 = arith.constant 0 : i32
    %c0_i32_0 = arith.constant 0 : i32
    %c0_i32_1 = arith.constant 0 : i32
    return %c0_i32, %c0_i32_0 : i32, i32
  }
  func.func @transform_16(%arg0: i32) -> (i32, i32) {
    %c0_i32 = arith.constant 0 : i32
    %c0_i32_0 = arith.constant 0 : i32
    %c0_i32_1 = arith.constant 0 : i32
    return %c0_i32, %c0_i32_0 : i32, i32
  }
  func.func @transform_17(%arg0: i32) -> (i32, i32) {
    %c0_i32 = arith.constant 0 : i32
    %c0_i32_0 = arith.constant 0 : i32
    %c0_i32_1 = arith.constant 0 : i32
    return %c0_i32, %c0_i32_0 : i32, i32
  }
  func.func @transform_18(%arg0: i32) -> (i32, i32) {
    %c0_i32 = arith.constant 0 : i32
    %c0_i32_0 = arith.constant 0 : i32
    %c0_i32_1 = arith.constant 0 : i32
    return %c0_i32, %c0_i32_0 : i32, i32
  }
  func.func @transform_19(%arg0: i32) -> (i32, i32, i32) {
    %c0_i32 = arith.constant 0 : i32
    %c0_i32_0 = arith.constant 0 : i32
    %c0_i32_1 = arith.constant 0 : i32
    return %arg0, %c0_i32, %c0_i32_0 : i32, i32, i32
  }
}

</mosaic_0001>

<llo_original>
// kernel: coord_att_forward.1
$region0: #{coord_att_forward.1}
  #allocation0 [shape = 'u32[]', space=smem, size = 0x4, offset = 0x4, fixed_abs, tag = 'smem constant byte address 0x4 - core index']
  #allocation1 [shape = 'u32[144,128]{1,0:T(1,128)}', space=vmem, size = 0x12000, scoped, tag = 'internal scratch']
  %s0 = inlined_call_operand.vmem [shape: f32[4,64,256], index: 0, kind: input, shape index: {}]
  %s1 = inlined_call_operand.vmem [shape: f32[256,32], index: 1, kind: input, shape index: {}]
  %s2 = inlined_call_operand.vmem [shape: f32[32,256], index: 2, kind: input, shape index: {}]
  %s3 = inlined_call_operand.vmem [shape: bf16[64,64], index: 3, kind: input, shape index: {}]
  %s4 = inlined_call_operand.vmem [shape: f32[1,64], index: 4, kind: input, shape index: {}]
  %s5 = inlined_call_operand.vmem [shape: bf16[64,16], index: 5, kind: input, shape index: {}]
  %s6 = inlined_call_operand.vmem [shape: f32[1,16], index: 6, kind: input, shape index: {}]
  %s7 = inlined_call_operand.vmem [shape: bf16[16,896], index: 7, kind: input, shape index: {}]
  %s8 = inlined_call_operand.vmem [shape: f32[1,896], index: 8, kind: input, shape index: {}]
  %s9 = inlined_call_operand.vmem [shape: f32[1,64], index: 9, kind: input, shape index: {}]
  %s10 = inlined_call_operand.vmem [shape: f32[1,64], index: 10, kind: input, shape index: {}]
  %s11 = inlined_call_operand.vmem [shape: bf16[64,32], index: 11, kind: input, shape index: {}]
  %s12 = inlined_call_operand.vmem [shape: f32[1,32], index: 12, kind: input, shape index: {}]
  %s13 = inlined_call_operand.vmem [shape: bf16[16,896], index: 13, kind: input, shape index: {}]
  %s14 = inlined_call_operand.vmem [shape: f32[1,896], index: 14, kind: input, shape index: {}]
  %s15 = inlined_call_operand.vmem [shape: bf16[16,896], index: 15, kind: input, shape index: {}]
  %s16 = inlined_call_operand.vmem [shape: f32[1,896], index: 16, kind: input, shape index: {}]
  %s17 = inlined_call_operand.vmem [shape: bf16[64,128], index: 17, kind: input, shape index: {}]
  %s18 = inlined_call_operand.vmem [shape: f32[1,128], index: 18, kind: input, shape index: {}]
  %s19 = inlined_call_operand.vmem [shape: f32[4,64,256], index: 19, kind: output, shape index: {}]
  %s20 = sld [smem:[#allocation0]]
  $region109: #{coord_att_forward.1} parent=0
    _
  %s22 = ssub.s32 1, %s20
  %s23 = scalar_select 0, %s22, %s20
  loop: start=0, step=1, limit=4
  $region2: #{coord_att_forward.1} parent=0 // loop_pre_header
    _
  $region3: #{coord_att_forward.1} parent=0 // loop_header
    %s25 = sphi 0, %s29
    %p26 = scmp.ge.s32.totalorder %s25, 4
    %s35 = sphi 0, %s37
    %s38 = sphi 0, %s35
    %s39 = sphi 0, %s38
    %s55 = sphi 0, %s39
    %s59 = sphi 0, %s59
    %s61 = sphi 0, %s59
    %s62 = sphi 0, %s61
    %s76 = sphi 0, %s62
    %s80 = sphi 0, %s80
    %s82 = sphi 0, %s80
    %s83 = sphi 0, %s82
    %s97 = sphi 0, %s83
    %s101 = sphi 0, %s101
    %s103 = sphi 0, %s101
    %s104 = sphi 0, %s103
    %s118 = sphi 0, %s104
    %s122 = sphi 0, %s122
    %s124 = sphi 0, %s122
    %s125 = sphi 0, %s124
    %s139 = sphi 0, %s125
    %s143 = sphi 0, %s143
    %s145 = sphi 0, %s143
    %s146 = sphi 0, %s145
    %s160 = sphi 0, %s146
    %s164 = sphi 0, %s164
    %s166 = sphi 0, %s164
    %s167 = sphi 0, %s166
    %s181 = sphi 0, %s167
    %s185 = sphi 0, %s185
    %s187 = sphi 0, %s185
    %s188 = sphi 0, %s187
    %s202 = sphi 0, %s188
    %s206 = sphi 0, %s206
    %s208 = sphi 0, %s206
    %s209 = sphi 0, %s208
    %s223 = sphi 0, %s209
    %s227 = sphi 0, %s227
    %s229 = sphi 0, %s227
    %s230 = sphi 0, %s229
    %s244 = sphi 0, %s230
    %s248 = sphi 0, %s248
    %s250 = sphi 0, %s248
    %s251 = sphi 0, %s250
    %s265 = sphi 0, %s251
    %s269 = sphi 0, %s269
    %s271 = sphi 0, %s269
    %s272 = sphi 0, %s271
    %s286 = sphi 0, %s272
    %s290 = sphi 0, %s290
    %s292 = sphi 0, %s290
    %s293 = sphi 0, %s292
    %s307 = sphi 0, %s293
    %s311 = sphi 0, %s311
    %s313 = sphi 0, %s311
    %s314 = sphi 0, %s313
    %s328 = sphi 0, %s314
    %s332 = sphi 0, %s332
    %s334 = sphi 0, %s332
    %s335 = sphi 0, %s334
    %s349 = sphi 0, %s335
    %s353 = sphi 0, %s353
    %s355 = sphi 0, %s353
    %s356 = sphi 0, %s355
    %s370 = sphi 0, %s356
    %s374 = sphi 0, %s374
    %s376 = sphi 0, %s374
    %s377 = sphi 0, %s376
    %s391 = sphi 0, %s377
    %s395 = sphi 0, %s395
    %s397 = sphi 0, %s395
    %s398 = sphi 0, %s397
    %s412 = sphi 0, %s398
    %s416 = sphi 0, %s416
    %s418 = sphi 0, %s416
    %s419 = sphi 0, %s418
    %s433 = sphi 0, %s419
    %s439 = sphi 0, %s441
    %s442 = sphi 0, %s439
    %s443 = sphi 0, %s442
    %s459 = sphi 0, %s443
  $region4: #{coord_att_forward.1} parent=0 // loop_header_branch
    %28 = sbr.rel (%p26) target = $region8
  $region5: #{coord_att_forward.1} parent=0 // loop_body
    %s30 = ssub.s32 %s25, 1
    %s31 = ssub.s32 %s25, 2
    %s32 = sadd.s32 %s25, 1
    %s33 = ssub.s32 %s25, %s32
    %p34 = scmp.eq.s32.totalorder %s33, 0
    %s36 = sadd.s32 %s35, 1
    %s37 = scalar_select %p34, %s35, %s36
    %p40 = pneg %p34
    %p41 = scmp.eq.s32.totalorder %s25, 1
    %p42 = por %p40, %p41
    %p43 = scmp.ne.s32.totalorder %s35, %s38
    %p44 = scmp.eq.s32.totalorder %s25, 0
    %p45 = por %p43, %p44
    %p46 = scmp.ne.s32.totalorder %s35, %s38
    %p47 = scmp.eq.s32.totalorder %s30, 1
    %p48 = por %p46, %p47
    %p49 = scmp.ne.s32.totalorder %s38, %s39
    %p50 = scmp.eq.s32.totalorder %s30, 0
    %p51 = por %p49, %p50
    %p52 = scmp.ne.s32.totalorder %s38, %s39
    %p53 = scmp.eq.s32.totalorder %s31, 1
    %p54 = por %p52, %p53
    %p56 = scmp.ne.s32.totalorder %s39, %s55
    %p57 = scmp.eq.s32.totalorder %s31, 0
    %p58 = por %p56, %p57
    %s60 = sadd.s32 %s59, 1
    %p63 = scmp.eq.s32.totalorder %s25, 1
    %p64 = scmp.ne.s32.totalorder %s59, %s61
    %p65 = scmp.eq.s32.totalorder %s25, 0
    %p66 = por %p64, %p65
    %p67 = scmp.ne.s32.totalorder %s59, %s61
    %p68 = scmp.eq.s32.totalorder %s30, 1
    %p69 = por %p67, %p68
    %p70 = scmp.ne.s32.totalorder %s61, %s62
    %p71 = scmp.eq.s32.totalorder %s30, 0
    %p72 = por %p70, %p71
    %p73 = scmp.ne.s32.totalorder %s61, %s62
    %p74 = scmp.eq.s32.totalorder %s31, 1
    %p75 = por %p73, %p74
    %p77 = scmp.ne.s32.totalorder %s62, %s76
    %p78 = scmp.eq.s32.totalorder %s31, 0
    %p79 = por %p77, %p78
    %s81 = sadd.s32 %s80, 1
    %p84 = scmp.eq.s32.totalorder %s25, 1
    %p85 = scmp.ne.s32.totalorder %s80, %s82
    %p86 = scmp.eq.s32.totalorder %s25, 0
    %p87 = por %p85, %p86
    %p88 = scmp.ne.s32.totalorder %s80, %s82
    %p89 = scmp.eq.s32.totalorder %s30, 1
    %p90 = por %p88, %p89
    %p91 = scmp.ne.s32.totalorder %s82, %s83
    %p92 = scmp.eq.s32.totalorder %s30, 0
    %p93 = por %p91, %p92
    %p94 = scmp.ne.s32.totalorder %s82, %s83
    %p95 = scmp.eq.s32.totalorder %s31, 1
    %p96 = por %p94, %p95
    %p98 = scmp.ne.s32.totalorder %s83, %s97
    %p99 = scmp.eq.s32.totalorder %s31, 0
    %p100 = por %p98, %p99
    %s102 = sadd.s32 %s101, 1
    %p105 = scmp.eq.s32.totalorder %s25, 1
    %p106 = scmp.ne.s32.totalorder %s101, %s103
    %p107 = scmp.eq.s32.totalorder %s25, 0
    %p108 = por %p106, %p107
    %p109 = scmp.ne.s32.totalorder %s101, %s103
    %p110 = scmp.eq.s32.totalorder %s30, 1
    %p111 = por %p109, %p110
    %p112 = scmp.ne.s32.totalorder %s103, %s104
    %p113 = scmp.eq.s32.totalorder %s30, 0
    %p114 = por %p112, %p113
    %p115 = scmp.ne.s32.totalorder %s103, %s104
    %p116 = scmp.eq.s32.totalorder %s31, 1
    %p117 = por %p115, %p116
    %p119 = scmp.ne.s32.totalorder %s104, %s118
    %p120 = scmp.eq.s32.totalorder %s31, 0
    %p121 = por %p119, %p120
    %s123 = sadd.s32 %s122, 1
    %p126 = scmp.eq.s32.totalorder %s25, 1
    %p127 = scmp.ne.s32.totalorder %s122, %s124
    %p128 = scmp.eq.s32.totalorder %s25, 0
    %p129 = por %p127, %p128
    %p130 = scmp.ne.s32.totalorder %s122, %s124
    %p131 = scmp.eq.s32.totalorder %s30, 1
    %p132 = por %p130, %p131
    %p133 = scmp.ne.s32.totalorder %s124, %s125
    %p134 = scmp.eq.s32.totalorder %s30, 0
    %p135 = por %p133, %p134
    %p136 = scmp.ne.s32.totalorder %s124, %s125
    %p137 = scmp.eq.s32.totalorder %s31, 1
    %p138 = por %p136, %p137
    %p140 = scmp.ne.s32.totalorder %s125, %s139
    %p141 = scmp.eq.s32.totalorder %s31, 0
    %p142 = por %p140, %p141
    %s144 = sadd.s32 %s143, 1
    %p147 = scmp.eq.s32.totalorder %s25, 1
    %p148 = scmp.ne.s32.totalorder %s143, %s145
    %p149 = scmp.eq.s32.totalorder %s25, 0
    %p150 = por %p148, %p149
    %p151 = scmp.ne.s32.totalorder %s143, %s145
    %p152 = scmp.eq.s32.totalorder %s30, 1
    %p153 = por %p151, %p152
    %p154 = scmp.ne.s32.totalorder %s145, %s146
    %p155 = scmp.eq.s32.totalorder %s30, 0
    %p156 = por %p154, %p155
    %p157 = scmp.ne.s32.totalorder %s145, %s146
    %p158 = scmp.eq.s32.totalorder %s31, 1
    %p159 = por %p157, %p158
    %p161 = scmp.ne.s32.totalorder %s146, %s160
    %p162 = scmp.eq.s32.totalorder %s31, 0
    %p163 = por %p161, %p162
    %s165 = sadd.s32 %s164, 1
    %p168 = scmp.eq.s32.totalorder %s25, 1
    %p169 = scmp.ne.s32.totalorder %s164, %s166
    %p170 = scmp.eq.s32.totalorder %s25, 0
    %p171 = por %p169, %p170
    %p172 = scmp.ne.s32.totalorder %s164, %s166
    %p173 = scmp.eq.s32.totalorder %s30, 1
    %p174 = por %p172, %p173
    %p175 = scmp.ne.s32.totalorder %s166, %s167
    %p176 = scmp.eq.s32.totalorder %s30, 0
    %p177 = por %p175, %p176
    %p178 = scmp.ne.s32.totalorder %s166, %s167
    %p179 = scmp.eq.s32.totalorder %s31, 1
    %p180 = por %p178, %p179
    %p182 = scmp.ne.s32.totalorder %s167, %s181
    %p183 = scmp.eq.s32.totalorder %s31, 0
    %p184 = por %p182, %p183
    %s186 = sadd.s32 %s185, 1
    %p189 = scmp.eq.s32.totalorder %s25, 1
    %p190 = scmp.ne.s32.totalorder %s185, %s187
    %p191 = scmp.eq.s32.totalorder %s25, 0
    %p192 = por %p190, %p191
    %p193 = scmp.ne.s32.totalorder %s185, %s187
    %p194 = scmp.eq.s32.totalorder %s30, 1
    %p195 = por %p193, %p194
    %p196 = scmp.ne.s32.totalorder %s187, %s188
    %p197 = scmp.eq.s32.totalorder %s30, 0
    %p198 = por %p196, %p197
    %p199 = scmp.ne.s32.totalorder %s187, %s188
    %p200 = scmp.eq.s32.totalorder %s31, 1
    %p201 = por %p199, %p200
    %p203 = scmp.ne.s32.totalorder %s188, %s202
    %p204 = scmp.eq.s32.totalorder %s31, 0
    %p205 = por %p203, %p204
    %s207 = sadd.s32 %s206, 1
    %p210 = scmp.eq.s32.totalorder %s25, 1
    %p211 = scmp.ne.s32.totalorder %s206, %s208
    %p212 = scmp.eq.s32.totalorder %s25, 0
    %p213 = por %p211, %p212
    %p214 = scmp.ne.s32.totalorder %s206, %s208
    %p215 = scmp.eq.s32.totalorder %s30, 1
    %p216 = por %p214, %p215
    %p217 = scmp.ne.s32.totalorder %s208, %s209
    %p218 = scmp.eq.s32.totalorder %s30, 0
    %p219 = por %p217, %p218
    %p220 = scmp.ne.s32.totalorder %s208, %s209
    %p221 = scmp.eq.s32.totalorder %s31, 1
    %p222 = por %p220, %p221
    %p224 = scmp.ne.s32.totalorder %s209, %s223
    %p225 = scmp.eq.s32.totalorder %s31, 0
    %p226 = por %p224, %p225
    %s228 = sadd.s32 %s227, 1
    %p231 = scmp.eq.s32.totalorder %s25, 1
    %p232 = scmp.ne.s32.totalorder %s227, %s229
    %p233 = scmp.eq.s32.totalorder %s25, 0
    %p234 = por %p232, %p233
    %p235 = scmp.ne.s32.totalorder %s227, %s229
    %p236 = scmp.eq.s32.totalorder %s30, 1
    %p237 = por %p235, %p236
    %p238 = scmp.ne.s32.totalorder %s229, %s230
    %p239 = scmp.eq.s32.totalorder %s30, 0
    %p240 = por %p238, %p239
    %p241 = scmp.ne.s32.totalorder %s229, %s230
    %p242 = scmp.eq.s32.totalorder %s31, 1
    %p243 = por %p241, %p242
    %p245 = scmp.ne.s32.totalorder %s230, %s244
    %p246 = scmp.eq.s32.totalorder %s31, 0
    %p247 = por %p245, %p246
    %s249 = sadd.s32 %s248, 1
    %p252 = scmp.eq.s32.totalorder %s25, 1
    %p253 = scmp.ne.s32.totalorder %s248, %s250
    %p254 = scmp.eq.s32.totalorder %s25, 0
    %p255 = por %p253, %p254
    %p256 = scmp.ne.s32.totalorder %s248, %s250
    %p257 = scmp.eq.s32.totalorder %s30, 1
    %p258 = por %p256, %p257
    %p259 = scmp.ne.s32.totalorder %s250, %s251
    %p260 = scmp.eq.s32.totalorder %s30, 0
    %p261 = por %p259, %p260
    %p262 = scmp.ne.s32.totalorder %s250, %s251
    %p263 = scmp.eq.s32.totalorder %s31, 1
    %p264 = por %p262, %p263
    %p266 = scmp.ne.s32.totalorder %s251, %s265
    %p267 = scmp.eq.s32.totalorder %s31, 0
    %p268 = por %p266, %p267
    %s270 = sadd.s32 %s269, 1
    %p273 = scmp.eq.s32.totalorder %s25, 1
    %p274 = scmp.ne.s32.totalorder %s269, %s271
    %p275 = scmp.eq.s32.totalorder %s25, 0
    %p276 = por %p274, %p275
    %p277 = scmp.ne.s32.totalorder %s269, %s271
    %p278 = scmp.eq.s32.totalorder %s30, 1
    %p279 = por %p277, %p278
    %p280 = scmp.ne.s32.totalorder %s271, %s272
    %p281 = scmp.eq.s32.totalorder %s30, 0
    %p282 = por %p280, %p281
    %p283 = scmp.ne.s32.totalorder %s271, %s272
    %p284 = scmp.eq.s32.totalorder %s31, 1
    %p285 = por %p283, %p284
    %p287 = scmp.ne.s32.totalorder %s272, %s286
    %p288 = scmp.eq.s32.totalorder %s31, 0
    %p289 = por %p287, %p288
    %s291 = sadd.s32 %s290, 1
    %p294 = scmp.eq.s32.totalorder %s25, 1
    %p295 = scmp.ne.s32.totalorder %s290, %s292
    %p296 = scmp.eq.s32.totalorder %s25, 0
    %p297 = por %p295, %p296
    %p298 = scmp.ne.s32.totalorder %s290, %s292
    %p299 = scmp.eq.s32.totalorder %s30, 1
    %p300 = por %p298, %p299
    %p301 = scmp.ne.s32.totalorder %s292, %s293
    %p302 = scmp.eq.s32.totalorder %s30, 0
    %p303 = por %p301, %p302
    %p304 = scmp.ne.s32.totalorder %s292, %s293
    %p305 = scmp.eq.s32.totalorder %s31, 1
    %p306 = por %p304, %p305
    %p308 = scmp.ne.s32.totalorder %s293, %s307
    %p309 = scmp.eq.s32.totalorder %s31, 0
    %p310 = por %p308, %p309
    %s312 = sadd.s32 %s311, 1
    %p315 = scmp.eq.s32.totalorder %s25, 1
    %p316 = scmp.ne.s32.totalorder %s311, %s313
    %p317 = scmp.eq.s32.totalorder %s25, 0
    %p318 = por %p316, %p317
    %p319 = scmp.ne.s32.totalorder %s311, %s313
    %p320 = scmp.eq.s32.totalorder %s30, 1
    %p321 = por %p319, %p320
    %p322 = scmp.ne.s32.totalorder %s313, %s314
    %p323 = scmp.eq.s32.totalorder %s30, 0
    %p324 = por %p322, %p323
    %p325 = scmp.ne.s32.totalorder %s313, %s314
    %p326 = scmp.eq.s32.totalorder %s31, 1
    %p327 = por %p325, %p326
    %p329 = scmp.ne.s32.totalorder %s314, %s328
    %p330 = scmp.eq.s32.totalorder %s31, 0
    %p331 = por %p329, %p330
    %s333 = sadd.s32 %s332, 1
    %p336 = scmp.eq.s32.totalorder %s25, 1
    %p337 = scmp.ne.s32.totalorder %s332, %s334
    %p338 = scmp.eq.s32.totalorder %s25, 0
    %p339 = por %p337, %p338
    %p340 = scmp.ne.s32.totalorder %s332, %s334
    %p341 = scmp.eq.s32.totalorder %s30, 1
    %p342 = por %p340, %p341
    %p343 = scmp.ne.s32.totalorder %s334, %s335
    %p344 = scmp.eq.s32.totalorder %s30, 0
    %p345 = por %p343, %p344
    %p346 = scmp.ne.s32.totalorder %s334, %s335
    %p347 = scmp.eq.s32.totalorder %s31, 1
    %p348 = por %p346, %p347
    %p350 = scmp.ne.s32.totalorder %s335, %s349
    %p351 = scmp.eq.s32.totalorder %s31, 0
    %p352 = por %p350, %p351
    %s354 = sadd.s32 %s353, 1
    %p357 = scmp.eq.s32.totalorder %s25, 1
    %p358 = scmp.ne.s32.totalorder %s353, %s355
    %p359 = scmp.eq.s32.totalorder %s25, 0
    %p360 = por %p358, %p359
    %p361 = scmp.ne.s32.totalorder %s353, %s355
    %p362 = scmp.eq.s32.totalorder %s30, 1
    %p363 = por %p361, %p362
    %p364 = scmp.ne.s32.totalorder %s355, %s356
    %p365 = scmp.eq.s32.totalorder %s30, 0
    %p366 = por %p364, %p365
    %p367 = scmp.ne.s32.totalorder %s355, %s356
    %p368 = scmp.eq.s32.totalorder %s31, 1
    %p369 = por %p367, %p368
    %p371 = scmp.ne.s32.totalorder %s356, %s370
    %p372 = scmp.eq.s32.totalorder %s31, 0
    %p373 = por %p371, %p372
    %s375 = sadd.s32 %s374, 1
    %p378 = scmp.eq.s32.totalorder %s25, 1
    %p379 = scmp.ne.s32.totalorder %s374, %s376
    %p380 = scmp.eq.s32.totalorder %s25, 0
    %p381 = por %p379, %p380
    %p382 = scmp.ne.s32.totalorder %s374, %s376
    %p383 = scmp.eq.s32.totalorder %s30, 1
    %p384 = por %p382, %p383
    %p385 = scmp.ne.s32.totalorder %s376, %s377
    %p386 = scmp.eq.s32.totalorder %s30, 0
    %p387 = por %p385, %p386
    %p388 = scmp.ne.s32.totalorder %s376, %s377
    %p389 = scmp.eq.s32.totalorder %s31, 1
    %p390 = por %p388, %p389
    %p392 = scmp.ne.s32.totalorder %s377, %s391
    %p393 = scmp.eq.s32.totalorder %s31, 0
    %p394 = por %p392, %p393
    %s396 = sadd.s32 %s395, 1
    %p399 = scmp.eq.s32.totalorder %s25, 1
    %p400 = scmp.ne.s32.totalorder %s395, %s397
    %p401 = scmp.eq.s32.totalorder %s25, 0
    %p402 = por %p400, %p401
    %p403 = scmp.ne.s32.totalorder %s395, %s397
    %p404 = scmp.eq.s32.totalorder %s30, 1
    %p405 = por %p403, %p404
    %p406 = scmp.ne.s32.totalorder %s397, %s398
    %p407 = scmp.eq.s32.totalorder %s30, 0
    %p408 = por %p406, %p407
    %p409 = scmp.ne.s32.totalorder %s397, %s398
    %p410 = scmp.eq.s32.totalorder %s31, 1
    %p411 = por %p409, %p410
    %p413 = scmp.ne.s32.totalorder %s398, %s412
    %p414 = scmp.eq.s32.totalorder %s31, 0
    %p415 = por %p413, %p414
    %s417 = sadd.s32 %s416, 1
    %p420 = scmp.eq.s32.totalorder %s25, 1
    %p421 = scmp.ne.s32.totalorder %s416, %s418
    %p422 = scmp.eq.s32.totalorder %s25, 0
    %p423 = por %p421, %p422
    %p424 = scmp.ne.s32.totalorder %s416, %s418
    %p425 = scmp.eq.s32.totalorder %s30, 1
    %p426 = por %p424, %p425
    %p427 = scmp.ne.s32.totalorder %s418, %s419
    %p428 = scmp.eq.s32.totalorder %s30, 0
    %p429 = por %p427, %p428
    %p430 = scmp.ne.s32.totalorder %s418, %s419
    %p431 = scmp.eq.s32.totalorder %s31, 1
    %p432 = por %p430, %p431
    %p434 = scmp.ne.s32.totalorder %s419, %s433
    %p435 = scmp.eq.s32.totalorder %s31, 0
    %p436 = por %p434, %p435
    %s437 = ssub.s32 %s25, %s32
    %p438 = scmp.eq.s32.totalorder %s437, 0
    %s440 = sadd.s32 %s439, 1
    %s441 = scalar_select %p438, %s439, %s440
    %p444 = pneg %p438
    %p445 = scmp.eq.s32.totalorder %s25, 1
    %p446 = por %p444, %p445
    %p447 = scmp.ne.s32.totalorder %s439, %s442
    %p448 = scmp.eq.s32.totalorder %s25, 0
    %p449 = por %p447, %p448
    %p450 = scmp.ne.s32.totalorder %s439, %s442
    %p451 = scmp.eq.s32.totalorder %s30, 1
    %p452 = por %p450, %p451
    %p453 = scmp.ne.s32.totalorder %s442, %s443
    %p454 = scmp.eq.s32.totalorder %s30, 0
    %p455 = por %p453, %p454
    %p456 = scmp.ne.s32.totalorder %s442, %s443
    %p457 = scmp.eq.s32.totalorder %s31, 1
    %p458 = por %p456, %p457
    %p460 = scmp.ne.s32.totalorder %s443, %s459
    %p461 = scmp.eq.s32.totalorder %s31, 0
    %p462 = por %p460, %p461
    %p463 = scmp.le.s32.totalorder 1, %s25
    %p464 = scmp.lt.s32.totalorder %s25, 3
    %p465 = pnand %p463, %p464
    %p466 = pneg %p465
    // Predicated region
    $region9: #{coord_att_forward.1} parent=5 // pred_check
      _
    $region10: #{coord_att_forward.1} parent=5 // pred_check_branch
      %468 = sbr.rel (%p465) target = $region12
    $region11: #{coord_att_forward.1} parent=5 // pred_region
      %s469 = ssub.s32 %s25, 1
      // Predicated region
      $region13: #{coord_att_forward.1} parent=11 // pred_check
        %p470 = pneg %p72
      $region14: #{coord_att_forward.1} parent=11 // pred_check_branch
        %472 = sbr.rel (%p470) target = $region16
      $region15: #{coord_att_forward.1} parent=11 // pred_region
        _
      $region16: #{coord_att_forward.1} parent=11 // pred_fallthru
        _
      // Predicated region
      $region17: #{coord_att_forward.1} parent=11 // pred_check
        %p473 = pneg %p93
      $region18: #{coord_att_forward.1} parent=11 // pred_check_branch
        %475 = sbr.rel (%p473) target = $region20
      $region19: #{coord_att_forward.1} parent=11 // pred_region
        _
      $region20: #{coord_att_forward.1} parent=11 // pred_fallthru
        _
      // Predicated region
      $region21: #{coord_att_forward.1} parent=11 // pred_check
        %p476 = pneg %p114
      $region22: #{coord_att_forward.1} parent=11 // pred_check_branch
        %478 = sbr.rel (%p476) target = $region24
      $region23: #{coord_att_forward.1} parent=11 // pred_region
        _
      $region24: #{coord_att_forward.1} parent=11 // pred_fallthru
        _
      // Predicated region
      $region25: #{coord_att_forward.1} parent=11 // pred_check
        %p479 = pneg %p135
      $region26: #{coord_att_forward.1} parent=11 // pred_check_branch
        %481 = sbr.rel (%p479) target = $region28
      $region27: #{coord_att_forward.1} parent=11 // pred_region
        _
      $region28: #{coord_att_forward.1} parent=11 // pred_fallthru
        _
      // Predicated region
      $region29: #{coord_att_forward.1} parent=11 // pred_check
        %p482 = pneg %p156
      $region30: #{coord_att_forward.1} parent=11 // pred_check_branch
        %484 = sbr.rel (%p482) target = $region32
      $region31: #{coord_att_forward.1} parent=11 // pred_region
        _
      $region32: #{coord_att_forward.1} parent=11 // pred_fallthru
        _
      // Predicated region
      $region33: #{coord_att_forward.1} parent=11 // pred_check
        %p485 = pneg %p177
      $region34: #{coord_att_forward.1} parent=11 // pred_check_branch
        %487 = sbr.rel (%p485) target = $region36
      $region35: #{coord_att_forward.1} parent=11 // pred_region
        _
      $region36: #{coord_att_forward.1} parent=11 // pred_fallthru
        _
      // Predicated region
      $region37: #{coord_att_forward.1} parent=11 // pred_check
        %p488 = pneg %p198
      $region38: #{coord_att_forward.1} parent=11 // pred_check_branch
        %490 = sbr.rel (%p488) target = $region40
      $region39: #{coord_att_forward.1} parent=11 // pred_region
        _
      $region40: #{coord_att_forward.1} parent=11 // pred_fallthru
        _
      // Predicated region
      $region41: #{coord_att_forward.1} parent=11 // pred_check
        %p491 = pneg %p219
      $region42: #{coord_att_forward.1} parent=11 // pred_check_branch
        %493 = sbr.rel (%p491) target = $region44
      $region43: #{coord_att_forward.1} parent=11 // pred_region
        _
      $region44: #{coord_att_forward.1} parent=11 // pred_fallthru
        _
      // Predicated region
      $region45: #{coord_att_forward.1} parent=11 // pred_check
        %p494 = pneg %p240
      $region46: #{coord_att_forward.1} parent=11 // pred_check_branch
        %496 = sbr.rel (%p494) target = $region48
      $region47: #{coord_att_forward.1} parent=11 // pred_region
        _
      $region48: #{coord_att_forward.1} parent=11 // pred_fallthru
        _
      // Predicated region
      $region49: #{coord_att_forward.1} parent=11 // pred_check
        %p497 = pneg %p261
      $region50: #{coord_att_forward.1} parent=11 // pred_check_branch
        %499 = sbr.rel (%p497) target = $region52
      $region51: #{coord_att_forward.1} parent=11 // pred_region
        _
      $region52: #{coord_att_forward.1} parent=11 // pred_fallthru
        _
      // Predicated region
      $region53: #{coord_att_forward.1} parent=11 // pred_check
        %p500 = pneg %p282
      $region54: #{coord_att_forward.1} parent=11 // pred_check_branch
        %502 = sbr.rel (%p500) target = $region56
      $region55: #{coord_att_forward.1} parent=11 // pred_region
        _
      $region56: #{coord_att_forward.1} parent=11 // pred_fallthru
        _
      // Predicated region
      $region57: #{coord_att_forward.1} parent=11 // pred_check
        %p503 = pneg %p303
      $region58: #{coord_att_forward.1} parent=11 // pred_check_branch
        %505 = sbr.rel (%p503) target = $region60
      $region59: #{coord_att_forward.1} parent=11 // pred_region
        _
      $region60: #{coord_att_forward.1} parent=11 // pred_fallthru
        _
      // Predicated region
      $region61: #{coord_att_forward.1} parent=11 // pred_check
        %p506 = pneg %p324
      $region62: #{coord_att_forward.1} parent=11 // pred_check_branch
        %508 = sbr.rel (%p506) target = $region64
      $region63: #{coord_att_forward.1} parent=11 // pred_region
        _
      $region64: #{coord_att_forward.1} parent=11 // pred_fallthru
        _
      // Predicated region
      $region65: #{coord_att_forward.1} parent=11 // pred_check
        %p509 = pneg %p345
      $region66: #{coord_att_forward.1} parent=11 // pred_check_branch
        %511 = sbr.rel (%p509) target = $region68
      $region67: #{coord_att_forward.1} parent=11 // pred_region
        _
      $region68: #{coord_att_forward.1} parent=11 // pred_fallthru
        _
      // Predicated region
      $region69: #{coord_att_forward.1} parent=11 // pred_check
        %p512 = pneg %p366
      $region70: #{coord_att_forward.1} parent=11 // pred_check_branch
        %514 = sbr.rel (%p512) target = $region72
      $region71: #{coord_att_forward.1} parent=11 // pred_region
        _
      $region72: #{coord_att_forward.1} parent=11 // pred_fallthru
        _
      // Predicated region
      $region73: #{coord_att_forward.1} parent=11 // pred_check
        %p515 = pneg %p387
      $region74: #{coord_att_forward.1} parent=11 // pred_check_branch
        %517 = sbr.rel (%p515) target = $region76
      $region75: #{coord_att_forward.1} parent=11 // pred_region
        _
      $region76: #{coord_att_forward.1} parent=11 // pred_fallthru
        _
      // Predicated region
      $region77: #{coord_att_forward.1} parent=11 // pred_check
        %p518 = pneg %p408
      $region78: #{coord_att_forward.1} parent=11 // pred_check_branch
        %520 = sbr.rel (%p518) target = $region80
      $region79: #{coord_att_forward.1} parent=11 // pred_region
        _
      $region80: #{coord_att_forward.1} parent=11 // pred_fallthru
        _
      // Predicated region
      $region81: #{coord_att_forward.1} parent=11 // pred_check
        %p521 = pneg %p429
      $region82: #{coord_att_forward.1} parent=11 // pred_check_branch
        %523 = sbr.rel (%p521) target = $region84
      $region83: #{coord_att_forward.1} parent=11 // pred_region
        _
      $region84: #{coord_att_forward.1} parent=11 // pred_fallthru
        _
    $region12: #{coord_att_forward.1} parent=5 // pred_fallthru
      _
    %p524 = scmp.lt.s32.totalorder %s25, 2
    // Predicated region
    $region85: #{coord_att_forward.1} parent=5 // pred_check
      %p525 = pneg %p524
    $region86: #{coord_att_forward.1} parent=5 // pred_check_branch
      %527 = sbr.rel (%p525) target = $region88
    $region87: #{coord_att_forward.1} parent=5 // pred_region
      // Predicated region
      $region89: #{coord_att_forward.1} parent=87 // pred_check
        %p528 = pneg %p45
      $region90: #{coord_att_forward.1} parent=87 // pred_check_branch
        %530 = sbr.rel (%p528) target = $region92
      $region91: #{coord_att_forward.1} parent=87 // pred_region
        %s531 = smul.u32 2, %s25
        %p532 = scmp.lt.s32.totalorder %s531, 3
        %s533 = scalar_select %p532, %s531, 3
        %s534 = smul.addr %s533, 16
        %s535 = smul.addr %s534, 8
        %s536 = scalar_lea.vmem %s0, %s535
        %s537 = smul.u32 2, %s25
      $region92: #{coord_att_forward.1} parent=87 // pred_fallthru
        _
    $region88: #{coord_att_forward.1} parent=5 // pred_fallthru
      _
    %p538 = scmp.le.s32.totalorder 1, %s25
    %p539 = scmp.lt.s32.totalorder %s25, 3
    %p540 = pnand %p538, %p539
    %p541 = pneg %p540
    // Predicated region
    $region93: #{coord_att_forward.1} parent=5 // pred_check
      _
    $region94: #{coord_att_forward.1} parent=5 // pred_check_branch
      %543 = sbr.rel (%p540) target = $region96
    $region95: #{coord_att_forward.1} parent=5 // pred_region
      %s544 = ssub.s32 %s25, 1
      %s545 = smul.u32 2, %s30
      %p546 = scmp.lt.s32.totalorder %s545, 3
      %s547 = scalar_select %p546, %s545, 3
      %s548 = smul.addr %s547, 16
      %s549 = smul.addr %s548, 8
      %s550 = scalar_lea.vmem %s0, %s549
      %p551 = pneg %p51
      %p552 = pneg %p48
      %p553 = pneg %p72
      %p554 = pneg %p69
      %p555 = pneg %p93
      %p556 = pneg %p90
      %p557 = pneg %p114
      %p558 = pneg %p111
      %p559 = pneg %p135
      %p560 = pneg %p132
      %p561 = pneg %p156
      %p562 = pneg %p153
      %p563 = pneg %p177
      %p564 = pneg %p174
      %p565 = pneg %p198
      %p566 = pneg %p195
      %p567 = pneg %p219
      %p568 = pneg %p216
      %p569 = pneg %p240
      %p570 = pneg %p237
      %p571 = pneg %p261
      %p572 = pneg %p258
      %p573 = pneg %p282
      %p574 = pneg %p279
      %p575 = pneg %p303
      %p576 = pneg %p300
      %p577 = pneg %p324
      %p578 = pneg %p321
      %p579 = pneg %p345
      %p580 = pneg %p342
      %p581 = pneg %p366
      %p582 = pneg %p363
      %p583 = pneg %p387
      %p584 = pneg %p384
      %p585 = pneg %p408
      %p586 = pneg %p405
      %p587 = pneg %p429
      %p588 = pneg %p426
      %p589 = pneg %p455
      %p590 = pneg %p452
      %s591 = smul.u32 2, %s30
      %p592 = scmp.lt.s32.totalorder %s591, 3
      %s593 = scalar_select %p592, %s591, 3
      %s594 = smul.addr %s593, 16
      %s595 = smul.addr %s594, 8
      %s596 = scalar_lea.vmem %s19, %s595
      %s597 = smul.u32 2, %s30
      %p598 = scmp.lt.s32.totalorder %s597, 3
      %s599 = scalar_select %p598, %s597, 3
      %s600 = smul.addr %s599, 16
      %s601 = smul.addr %s600, 8
      %s602 = scalar_lea.vmem %s0, %s601
      %s603 = smul.u32 2, %s30
      %s604 = smul.u32 2, %s30
      %p605 = scmp.lt.s32.totalorder %s604, 3
      %s606 = scalar_select %p605, %s604, 3
      %s607 = smul.addr %s606, 16
      %s608 = smul.addr %s607, 8
      %s609 = scalar_lea.vmem %s19, %s608
      %s610 = smul.u32 2, %s30
      %v612 = vld [vmem:[%s602] sm:$0xff]
      %v613 = vld [vmem:[%s602 + $0x8] sm:$0xff]
      %v614 = vld [vmem:[%s602 + $0x10] sm:$0xff]
      %v615 = vld [vmem:[%s602 + $0x18] sm:$0xff]
      %v616 = vld [vmem:[%s602 + $0x20] sm:$0xff]
      %v617 = vld [vmem:[%s602 + $0x28] sm:$0xff]
      %v618 = vld [vmem:[%s602 + $0x30] sm:$0xff]
      %v619 = vld [vmem:[%s602 + $0x38] sm:$0xff]
      %v620 = vld [vmem:[%s602 + $0x40] sm:$0xff]
      %v621 = vld [vmem:[%s602 + $0x48] sm:$0xff]
      %v622 = vld [vmem:[%s602 + $0x50] sm:$0xff]
      %v623 = vld [vmem:[%s602 + $0x58] sm:$0xff]
      %v624 = vld [vmem:[%s602 + $0x60] sm:$0xff]
      %v625 = vld [vmem:[%s602 + $0x68] sm:$0xff]
      %v626 = vld [vmem:[%s602 + $0x70] sm:$0xff]
      %v627 = vld [vmem:[%s602 + $0x78] sm:$0xff]
      %v628 = vld [vmem:[%s602 + $0x80] sm:$0xff]
      %v629 = vld [vmem:[%s602 + $0x88] sm:$0xff]
      %v630 = vld [vmem:[%s602 + $0x90] sm:$0xff]
      %v631 = vld [vmem:[%s602 + $0x98] sm:$0xff]
      %v632 = vld [vmem:[%s602 + $0xa0] sm:$0xff]
      %v633 = vld [vmem:[%s602 + $0xa8] sm:$0xff]
      %v634 = vld [vmem:[%s602 + $0xb0] sm:$0xff]
      %v635 = vld [vmem:[%s602 + $0xb8] sm:$0xff]
      %v636 = vld [vmem:[%s602 + $0xc0] sm:$0xff]
      %v637 = vld [vmem:[%s602 + $0xc8] sm:$0xff]
      %v638 = vld [vmem:[%s602 + $0xd0] sm:$0xff]
      %v639 = vld [vmem:[%s602 + $0xd8] sm:$0xff]
      %v640 = vld [vmem:[%s602 + $0xe0] sm:$0xff]
      %v641 = vld [vmem:[%s602 + $0xe8] sm:$0xff]
      %v642 = vld [vmem:[%s602 + $0xf0] sm:$0xff]
      %v643 = vld [vmem:[%s602 + $0xf8] sm:$0xff]
      %v644 = vld [vmem:[%s1] sm:$0xff]
      %v645 = vld [vmem:[%s1 + $0x8] sm:$0xff]
      %v646 = vld [vmem:[%s1 + $0x10] sm:$0xff]
      %v647 = vld [vmem:[%s1 + $0x18] sm:$0xff]
      %v648 = vld [vmem:[%s1 + $0x20] sm:$0xff]
      %v649 = vld [vmem:[%s1 + $0x28] sm:$0xff]
      %v650 = vld [vmem:[%s1 + $0x30] sm:$0xff]
      %v651 = vld [vmem:[%s1 + $0x38] sm:$0xff]
      %v652 = vld [vmem:[%s1 + $0x40] sm:$0xff]
      %v653 = vld [vmem:[%s1 + $0x48] sm:$0xff]
      %v654 = vld [vmem:[%s1 + $0x50] sm:$0xff]
      %v655 = vld [vmem:[%s1 + $0x58] sm:$0xff]
      %v656 = vld [vmem:[%s1 + $0x60] sm:$0xff]
      %v657 = vld [vmem:[%s1 + $0x68] sm:$0xff]
      %v658 = vld [vmem:[%s1 + $0x70] sm:$0xff]
      %v659 = vld [vmem:[%s1 + $0x78] sm:$0xff]
      %v660 = vld [vmem:[%s1 + $0x80] sm:$0xff]
      %v661 = vld [vmem:[%s1 + $0x88] sm:$0xff]
      %v662 = vld [vmem:[%s1 + $0x90] sm:$0xff]
      %v663 = vld [vmem:[%s1 + $0x98] sm:$0xff]
      %v664 = vld [vmem:[%s1 + $0xa0] sm:$0xff]
      %v665 = vld [vmem:[%s1 + $0xa8] sm:$0xff]
      %v666 = vld [vmem:[%s1 + $0xb0] sm:$0xff]
      %v667 = vld [vmem:[%s1 + $0xb8] sm:$0xff]
      %v668 = vld [vmem:[%s1 + $0xc0] sm:$0xff]
      %v669 = vld [vmem:[%s1 + $0xc8] sm:$0xff]
      %v670 = vld [vmem:[%s1 + $0xd0] sm:$0xff]
      %v671 = vld [vmem:[%s1 + $0xd8] sm:$0xff]
      %v672 = vld [vmem:[%s1 + $0xe0] sm:$0xff]
      %v673 = vld [vmem:[%s1 + $0xe8] sm:$0xff]
      %v674 = vld [vmem:[%s1 + $0xf0] sm:$0xff]
      %v675 = vld [vmem:[%s1 + $0xf8] sm:$0xff]
      %676 = vmatprep.subr.mxu0 0.0
      %677 = vmatpush1.msra.mxu0 %v659
      %678 = vmatprep.subr.mxu0 0.0
      %679 = vmatpush1.msra.mxu0 %v658
      %680 = vmatprep.subr.mxu0 0.0
      %681 = vmatpush1.msra.mxu0 %v657
      %682 = vmatprep.subr.mxu0 0.0
      %683 = vmatpush1.msra.mxu0 %v656
      %684 = vmatprep.subr.mxu0 0.0
      %685 = vmatpush1.msra.mxu0 %v655
      %686 = vmatprep.subr.mxu0 0.0
      %687 = vmatpush1.msra.mxu0 %v654
      %688 = vmatprep.subr.mxu0 0.0
      %689 = vmatpush1.msra.mxu0 %v653
      %690 = vmatprep.subr.mxu0 0.0
      %691 = vmatpush1.msra.mxu0 %v652
      %692 = vmatprep.subr.mxu0 0.0
      %693 = vmatpush1.msra.mxu0 %v651
      %694 = vmatprep.subr.mxu0 0.0
      %695 = vmatpush1.msra.mxu0 %v650
      %696 = vmatprep.subr.mxu0 0.0
      %697 = vmatpush1.msra.mxu0 %v649
      %698 = vmatprep.subr.mxu0 0.0
      %699 = vmatpush1.msra.mxu0 %v648
      %700 = vmatprep.subr.mxu0 0.0
      %701 = vmatpush1.msra.mxu0 %v647
      %702 = vmatprep.subr.mxu0 0.0
      %703 = vmatpush1.msra.mxu0 %v646
      %704 = vmatprep.subr.mxu0 0.0
      %705 = vmatpush1.msra.mxu0 %v645
      %706 = vmatprep.subr.mxu0 0.0
      %707 = vmatpush1.msra.mxu0 %v644
      %708 = vmatprep.subr.mxu0 0.0
      %709 = vmatpush2.msra.mxu0 %v675
      %710 = vmatprep.subr.mxu0 0.0
      %711 = vmatpush2.msra.mxu0 %v674
      %712 = vmatprep.subr.mxu0 0.0
      %713 = vmatpush2.msra.mxu0 %v673
      %714 = vmatprep.subr.mxu0 0.0
      %715 = vmatpush2.msra.mxu0 %v672
      %716 = vmatprep.subr.mxu0 0.0
      %717 = vmatpush2.msra.mxu0 %v671
      %718 = vmatprep.subr.mxu0 0.0
      %719 = vmatpush2.msra.mxu0 %v670
      %720 = vmatprep.subr.mxu0 0.0
      %721 = vmatpush2.msra.mxu0 %v669
      %722 = vmatprep.subr.mxu0 0.0
      %723 = vmatpush2.msra.mxu0 %v668
      %724 = vmatprep.subr.mxu0 0.0
      %725 = vmatpush2.msra.mxu0 %v667
      %726 = vmatprep.subr.mxu0 0.0
      %727 = vmatpush2.msra.mxu0 %v666
      %728 = vmatprep.subr.mxu0 0.0
      %729 = vmatpush2.msra.mxu0 %v665
      %730 = vmatprep.subr.mxu0 0.0
      %731 = vmatpush2.msra.mxu0 %v664
      %732 = vmatprep.subr.mxu0 0.0
      %733 = vmatpush2.msra.mxu0 %v663
      %734 = vmatprep.subr.mxu0 0.0
      %735 = vmatpush2.msra.mxu0 %v662
      %736 = vmatprep.subr.mxu0 0.0
      %737 = vmatpush2.msra.mxu0 %v661
      %738 = vmatprep.subr.mxu0 0.0
      %739 = vmatpush2.msra.mxu0 %v660
      %740 = vmatprep.mubr.f32.mxu0 %v613
      %741 = vmatmul.mubr.f32.gmra.mxu0 %v612
      %v742 = vpop.f32.mrf.mxu0
      %v743 = vadd.f32 0.0, %v742
      %v744 = vpop.f32.mrf.mxu0
      %745 = vmatprep.mubr.f32.mxu0 %v615
      %746 = vmatmul.mubr.f32.gmra.mxu0 %v614
      %v747 = vpop.f32.mrf.mxu0
      %v748 = vadd.f32 0.0, %v747
      %v749 = vpop.f32.mrf.mxu0
      %750 = vmatprep.mubr.f32.mxu0 %v617
      %751 = vmatmul.mubr.f32.gmra.mxu0 %v616
      %v752 = vpop.f32.mrf.mxu0
      %v753 = vadd.f32 0.0, %v752
      %v754 = vpop.f32.mrf.mxu0
      %755 = vmatprep.mubr.f32.mxu0 %v619
      %756 = vmatmul.mubr.f32.gmra.mxu0 %v618
      %v757 = vpop.f32.mrf.mxu0
      %v758 = vadd.f32 0.0, %v757
      %v759 = vpop.f32.mrf.mxu0
      %760 = vmatprep.mubr.f32.mxu0 %v621
      %761 = vmatmul.mubr.f32.gmra.mxu0 %v620
      %v762 = vpop.f32.mrf.mxu0
      %v763 = vadd.f32 0.0, %v762
      %v764 = vpop.f32.mrf.mxu0
      %765 = vmatprep.mubr.f32.mxu0 %v623
      %766 = vmatmul.mubr.f32.gmra.mxu0 %v622
      %v767 = vpop.f32.mrf.mxu0
      %v768 = vadd.f32 0.0, %v767
      %v769 = vpop.f32.mrf.mxu0
      %770 = vmatprep.mubr.f32.mxu0 %v625
      %771 = vmatmul.mubr.f32.gmra.mxu0 %v624
      %v772 = vpop.f32.mrf.mxu0
      %v773 = vadd.f32 0.0, %v772
      %v774 = vpop.f32.mrf.mxu0
      %775 = vmatprep.mubr.f32.mxu0 %v627
      %776 = vmatmul.mubr.f32.gmra.mxu0 %v626
      %v777 = vpop.f32.mrf.mxu0
      %v778 = vadd.f32 0.0, %v777
      %v779 = vpop.f32.mrf.mxu0
      %780 = vmatprep.mubr.f32.mxu0 %v629
      %781 = vmatmul.mubr.f32.gmra.mxu0 %v628
      %v782 = vpop.f32.mrf.mxu0
      %v783 = vadd.f32 0.0, %v782
      %v784 = vpop.f32.mrf.mxu0
      %785 = vmatprep.mubr.f32.mxu0 %v631
      %786 = vmatmul.mubr.f32.gmra.mxu0 %v630
      %v787 = vpop.f32.mrf.mxu0
      %v788 = vadd.f32 0.0, %v787
      %v789 = vpop.f32.mrf.mxu0
      %790 = vmatprep.mubr.f32.mxu0 %v633
      %791 = vmatmul.mubr.f32.gmra.mxu0 %v632
      %v792 = vpop.f32.mrf.mxu0
      %v793 = vadd.f32 0.0, %v792
      %v794 = vpop.f32.mrf.mxu0
      %795 = vmatprep.mubr.f32.mxu0 %v635
      %796 = vmatmul.mubr.f32.gmra.mxu0 %v634
      %v797 = vpop.f32.mrf.mxu0
      %v798 = vadd.f32 0.0, %v797
      %v799 = vpop.f32.mrf.mxu0
      %800 = vmatprep.mubr.f32.mxu0 %v637
      %801 = vmatmul.mubr.f32.gmra.mxu0 %v636
      %v802 = vpop.f32.mrf.mxu0
      %v803 = vadd.f32 0.0, %v802
      %v804 = vpop.f32.mrf.mxu0
      %805 = vmatprep.mubr.f32.mxu0 %v639
      %806 = vmatmul.mubr.f32.gmra.mxu0 %v638
      %v807 = vpop.f32.mrf.mxu0
      %v808 = vadd.f32 0.0, %v807
      %v809 = vpop.f32.mrf.mxu0
      %810 = vmatprep.mubr.f32.mxu0 %v641
      %811 = vmatmul.mubr.f32.gmra.mxu0 %v640
      %v812 = vpop.f32.mrf.mxu0
      %v813 = vadd.f32 0.0, %v812
      %v814 = vpop.f32.mrf.mxu0
      %815 = vmatprep.mubr.f32.mxu0 %v643
      %816 = vmatmul.mubr.f32.gmra.mxu0 %v642
      %v817 = vpop.f32.mrf.mxu0
      %v818 = vadd.f32 0.0, %v817
      %v819 = vpop.f32.mrf.mxu0
      %820 = vdwg.mxu0
      %821 = vxpose.xlu0.b32.start [1/16] %v743, 128
      %822 = vxpose.xlu0.b32.cont [2/16] %v748, 128
      %823 = vxpose.xlu0.b32.cont [3/16] %v753, 128
      %824 = vxpose.xlu0.b32.cont [4/16] %v758, 128
      %825 = vxpose.xlu0.b32.cont [5/16] %v763, 128
      %826 = vxpose.xlu0.b32.cont [6/16] %v768, 128
      %827 = vxpose.xlu0.b32.cont [7/16] %v773, 128
      %828 = vxpose.xlu0.b32.cont [8/16] %v778, 128
      %829 = vxpose.xlu0.b32.cont [9/16] 0.0, 128
      %830 = vxpose.xlu0.b32.cont [10/16] 0.0, 128
      %831 = vxpose.xlu0.b32.cont [11/16] 0.0, 128
      %832 = vxpose.xlu0.b32.cont [12/16] 0.0, 128
      %833 = vxpose.xlu0.b32.cont [13/16] 0.0, 128
      %834 = vxpose.xlu0.b32.cont [14/16] 0.0, 128
      %835 = vxpose.xlu0.b32.cont [15/16] 0.0, 128
      %836 = vxpose.xlu0.b32.end [16/16] 0.0, 128
      %v837 = vpop.trf.xlu0
      %v838 = vpop.trf.xlu0
      %v839 = vpop.trf.xlu0
      %v840 = vpop.trf.xlu0
      %v841 = vpop.trf.xlu0
      %v842 = vpop.trf.xlu0
      %v843 = vpop.trf.xlu0
      %v844 = vpop.trf.xlu0
      %v845 = vpop.trf.xlu0
      %v846 = vpop.trf.xlu0
      %v847 = vpop.trf.xlu0
      %v848 = vpop.trf.xlu0
      %v849 = vpop.trf.xlu0
      %v850 = vpop.trf.xlu0
      %v851 = vpop.trf.xlu0
      %v852 = vpop.trf.xlu0
      %853 = vxpose.xlu0.b32.start [1/16] %v783, 128
      %854 = vxpose.xlu0.b32.cont [2/16] %v788, 128
      %855 = vxpose.xlu0.b32.cont [3/16] %v793, 128
      %856 = vxpose.xlu0.b32.cont [4/16] %v798, 128
      %857 = vxpose.xlu0.b32.cont [5/16] %v803, 128
      %858 = vxpose.xlu0.b32.cont [6/16] %v808, 128
      %859 = vxpose.xlu0.b32.cont [7/16] %v813, 128
      %860 = vxpose.xlu0.b32.cont [8/16] %v818, 128
      %861 = vxpose.xlu0.b32.cont [9/16] 0.0, 128
      %862 = vxpose.xlu0.b32.cont [10/16] 0.0, 128
      %863 = vxpose.xlu0.b32.cont [11/16] 0.0, 128
      %864 = vxpose.xlu0.b32.cont [12/16] 0.0, 128
      %865 = vxpose.xlu0.b32.cont [13/16] 0.0, 128
      %866 = vxpose.xlu0.b32.cont [14/16] 0.0, 128
      %867 = vxpose.xlu0.b32.cont [15/16] 0.0, 128
      %868 = vxpose.xlu0.b32.end [16/16] 0.0, 128
      %v869 = vpop.trf.xlu0
      %v870 = vpop.trf.xlu0
      %v871 = vpop.trf.xlu0
      %v872 = vpop.trf.xlu0
      %v873 = vpop.trf.xlu0
      %v874 = vpop.trf.xlu0
      %v875 = vpop.trf.xlu0
      %v876 = vpop.trf.xlu0
      %v877 = vpop.trf.xlu0
      %v878 = vpop.trf.xlu0
      %v879 = vpop.trf.xlu0
      %v880 = vpop.trf.xlu0
      %v881 = vpop.trf.xlu0
      %v882 = vpop.trf.xlu0
      %v883 = vpop.trf.xlu0
      %v884 = vpop.trf.xlu0
      %v885 = vpack.c.bf16 %v838, %v837
      %v886 = vpack.c.bf16 %v840, %v839
      %v887 = vpack.c.bf16 %v870, %v869
      %v888 = vpack.c.bf16 %v872, %v871
      %v889 = vld [vmem:[%s3] sm:$0xf]
      %v890 = vld [vmem:[%s3 + $0x4] sm:$0xf]
      %v891 = vld [vmem:[%s3 + $0x8] sm:$0xf]
      %v892 = vld [vmem:[%s3 + $0xc] sm:$0xf]
      %v893 = vld [vmem:[%s3 + $0x10] sm:$0xf]
      %v894 = vld [vmem:[%s3 + $0x14] sm:$0xf]
      %v895 = vld [vmem:[%s3 + $0x18] sm:$0xf]
      %v896 = vld [vmem:[%s3 + $0x1c] sm:$0xf]
      %v897 = vld [vmem:[%s4] sm:$0x1]
      %v899 = vlaneseq
      %v900 = vshrl.u32 %v899, 7
      %v901 = vsub.s32 0, %v900
      %v902 = vrot.slane %v897, %v901
      %v912 = vunpack.c.l.b16 %v889
      %v913 = vunpack.c.l.b16 %v890
      %v914 = vunpack.c.l.b16 %v891
      %v915 = vunpack.c.l.b16 %v892
      %v916 = vunpack.c.l.b16 %v893
      %v917 = vunpack.c.l.b16 %v894
      %v918 = vunpack.c.l.b16 %v895
      %v919 = vunpack.c.l.b16 %v896
      %v920 = vpack.c.b16 %v913, %v912
      %v921 = vpack.c.b16 %v915, %v914
      %v922 = vpack.c.b16 %v917, %v916
      %v923 = vpack.c.b16 %v919, %v918
      %vm928 = vcmask 523264
      %v930 = vsel %vm928, %v885, 0
      %v933 = vsel %vm928, %v886, 0
      %v936 = vsel %vm928, %v887, 0
      %v939 = vsel %vm928, %v888, 0
      %941 = vmatprep.subr.bf16.mxu0 0
      %942 = vmatpush1.bf16.msra.mxu0 0
      %943 = vmatprep.subr.bf16.mxu0 0
      %944 = vmatpush1.bf16.msra.mxu0 0
      %945 = vmatprep.subr.bf16.mxu0 0
      %946 = vmatpush1.bf16.msra.mxu0 0
      %947 = vmatprep.subr.bf16.mxu0 0
      %948 = vmatpush1.bf16.msra.mxu0 0
      %949 = vmatprep.subr.bf16.mxu0 0
      %950 = vmatpush1.bf16.msra.mxu0 %v923
      %951 = vmatprep.subr.bf16.mxu0 0
      %952 = vmatpush1.bf16.msra.mxu0 %v922
      %953 = vmatprep.subr.bf16.mxu0 0
      %954 = vmatpush1.bf16.msra.mxu0 %v921
      %955 = vmatprep.subr.bf16.mxu0 0
      %956 = vmatpush1.bf16.msra.mxu0 %v920
      %957 = vmatprep.subr.bf16.mxu0 0
      %958 = vmatpush2.bf16.msra.mxu0 0
      %959 = vmatprep.subr.bf16.mxu0 0
      %960 = vmatpush2.bf16.msra.mxu0 0
      %961 = vmatprep.subr.bf16.mxu0 0
      %962 = vmatpush2.bf16.msra.mxu0 0
      %963 = vmatprep.subr.bf16.mxu0 0
      %964 = vmatpush2.bf16.msra.mxu0 0
      %965 = vmatprep.subr.bf16.mxu0 0
      %966 = vmatpush2.bf16.msra.mxu0 0
      %967 = vmatprep.subr.bf16.mxu0 0
      %968 = vmatpush2.bf16.msra.mxu0 0
      %969 = vmatprep.subr.bf16.mxu0 0
      %970 = vmatpush2.bf16.msra.mxu0 0
      %971 = vmatprep.subr.bf16.mxu0 0
      %972 = vmatpush2.bf16.msra.mxu0 0
      %973 = vmatprep.mubr.bf16.mxu0 0
      %974 = vmatmul.mubr.bf16.gmra.mxu0 %v930
      %v975 = vpop.f32.mrf.mxu0
      %v976 = vadd.f32 %v902, %v975
      %v977 = vpop.f32.mrf.mxu0
      %v978 = vpop.f32.mrf.mxu0
      %v979 = vadd.f32 %v902, %v978
      %v980 = vpop.f32.mrf.mxu0
      %981 = vmatprep.mubr.bf16.mxu0 0
      %982 = vmatmul.mubr.bf16.gmra.mxu0 %v933
      %v983 = vpop.f32.mrf.mxu0
      %v984 = vadd.f32 %v902, %v983
      %v985 = vpop.f32.mrf.mxu0
      %v986 = vpop.f32.mrf.mxu0
      %v987 = vadd.f32 %v902, %v986
      %v988 = vpop.f32.mrf.mxu0
      %989 = vmatprep.mubr.bf16.mxu0 0
      %990 = vmatmul.mubr.bf16.gmra.mxu0 %v936
      %v991 = vpop.f32.mrf.mxu0
      %v992 = vadd.f32 %v902, %v991
      %v993 = vpop.f32.mrf.mxu0
      %v994 = vpop.f32.mrf.mxu0
      %v995 = vadd.f32 %v902, %v994
      %v996 = vpop.f32.mrf.mxu0
      %997 = vmatprep.mubr.bf16.mxu0 0
      %998 = vmatmul.mubr.bf16.gmra.mxu0 %v939
      %v999 = vpop.f32.mrf.mxu0
      %v1000 = vadd.f32 %v902, %v999
      %v1001 = vpop.f32.mrf.mxu0
      %v1002 = vpop.f32.mrf.mxu0
      %v1003 = vadd.f32 %v902, %v1002
      %v1004 = vpop.f32.mrf.mxu0
      %1005 = vdwg.mxu0
      %v1006 = vpack.c.bf16 %v979, %v976
      %v1007 = vpack.c.bf16 %v987, %v984
      %v1008 = vpack.c.bf16 %v995, %v992
      %v1009 = vpack.c.bf16 %v1003, %v1000
      %v1010 = vld [vmem:[%s5] sm:$0xf]
      %v1011 = vld [vmem:[%s5 + $0x4] sm:$0xf]
      %v1012 = vld [vmem:[%s5 + $0x8] sm:$0xf]
      %v1013 = vld [vmem:[%s5 + $0xc] sm:$0xf]
      %v1014 = vld [vmem:[%s5 + $0x10] sm:$0xf]
      %v1015 = vld [vmem:[%s5 + $0x14] sm:$0xf]
      %v1016 = vld [vmem:[%s5 + $0x18] sm:$0xf]
      %v1017 = vld [vmem:[%s5 + $0x1c] sm:$0xf]
      %v1018 = vld [vmem:[%s6] sm:$0x1]
      %v1020 = vlaneseq
      %v1021 = vshrl.u32 %v1020, 7
      %v1022 = vsub.s32 0, %v1021
      %v1023 = vrot.slane %v1018, %v1022
      %v1033 = vunpack.c.l.b16 %v1010
      %v1034 = vunpack.c.l.b16 %v1011
      %v1035 = vunpack.c.l.b16 %v1012
      %v1036 = vunpack.c.l.b16 %v1013
      %v1037 = vunpack.c.l.b16 %v1014
      %v1038 = vunpack.c.l.b16 %v1015
      %v1039 = vunpack.c.l.b16 %v1016
      %v1040 = vunpack.c.l.b16 %v1017
      %v1041 = vpack.c.b16 %v1034, %v1033
      %v1042 = vpack.c.b16 %v1036, %v1035
      %v1043 = vpack.c.b16 %v1038, %v1037
      %v1044 = vpack.c.b16 %v1040, %v1039
      %v1050 = vsel %vm928, %v1006, 0
      %v1053 = vsel %vm928, %v1007, 0
      %v1056 = vsel %vm928, %v1008, 0
      %v1059 = vsel %vm928, %v1009, 0
      %1061 = vmatprep.subr.bf16.mxu0 0
      %1062 = vmatpush1.bf16.msra.mxu0 0
      %1063 = vmatprep.subr.bf16.mxu0 0
      %1064 = vmatpush1.bf16.msra.mxu0 0
      %1065 = vmatprep.subr.bf16.mxu0 0
      %1066 = vmatpush1.bf16.msra.mxu0 0
      %1067 = vmatprep.subr.bf16.mxu0 0
      %1068 = vmatpush1.bf16.msra.mxu0 0
      %1069 = vmatprep.subr.bf16.mxu0 0
      %1070 = vmatpush1.bf16.msra.mxu0 %v1044
      %1071 = vmatprep.subr.bf16.mxu0 0
      %1072 = vmatpush1.bf16.msra.mxu0 %v1043
      %1073 = vmatprep.subr.bf16.mxu0 0
      %1074 = vmatpush1.bf16.msra.mxu0 %v1042
      %1075 = vmatprep.subr.bf16.mxu0 0
      %1076 = vmatpush1.bf16.msra.mxu0 %v1041
      %1077 = vmatprep.subr.bf16.mxu0 0
      %1078 = vmatpush2.bf16.msra.mxu0 0
      %1079 = vmatprep.subr.bf16.mxu0 0
      %1080 = vmatpush2.bf16.msra.mxu0 0
      %1081 = vmatprep.subr.bf16.mxu0 0
      %1082 = vmatpush2.bf16.msra.mxu0 0
      %1083 = vmatprep.subr.bf16.mxu0 0
      %1084 = vmatpush2.bf16.msra.mxu0 0
      %1085 = vmatprep.subr.bf16.mxu0 0
      %1086 = vmatpush2.bf16.msra.mxu0 0
      %1087 = vmatprep.subr.bf16.mxu0 0
      %1088 = vmatpush2.bf16.msra.mxu0 0
      %1089 = vmatprep.subr.bf16.mxu0 0
      %1090 = vmatpush2.bf16.msra.mxu0 0
      %1091 = vmatprep.subr.bf16.mxu0 0
      %1092 = vmatpush2.bf16.msra.mxu0 0
      %1093 = vmatprep.mubr.bf16.mxu0 0
      %1094 = vmatmul.mubr.bf16.gmra.mxu0 %v1050
      %v1095 = vpop.f32.mrf.mxu0
      %v1096 = vadd.f32 %v1023, %v1095
      %v1097 = vpop.f32.mrf.mxu0
      %v1098 = vpop.f32.mrf.mxu0
      %v1099 = vadd.f32 %v1023, %v1098
      %v1100 = vpop.f32.mrf.mxu0
      %1101 = vmatprep.mubr.bf16.mxu0 0
      %1102 = vmatmul.mubr.bf16.gmra.mxu0 %v1053
      %v1103 = vpop.f32.mrf.mxu0
      %v1104 = vadd.f32 %v1023, %v1103
      %v1105 = vpop.f32.mrf.mxu0
      %v1106 = vpop.f32.mrf.mxu0
      %v1107 = vadd.f32 %v1023, %v1106
      %v1108 = vpop.f32.mrf.mxu0
      %1109 = vmatprep.mubr.bf16.mxu0 0
      %1110 = vmatmul.mubr.bf16.gmra.mxu0 %v1056
      %v1111 = vpop.f32.mrf.mxu0
      %v1112 = vadd.f32 %v1023, %v1111
      %v1113 = vpop.f32.mrf.mxu0
      %v1114 = vpop.f32.mrf.mxu0
      %v1115 = vadd.f32 %v1023, %v1114
      %v1116 = vpop.f32.mrf.mxu0
      %1117 = vmatprep.mubr.bf16.mxu0 0
      %1118 = vmatmul.mubr.bf16.gmra.mxu0 %v1059
      %v1119 = vpop.f32.mrf.mxu0
      %v1120 = vadd.f32 %v1023, %v1119
      %v1121 = vpop.f32.mrf.mxu0
      %v1122 = vpop.f32.mrf.mxu0
      %v1123 = vadd.f32 %v1023, %v1122
      %v1124 = vpop.f32.mrf.mxu0
      %1125 = vdwg.mxu0
      %v1126 = vpack.c.bf16 %v1099, %v1096
      %v1127 = vpack.c.bf16 %v1107, %v1104
      %v1128 = vpack.c.bf16 %v1115, %v1112
      %v1129 = vpack.c.bf16 %v1123, %v1120
      %v1130 = vld [vmem:[%s7] sm:$0xff]
      %v1131 = vld [vmem:[%s7 + $0x8] sm:$0xff]
      %v1132 = vld [vmem:[%s7 + $0x10] sm:$0xff]
      %v1133 = vld [vmem:[%s7 + $0x18] sm:$0xf]
      %v1134 = vld [vmem:[%s7 + $0x1c] sm:$0xff]
      %v1135 = vld [vmem:[%s7 + $0x24] sm:$0xff]
      %v1136 = vld [vmem:[%s7 + $0x2c] sm:$0xff]
      %v1137 = vld [vmem:[%s7 + $0x34] sm:$0xf]
      %v1138 = vld [vmem:[%s8] sm:$0xff]
      %v1140 = vlaneseq
      %v1141 = vshrl.u32 %v1140, 7
      %v1142 = vsub.s32 0, %v1141
      %v1143 = vrot.slane %v1138, %v1142
      %v1144 = vlaneseq
      %v1145 = vshrl.u32 %v1144, 7
      %v1146 = vsub.s32 1, %v1145
      %v1147 = vrot.slane %v1138, %v1146
      %v1148 = vlaneseq
      %v1149 = vshrl.u32 %v1148, 7
      %v1150 = vsub.s32 2, %v1149
      %v1151 = vrot.slane %v1138, %v1150
      %v1152 = vlaneseq
      %v1153 = vshrl.u32 %v1152, 7
      %v1154 = vsub.s32 3, %v1153
      %v1155 = vrot.slane %v1138, %v1154
      %v1156 = vlaneseq
      %v1157 = vshrl.u32 %v1156, 7
      %v1158 = vsub.s32 4, %v1157
      %v1159 = vrot.slane %v1138, %v1158
      %v1160 = vlaneseq
      %v1161 = vshrl.u32 %v1160, 7
      %v1162 = vsub.s32 5, %v1161
      %v1163 = vrot.slane %v1138, %v1162
      %v1164 = vlaneseq
      %v1165 = vshrl.u32 %v1164, 7
      %v1166 = vsub.s32 6, %v1165
      %v1167 = vrot.slane %v1138, %v1166
      %v1183 = vunpack.c.l.b16 %v1130
      %v1184 = vunpack.c.h.b16 %v1130
      %v1185 = vunpack.c.l.b16 %v1131
      %v1186 = vunpack.c.h.b16 %v1131
      %v1187 = vunpack.c.l.b16 %v1132
      %v1188 = vunpack.c.h.b16 %v1132
      %v1189 = vunpack.c.l.b16 %v1133
      %v1190 = vunpack.c.l.b16 %v1134
      %v1191 = vunpack.c.h.b16 %v1134
      %v1192 = vunpack.c.l.b16 %v1135
      %v1193 = vunpack.c.h.b16 %v1135
      %v1194 = vunpack.c.l.b16 %v1136
      %v1195 = vunpack.c.h.b16 %v1136
      %v1196 = vunpack.c.l.b16 %v1137
      %v1197 = vpack.c.b16 %v1190, %v1183
      %v1198 = vpack.c.b16 %v1191, %v1184
      %v1199 = vpack.c.b16 %v1192, %v1185
      %v1200 = vpack.c.b16 %v1193, %v1186
      %v1201 = vpack.c.b16 %v1194, %v1187
      %v1202 = vpack.c.b16 %v1195, %v1188
      %v1203 = vpack.c.b16 %v1196, %v1189
      %vm1211 = vcmask 130048
      %v1213 = vsel %vm1211, %v1126, 0
      %v1216 = vsel %vm1211, %v1127, 0
      %v1219 = vsel %vm1211, %v1128, 0
      %v1222 = vsel %vm1211, %v1129, 0
      %1224 = vmatprep.subr.bf16.mxu0 0
      %1225 = vmatpush1.bf16.msra.mxu0 0
      %1226 = vmatprep.subr.bf16.mxu0 0
      %1227 = vmatpush1.bf16.msra.mxu0 0
      %1228 = vmatprep.subr.bf16.mxu0 0
      %1229 = vmatpush1.bf16.msra.mxu0 0
      %1230 = vmatprep.subr.bf16.mxu0 0
      %1231 = vmatpush1.bf16.msra.mxu0 0
      %1232 = vmatprep.subr.bf16.mxu0 0
      %1233 = vmatpush1.bf16.msra.mxu0 0
      %1234 = vmatprep.subr.bf16.mxu0 0
      %1235 = vmatpush1.bf16.msra.mxu0 0
      %1236 = vmatprep.subr.bf16.mxu0 0
      %1237 = vmatpush1.bf16.msra.mxu0 0
      %1238 = vmatprep.subr.bf16.mxu0 %v1198
      %1239 = vmatpush1.bf16.msra.mxu0 %v1197
      %1240 = vmatprep.subr.bf16.mxu0 0
      %1241 = vmatpush2.bf16.msra.mxu0 0
      %1242 = vmatprep.subr.bf16.mxu0 0
      %1243 = vmatpush2.bf16.msra.mxu0 0
      %1244 = vmatprep.subr.bf16.mxu0 0
      %1245 = vmatpush2.bf16.msra.mxu0 0
      %1246 = vmatprep.subr.bf16.mxu0 0
      %1247 = vmatpush2.bf16.msra.mxu0 0
      %1248 = vmatprep.subr.bf16.mxu0 0
      %1249 = vmatpush2.bf16.msra.mxu0 0
      %1250 = vmatprep.subr.bf16.mxu0 0
      %1251 = vmatpush2.bf16.msra.mxu0 0
      %1252 = vmatprep.subr.bf16.mxu0 0
      %1253 = vmatpush2.bf16.msra.mxu0 0
      %1254 = vmatprep.subr.bf16.mxu0 0
      %1255 = vmatpush2.bf16.msra.mxu0 0
      %1256 = vmatprep.mubr.bf16.mxu0 0
      %1257 = vmatmul.mubr.bf16.gmra.mxu0 %v1213
      %v1258 = vpop.f32.mrf.mxu0
      %v1259 = vadd.f32 %v1143, %v1258
      %v1260 = vpop.f32.mrf.mxu0
      %v1261 = vadd.f32 %v1147, %v1260
      %v1262 = vpop.f32.mrf.mxu0
      %v1263 = vadd.f32 %v1143, %v1262
      %v1264 = vpop.f32.mrf.mxu0
      %v1265 = vadd.f32 %v1147, %v1264
      %1266 = vmatprep.mubr.bf16.mxu0 0
      %1267 = vmatmul.mubr.bf16.gmra.mxu0 %v1216
      %v1268 = vpop.f32.mrf.mxu0
      %v1269 = vadd.f32 %v1143, %v1268
      %v1270 = vpop.f32.mrf.mxu0
      %v1271 = vadd.f32 %v1147, %v1270
      %v1272 = vpop.f32.mrf.mxu0
      %v1273 = vadd.f32 %v1143, %v1272
      %v1274 = vpop.f32.mrf.mxu0
      %v1275 = vadd.f32 %v1147, %v1274
      %1276 = vmatprep.mubr.bf16.mxu0 0
      %1277 = vmatmul.mubr.bf16.gmra.mxu0 %v1219
      %v1278 = vpop.f32.mrf.mxu0
      %v1279 = vadd.f32 %v1143, %v1278
      %v1280 = vpop.f32.mrf.mxu0
      %v1281 = vadd.f32 %v1147, %v1280
      %v1282 = vpop.f32.mrf.mxu0
      %v1283 = vadd.f32 %v1143, %v1282
      %v1284 = vpop.f32.mrf.mxu0
      %v1285 = vadd.f32 %v1147, %v1284
      %1286 = vmatprep.mubr.bf16.mxu0 0
      %1287 = vmatmul.mubr.bf16.gmra.mxu0 %v1222
      %v1288 = vpop.f32.mrf.mxu0
      %v1289 = vadd.f32 %v1143, %v1288
      %v1290 = vpop.f32.mrf.mxu0
      %v1291 = vadd.f32 %v1147, %v1290
      %v1292 = vpop.f32.mrf.mxu0
      %v1293 = vadd.f32 %v1143, %v1292
      %v1294 = vpop.f32.mrf.mxu0
      %v1295 = vadd.f32 %v1147, %v1294
      %1296 = vdwg.mxu0
      %1297 = vmatprep.subr.bf16.mxu0 0
      %1298 = vmatpush1.bf16.msra.mxu0 0
      %1299 = vmatprep.subr.bf16.mxu0 0
      %1300 = vmatpush1.bf16.msra.mxu0 0
      %1301 = vmatprep.subr.bf16.mxu0 0
      %1302 = vmatpush1.bf16.msra.mxu0 0
      %1303 = vmatprep.subr.bf16.mxu0 0
      %1304 = vmatpush1.bf16.msra.mxu0 0
      %1305 = vmatprep.subr.bf16.mxu0 0
      %1306 = vmatpush1.bf16.msra.mxu0 0
      %1307 = vmatprep.subr.bf16.mxu0 0
      %1308 = vmatpush1.bf16.msra.mxu0 0
      %1309 = vmatprep.subr.bf16.mxu0 0
      %1310 = vmatpush1.bf16.msra.mxu0 0
      %1311 = vmatprep.subr.bf16.mxu0 %v1200
      %1312 = vmatpush1.bf16.msra.mxu0 %v1199
      %1313 = vmatprep.subr.bf16.mxu0 0
      %1314 = vmatpush2.bf16.msra.mxu0 0
      %1315 = vmatprep.subr.bf16.mxu0 0
      %1316 = vmatpush2.bf16.msra.mxu0 0
      %1317 = vmatprep.subr.bf16.mxu0 0
      %1318 = vmatpush2.bf16.msra.mxu0 0
      %1319 = vmatprep.subr.bf16.mxu0 0
      %1320 = vmatpush2.bf16.msra.mxu0 0
      %1321 = vmatprep.subr.bf16.mxu0 0
      %1322 = vmatpush2.bf16.msra.mxu0 0
      %1323 = vmatprep.subr.bf16.mxu0 0
      %1324 = vmatpush2.bf16.msra.mxu0 0
      %1325 = vmatprep.subr.bf16.mxu0 0
      %1326 = vmatpush2.bf16.msra.mxu0 0
      %1327 = vmatprep.subr.bf16.mxu0 0
      %1328 = vmatpush2.bf16.msra.mxu0 0
      %1329 = vmatprep.mubr.bf16.mxu0 0
      %1330 = vmatmul.mubr.bf16.gmra.mxu0 %v1213
      %v1331 = vpop.f32.mrf.mxu0
      %v1332 = vadd.f32 %v1151, %v1331
      %v1333 = vpop.f32.mrf.mxu0
      %v1334 = vadd.f32 %v1155, %v1333
      %v1335 = vpop.f32.mrf.mxu0
      %v1336 = vadd.f32 %v1151, %v1335
      %v1337 = vpop.f32.mrf.mxu0
      %v1338 = vadd.f32 %v1155, %v1337
      %1339 = vmatprep.mubr.bf16.mxu0 0
      %1340 = vmatmul.mubr.bf16.gmra.mxu0 %v1216
      %v1341 = vpop.f32.mrf.mxu0
      %v1342 = vadd.f32 %v1151, %v1341
      %v1343 = vpop.f32.mrf.mxu0
      %v1344 = vadd.f32 %v1155, %v1343
      %v1345 = vpop.f32.mrf.mxu0
      %v1346 = vadd.f32 %v1151, %v1345
      %v1347 = vpop.f32.mrf.mxu0
      %v1348 = vadd.f32 %v1155, %v1347
      %1349 = vmatprep.mubr.bf16.mxu0 0
      %1350 = vmatmul.mubr.bf16.gmra.mxu0 %v1219
      %v1351 = vpop.f32.mrf.mxu0
      %v1352 = vadd.f32 %v1151, %v1351
      %v1353 = vpop.f32.mrf.mxu0
      %v1354 = vadd.f32 %v1155, %v1353
      %v1355 = vpop.f32.mrf.mxu0
      %v1356 = vadd.f32 %v1151, %v1355
      %v1357 = vpop.f32.mrf.mxu0
      %v1358 = vadd.f32 %v1155, %v1357
      %1359 = vmatprep.mubr.bf16.mxu0 0
      %1360 = vmatmul.mubr.bf16.gmra.mxu0 %v1222
      %v1361 = vpop.f32.mrf.mxu0
      %v1362 = vadd.f32 %v1151, %v1361
      %v1363 = vpop.f32.mrf.mxu0
      %v1364 = vadd.f32 %v1155, %v1363
      %v1365 = vpop.f32.mrf.mxu0
      %v1366 = vadd.f32 %v1151, %v1365
      %v1367 = vpop.f32.mrf.mxu0
      %v1368 = vadd.f32 %v1155, %v1367
      %1369 = vdwg.mxu0
      %1370 = vmatprep.subr.bf16.mxu0 0
      %1371 = vmatpush1.bf16.msra.mxu0 0
      %1372 = vmatprep.subr.bf16.mxu0 0
      %1373 = vmatpush1.bf16.msra.mxu0 0
      %1374 = vmatprep.subr.bf16.mxu0 0
      %1375 = vmatpush1.bf16.msra.mxu0 0
      %1376 = vmatprep.subr.bf16.mxu0 0
      %1377 = vmatpush1.bf16.msra.mxu0 0
      %1378 = vmatprep.subr.bf16.mxu0 0
      %1379 = vmatpush1.bf16.msra.mxu0 0
      %1380 = vmatprep.subr.bf16.mxu0 0
      %1381 = vmatpush1.bf16.msra.mxu0 0
      %1382 = vmatprep.subr.bf16.mxu0 0
      %1383 = vmatpush1.bf16.msra.mxu0 0
      %1384 = vmatprep.subr.bf16.mxu0 %v1202
      %1385 = vmatpush1.bf16.msra.mxu0 %v1201
      %1386 = vmatprep.subr.bf16.mxu0 0
      %1387 = vmatpush2.bf16.msra.mxu0 0
      %1388 = vmatprep.subr.bf16.mxu0 0
      %1389 = vmatpush2.bf16.msra.mxu0 0
      %1390 = vmatprep.subr.bf16.mxu0 0
      %1391 = vmatpush2.bf16.msra.mxu0 0
      %1392 = vmatprep.subr.bf16.mxu0 0
      %1393 = vmatpush2.bf16.msra.mxu0 0
      %1394 = vmatprep.subr.bf16.mxu0 0
      %1395 = vmatpush2.bf16.msra.mxu0 0
      %1396 = vmatprep.subr.bf16.mxu0 0
      %1397 = vmatpush2.bf16.msra.mxu0 0
      %1398 = vmatprep.subr.bf16.mxu0 0
      %1399 = vmatpush2.bf16.msra.mxu0 0
      %1400 = vmatprep.subr.bf16.mxu0 0
      %1401 = vmatpush2.bf16.msra.mxu0 0
      %1402 = vmatprep.mubr.bf16.mxu0 0
      %1403 = vmatmul.mubr.bf16.gmra.mxu0 %v1213
      %v1404 = vpop.f32.mrf.mxu0
      %v1405 = vadd.f32 %v1159, %v1404
      %v1406 = vpop.f32.mrf.mxu0
      %v1407 = vadd.f32 %v1163, %v1406
      %v1408 = vpop.f32.mrf.mxu0
      %v1409 = vadd.f32 %v1159, %v1408
      %v1410 = vpop.f32.mrf.mxu0
      %v1411 = vadd.f32 %v1163, %v1410
      %1412 = vmatprep.mubr.bf16.mxu0 0
      %1413 = vmatmul.mubr.bf16.gmra.mxu0 %v1216
      %v1414 = vpop.f32.mrf.mxu0
      %v1415 = vadd.f32 %v1159, %v1414
      %v1416 = vpop.f32.mrf.mxu0
      %v1417 = vadd.f32 %v1163, %v1416
      %v1418 = vpop.f32.mrf.mxu0
      %v1419 = vadd.f32 %v1159, %v1418
      %v1420 = vpop.f32.mrf.mxu0
      %v1421 = vadd.f32 %v1163, %v1420
      %1422 = vmatprep.mubr.bf16.mxu0 0
      %1423 = vmatmul.mubr.bf16.gmra.mxu0 %v1219
      %v1424 = vpop.f32.mrf.mxu0
      %v1425 = vadd.f32 %v1159, %v1424
      %v1426 = vpop.f32.mrf.mxu0
      %v1427 = vadd.f32 %v1163, %v1426
      %v1428 = vpop.f32.mrf.mxu0
      %v1429 = vadd.f32 %v1159, %v1428
      %v1430 = vpop.f32.mrf.mxu0
      %v1431 = vadd.f32 %v1163, %v1430
      %1432 = vmatprep.mubr.bf16.mxu0 0
      %1433 = vmatmul.mubr.bf16.gmra.mxu0 %v1222
      %v1434 = vpop.f32.mrf.mxu0
      %v1435 = vadd.f32 %v1159, %v1434
      %v1436 = vpop.f32.mrf.mxu0
      %v1437 = vadd.f32 %v1163, %v1436
      %v1438 = vpop.f32.mrf.mxu0
      %v1439 = vadd.f32 %v1159, %v1438
      %v1440 = vpop.f32.mrf.mxu0
      %v1441 = vadd.f32 %v1163, %v1440
      %1442 = vdwg.mxu0
      %1443 = vmatprep.subr.bf16.mxu0 0
      %1444 = vmatpush1.bf16.msra.mxu0 0
      %1445 = vmatprep.subr.bf16.mxu0 0
      %1446 = vmatpush1.bf16.msra.mxu0 0
      %1447 = vmatprep.subr.bf16.mxu0 0
      %1448 = vmatpush1.bf16.msra.mxu0 0
      %1449 = vmatprep.subr.bf16.mxu0 0
      %1450 = vmatpush1.bf16.msra.mxu0 0
      %1451 = vmatprep.subr.bf16.mxu0 0
      %1452 = vmatpush1.bf16.msra.mxu0 0
      %1453 = vmatprep.subr.bf16.mxu0 0
      %1454 = vmatpush1.bf16.msra.mxu0 0
      %1455 = vmatprep.subr.bf16.mxu0 0
      %1456 = vmatpush1.bf16.msra.mxu0 0
      %1457 = vmatprep.subr.bf16.mxu0 0
      %1458 = vmatpush1.bf16.msra.mxu0 %v1203
      %1459 = vmatprep.subr.bf16.mxu0 0
      %1460 = vmatpush2.bf16.msra.mxu0 0
      %1461 = vmatprep.subr.bf16.mxu0 0
      %1462 = vmatpush2.bf16.msra.mxu0 0
      %1463 = vmatprep.subr.bf16.mxu0 0
      %1464 = vmatpush2.bf16.msra.mxu0 0
      %1465 = vmatprep.subr.bf16.mxu0 0
      %1466 = vmatpush2.bf16.msra.mxu0 0
      %1467 = vmatprep.subr.bf16.mxu0 0
      %1468 = vmatpush2.bf16.msra.mxu0 0
      %1469 = vmatprep.subr.bf16.mxu0 0
      %1470 = vmatpush2.bf16.msra.mxu0 0
      %1471 = vmatprep.subr.bf16.mxu0 0
      %1472 = vmatpush2.bf16.msra.mxu0 0
      %1473 = vmatprep.subr.bf16.mxu0 0
      %1474 = vmatpush2.bf16.msra.mxu0 0
      %1475 = vmatprep.mubr.bf16.mxu0 0
      %1476 = vmatmul.mubr.bf16.gmra.mxu0 %v1213
      %v1477 = vpop.f32.mrf.mxu0
      %v1478 = vadd.f32 %v1167, %v1477
      %v1479 = vpop.f32.mrf.mxu0
      %v1480 = vpop.f32.mrf.mxu0
      %v1481 = vadd.f32 %v1167, %v1480
      %v1482 = vpop.f32.mrf.mxu0
      %1483 = vmatprep.mubr.bf16.mxu0 0
      %1484 = vmatmul.mubr.bf16.gmra.mxu0 %v1216
      %v1485 = vpop.f32.mrf.mxu0
      %v1486 = vadd.f32 %v1167, %v1485
      %v1487 = vpop.f32.mrf.mxu0
      %v1488 = vpop.f32.mrf.mxu0
      %v1489 = vadd.f32 %v1167, %v1488
      %v1490 = vpop.f32.mrf.mxu0
      %1491 = vmatprep.mubr.bf16.mxu0 0
      %1492 = vmatmul.mubr.bf16.gmra.mxu0 %v1219
      %v1493 = vpop.f32.mrf.mxu0
      %v1494 = vadd.f32 %v1167, %v1493
      %v1495 = vpop.f32.mrf.mxu0
      %v1496 = vpop.f32.mrf.mxu0
      %v1497 = vadd.f32 %v1167, %v1496
      %v1498 = vpop.f32.mrf.mxu0
      %1499 = vmatprep.mubr.bf16.mxu0 0
      %1500 = vmatmul.mubr.bf16.gmra.mxu0 %v1222
      %v1501 = vpop.f32.mrf.mxu0
      %v1502 = vadd.f32 %v1167, %v1501
      %v1503 = vpop.f32.mrf.mxu0
      %v1504 = vpop.f32.mrf.mxu0
      %v1505 = vadd.f32 %v1167, %v1504
      %v1506 = vpop.f32.mrf.mxu0
      %1507 = vdwg.mxu0
      %vm1516 = vcmask 1042432
      %v1517 = vrot.slane %v976, 5
      %v1518 = vrot.slane %v979, 5
      %v1519 = vsel %vm1516, %v1517, %v1518
      %v1520 = vrot.slane %v984, 5
      %v1521 = vsel %vm1516, %v1518, %v1520
      %v1522 = vrot.slane %v987, 5
      %v1523 = vsel %vm1516, %v1520, %v1522
      %v1524 = vrot.slane %v992, 5
      %v1525 = vrot.slane %v995, 5
      %v1526 = vsel %vm1516, %v1524, %v1525
      %v1527 = vrot.slane %v1000, 5
      %v1528 = vsel %vm1516, %v1525, %v1527
      %v1529 = vrot.slane %v1003, 5
      %v1530 = vsel %vm1516, %v1527, %v1529
      %v1541 = vsel %vm1516, 0.0, %v1517
      %v1542 = vsel %vm1516, 0.0, %v1524
      %v1543 = vsel %vm1516, %v1522, 0.0
      %v1544 = vsel %vm1516, %v1529, 0.0
      %v1545 = vmul.f32 %v1259, %v1541
      %v1546 = vmul.f32 %v1263, %v1519
      %v1547 = vmul.f32 %v1269, %v1521
      %v1548 = vmul.f32 %v1273, %v1523
      %v1549 = vmul.f32 %v1279, %v1542
      %v1550 = vmul.f32 %v1283, %v1526
      %v1551 = vmul.f32 %v1289, %v1528
      %v1552 = vmul.f32 %v1293, %v1530
      %v1553 = vadd.f32 %v1545, 0.0
      %v1554 = vadd.f32 %v1546, 0.0
      %v1555 = vadd.f32 %v1547, 0.0
      %v1556 = vadd.f32 %v1548, 0.0
      %v1557 = vadd.f32 %v1549, 0.0
      %v1558 = vadd.f32 %v1550, 0.0
      %v1559 = vadd.f32 %v1551, 0.0
      %v1560 = vadd.f32 %v1552, 0.0
      %vm1565 = vcmask 1046528
      %v1566 = vrot.slane %v1541, 1
      %v1567 = vrot.slane %v1519, 1
      %v1568 = vsel %vm1565, %v1566, %v1567
      %v1569 = vrot.slane %v1521, 1
      %v1570 = vsel %vm1565, %v1567, %v1569
      %v1571 = vrot.slane %v1523, 1
      %v1572 = vsel %vm1565, %v1569, %v1571
      %v1573 = vrot.slane %v1543, 1
      %v1574 = vsel %vm1565, %v1571, %v1573
      %v1575 = vrot.slane %v1542, 1
      %v1576 = vrot.slane %v1526, 1
      %v1577 = vsel %vm1565, %v1575, %v1576
      %v1578 = vrot.slane %v1528, 1
      %v1579 = vsel %vm1565, %v1576, %v1578
      %v1580 = vrot.slane %v1530, 1
      %v1581 = vsel %vm1565, %v1578, %v1580
      %v1582 = vrot.slane %v1544, 1
      %v1583 = vsel %vm1565, %v1580, %v1582
      %v1592 = vmul.f32 %v1261, %v1568
      %v1593 = vmul.f32 %v1265, %v1570
      %v1594 = vmul.f32 %v1271, %v1572
      %v1595 = vmul.f32 %v1275, %v1574
      %v1596 = vmul.f32 %v1281, %v1577
      %v1597 = vmul.f32 %v1285, %v1579
      %v1598 = vmul.f32 %v1291, %v1581
      %v1599 = vmul.f32 %v1295, %v1583
      %v1600 = vadd.f32 %v1553, %v1592
      %v1601 = vadd.f32 %v1554, %v1593
      %v1602 = vadd.f32 %v1555, %v1594
      %v1603 = vadd.f32 %v1556, %v1595
      %v1604 = vadd.f32 %v1557, %v1596
      %v1605 = vadd.f32 %v1558, %v1597
      %v1606 = vadd.f32 %v1559, %v1598
      %v1607 = vadd.f32 %v1560, %v1599
      %vm1608 = vcmask 1045504
      %v1609 = vrot.slane %v1541, 2
      %v1610 = vrot.slane %v1519, 2
      %v1611 = vsel %vm1608, %v1609, %v1610
      %v1612 = vrot.slane %v1521, 2
      %v1613 = vsel %vm1608, %v1610, %v1612
      %v1614 = vrot.slane %v1523, 2
      %v1615 = vsel %vm1608, %v1612, %v1614
      %v1616 = vrot.slane %v1543, 2
      %v1617 = vsel %vm1608, %v1614, %v1616
      %v1618 = vrot.slane %v1542, 2
      %v1619 = vrot.slane %v1526, 2
      %v1620 = vsel %vm1608, %v1618, %v1619
      %v1621 = vrot.slane %v1528, 2
      %v1622 = vsel %vm1608, %v1619, %v1621
      %v1623 = vrot.slane %v1530, 2
      %v1624 = vsel %vm1608, %v1621, %v1623
      %v1625 = vrot.slane %v1544, 2
      %v1626 = vsel %vm1608, %v1623, %v1625
      %v1635 = vmul.f32 %v1332, %v1611
      %v1636 = vmul.f32 %v1336, %v1613
      %v1637 = vmul.f32 %v1342, %v1615
      %v1638 = vmul.f32 %v1346, %v1617
      %v1639 = vmul.f32 %v1352, %v1620
      %v1640 = vmul.f32 %v1356, %v1622
      %v1641 = vmul.f32 %v1362, %v1624
      %v1642 = vmul.f32 %v1366, %v1626
      %v1643 = vadd.f32 %v1600, %v1635
      %v1644 = vadd.f32 %v1601, %v1636
      %v1645 = vadd.f32 %v1602, %v1637
      %v1646 = vadd.f32 %v1603, %v1638
      %v1647 = vadd.f32 %v1604, %v1639
      %v1648 = vadd.f32 %v1605, %v1640
      %v1649 = vadd.f32 %v1606, %v1641
      %v1650 = vadd.f32 %v1607, %v1642
      %vm1651 = vcmask 1044480
      %v1652 = vrot.slane %v1541, 3
      %v1653 = vrot.slane %v1519, 3
      %v1654 = vsel %vm1651, %v1652, %v1653
      %v1655 = vrot.slane %v1521, 3
      %v1656 = vsel %vm1651, %v1653, %v1655
      %v1657 = vrot.slane %v1523, 3
      %v1658 = vsel %vm1651, %v1655, %v1657
      %v1659 = vrot.slane %v1543, 3
      %v1660 = vsel %vm1651, %v1657, %v1659
      %v1661 = vrot.slane %v1542, 3
      %v1662 = vrot.slane %v1526, 3
      %v1663 = vsel %vm1651, %v1661, %v1662
      %v1664 = vrot.slane %v1528, 3
      %v1665 = vsel %vm1651, %v1662, %v1664
      %v1666 = vrot.slane %v1530, 3
      %v1667 = vsel %vm1651, %v1664, %v1666
      %v1668 = vrot.slane %v1544, 3
      %v1669 = vsel %vm1651, %v1666, %v1668
      %v1678 = vmul.f32 %v1334, %v1654
      %v1679 = vmul.f32 %v1338, %v1656
      %v1680 = vmul.f32 %v1344, %v1658
      %v1681 = vmul.f32 %v1348, %v1660
      %v1682 = vmul.f32 %v1354, %v1663
      %v1683 = vmul.f32 %v1358, %v1665
      %v1684 = vmul.f32 %v1364, %v1667
      %v1685 = vmul.f32 %v1368, %v1669
      %v1686 = vadd.f32 %v1643, %v1678
      %v1687 = vadd.f32 %v1644, %v1679
      %v1688 = vadd.f32 %v1645, %v1680
      %v1689 = vadd.f32 %v1646, %v1681
      %v1690 = vadd.f32 %v1647, %v1682
      %v1691 = vadd.f32 %v1648, %v1683
      %v1692 = vadd.f32 %v1649, %v1684
      %v1693 = vadd.f32 %v1650, %v1685
      %vm1694 = vcmask 1043456
      %v1695 = vrot.slane %v1541, 4
      %v1696 = vrot.slane %v1519, 4
      %v1697 = vsel %vm1694, %v1695, %v1696
      %v1698 = vrot.slane %v1521, 4
      %v1699 = vsel %vm1694, %v1696, %v1698
      %v1700 = vrot.slane %v1523, 4
      %v1701 = vsel %vm1694, %v1698, %v1700
      %v1702 = vrot.slane %v1543, 4
      %v1703 = vsel %vm1694, %v1700, %v1702
      %v1704 = vrot.slane %v1542, 4
      %v1705 = vrot.slane %v1526, 4
      %v1706 = vsel %vm1694, %v1704, %v1705
      %v1707 = vrot.slane %v1528, 4
      %v1708 = vsel %vm1694, %v1705, %v1707
      %v1709 = vrot.slane %v1530, 4
      %v1710 = vsel %vm1694, %v1707, %v1709
      %v1711 = vrot.slane %v1544, 4
      %v1712 = vsel %vm1694, %v1709, %v1711
      %v1721 = vmul.f32 %v1405, %v1697
      %v1722 = vmul.f32 %v1409, %v1699
      %v1723 = vmul.f32 %v1415, %v1701
      %v1724 = vmul.f32 %v1419, %v1703
      %v1725 = vmul.f32 %v1425, %v1706
      %v1726 = vmul.f32 %v1429, %v1708
      %v1727 = vmul.f32 %v1435, %v1710
      %v1728 = vmul.f32 %v1439, %v1712
      %v1729 = vadd.f32 %v1686, %v1721
      %v1730 = vadd.f32 %v1687, %v1722
      %v1731 = vadd.f32 %v1688, %v1723
      %v1732 = vadd.f32 %v1689, %v1724
      %v1733 = vadd.f32 %v1690, %v1725
      %v1734 = vadd.f32 %v1691, %v1726
      %v1735 = vadd.f32 %v1692, %v1727
      %v1736 = vadd.f32 %v1693, %v1728
      %v1737 = vrot.slane %v1541, 5
      %v1738 = vrot.slane %v1519, 5
      %v1739 = vsel %vm1516, %v1737, %v1738
      %v1740 = vrot.slane %v1521, 5
      %v1741 = vsel %vm1516, %v1738, %v1740
      %v1742 = vrot.slane %v1523, 5
      %v1743 = vsel %vm1516, %v1740, %v1742
      %v1744 = vrot.slane %v1543, 5
      %v1745 = vsel %vm1516, %v1742, %v1744
      %v1746 = vrot.slane %v1542, 5
      %v1747 = vrot.slane %v1526, 5
      %v1748 = vsel %vm1516, %v1746, %v1747
      %v1749 = vrot.slane %v1528, 5
      %v1750 = vsel %vm1516, %v1747, %v1749
      %v1751 = vrot.slane %v1530, 5
      %v1752 = vsel %vm1516, %v1749, %v1751
      %v1753 = vrot.slane %v1544, 5
      %v1754 = vsel %vm1516, %v1751, %v1753
      %v1763 = vmul.f32 %v1407, %v1739
      %v1764 = vmul.f32 %v1411, %v1741
      %v1765 = vmul.f32 %v1417, %v1743
      %v1766 = vmul.f32 %v1421, %v1745
      %v1767 = vmul.f32 %v1427, %v1748
      %v1768 = vmul.f32 %v1431, %v1750
      %v1769 = vmul.f32 %v1437, %v1752
      %v1770 = vmul.f32 %v1441, %v1754
      %v1771 = vadd.f32 %v1729, %v1763
      %v1772 = vadd.f32 %v1730, %v1764
      %v1773 = vadd.f32 %v1731, %v1765
      %v1774 = vadd.f32 %v1732, %v1766
      %v1775 = vadd.f32 %v1733, %v1767
      %v1776 = vadd.f32 %v1734, %v1768
      %v1777 = vadd.f32 %v1735, %v1769
      %v1778 = vadd.f32 %v1736, %v1770
      %vm1779 = vcmask 1041408
      %v1780 = vrot.slane %v1541, 6
      %v1781 = vrot.slane %v1519, 6
      %v1782 = vsel %vm1779, %v1780, %v1781
      %v1783 = vrot.slane %v1521, 6
      %v1784 = vsel %vm1779, %v1781, %v1783
      %v1785 = vrot.slane %v1523, 6
      %v1786 = vsel %vm1779, %v1783, %v1785
      %v1787 = vrot.slane %v1543, 6
      %v1788 = vsel %vm1779, %v1785, %v1787
      %v1789 = vrot.slane %v1542, 6
      %v1790 = vrot.slane %v1526, 6
      %v1791 = vsel %vm1779, %v1789, %v1790
      %v1792 = vrot.slane %v1528, 6
      %v1793 = vsel %vm1779, %v1790, %v1792
      %v1794 = vrot.slane %v1530, 6
      %v1795 = vsel %vm1779, %v1792, %v1794
      %v1796 = vrot.slane %v1544, 6
      %v1797 = vsel %vm1779, %v1794, %v1796
      %v1806 = vmul.f32 %v1478, %v1782
      %v1807 = vmul.f32 %v1481, %v1784
      %v1808 = vmul.f32 %v1486, %v1786
      %v1809 = vmul.f32 %v1489, %v1788
      %v1810 = vmul.f32 %v1494, %v1791
      %v1811 = vmul.f32 %v1497, %v1793
      %v1812 = vmul.f32 %v1502, %v1795
      %v1813 = vmul.f32 %v1505, %v1797
      %v1814 = vadd.f32 %v1771, %v1806
      %v1815 = vadd.f32 %v1772, %v1807
      %v1816 = vadd.f32 %v1773, %v1808
      %v1817 = vadd.f32 %v1774, %v1809
      %v1818 = vadd.f32 %v1775, %v1810
      %v1819 = vadd.f32 %v1776, %v1811
      %v1820 = vadd.f32 %v1777, %v1812
      %v1821 = vadd.f32 %v1778, %v1813
      %v1822 = vld [vmem:[%s9] sm:$0x1]
      %v1824 = vlaneseq
      %v1825 = vshrl.u32 %v1824, 7
      %v1826 = vsub.s32 0, %v1825
      %v1827 = vrot.slane %v1822, %v1826
      %v1829 = vmul.f32 %v1814, %v1827
      %v1830 = vmul.f32 %v1815, %v1827
      %v1831 = vmul.f32 %v1816, %v1827
      %v1832 = vmul.f32 %v1817, %v1827
      %v1833 = vmul.f32 %v1818, %v1827
      %v1834 = vmul.f32 %v1819, %v1827
      %v1835 = vmul.f32 %v1820, %v1827
      %v1836 = vmul.f32 %v1821, %v1827
      %v1837 = vld [vmem:[%s10] sm:$0x1]
      %v1839 = vlaneseq
      %v1840 = vshrl.u32 %v1839, 7
      %v1841 = vsub.s32 0, %v1840
      %v1842 = vrot.slane %v1837, %v1841
      %v1844 = vadd.f32 %v1829, %v1842
      %v1845 = vadd.f32 %v1830, %v1842
      %v1846 = vadd.f32 %v1831, %v1842
      %v1847 = vadd.f32 %v1832, %v1842
      %v1848 = vadd.f32 %v1833, %v1842
      %v1849 = vadd.f32 %v1834, %v1842
      %v1850 = vadd.f32 %v1835, %v1842
      %v1851 = vadd.f32 %v1836, %v1842
      %v1852 = vadd.f32 %v1844, 3.0
      %v1853 = vadd.f32 %v1845, 3.0
      %v1854 = vadd.f32 %v1846, 3.0
      %v1855 = vadd.f32 %v1847, 3.0
      %v1856 = vadd.f32 %v1848, 3.0
      %v1857 = vadd.f32 %v1849, 3.0
      %v1858 = vadd.f32 %v1850, 3.0
      %v1859 = vadd.f32 %v1851, 3.0
      %v1860 = vmax.f32 %v1852, 0.0
      %v1861 = vmax.f32 %v1853, 0.0
      %v1862 = vmax.f32 %v1854, 0.0
      %v1863 = vmax.f32 %v1855, 0.0
      %v1864 = vmax.f32 %v1856, 0.0
      %v1865 = vmax.f32 %v1857, 0.0
      %v1866 = vmax.f32 %v1858, 0.0
      %v1867 = vmax.f32 %v1859, 0.0
      %v1868 = vmin.f32 %v1860, 6.0
      %v1869 = vmin.f32 %v1861, 6.0
      %v1870 = vmin.f32 %v1862, 6.0
      %v1871 = vmin.f32 %v1863, 6.0
      %v1872 = vmin.f32 %v1864, 6.0
      %v1873 = vmin.f32 %v1865, 6.0
      %v1874 = vmin.f32 %v1866, 6.0
      %v1875 = vmin.f32 %v1867, 6.0
      %v1876 = vmul.f32 %v1868, 0.16666667
      %v1877 = vmul.f32 %v1869, 0.16666667
      %v1878 = vmul.f32 %v1870, 0.16666667
      %v1879 = vmul.f32 %v1871, 0.16666667
      %v1880 = vmul.f32 %v1872, 0.16666667
      %v1881 = vmul.f32 %v1873, 0.16666667
      %v1882 = vmul.f32 %v1874, 0.16666667
      %v1883 = vmul.f32 %v1875, 0.16666667
      %v1884 = vmul.f32 %v1844, %v1876
      %v1885 = vmul.f32 %v1845, %v1877
      %v1886 = vmul.f32 %v1846, %v1878
      %v1887 = vmul.f32 %v1847, %v1879
      %v1888 = vmul.f32 %v1848, %v1880
      %v1889 = vmul.f32 %v1849, %v1881
      %v1890 = vmul.f32 %v1850, %v1882
      %v1891 = vmul.f32 %v1851, %v1883
      %v1892 = vpack.c.bf16 %v1885, %v1884
      %v1893 = vpack.c.bf16 %v1887, %v1886
      %v1894 = vpack.c.bf16 %v1889, %v1888
      %v1895 = vpack.c.bf16 %v1891, %v1890
      %v1896 = vld [vmem:[%s11] sm:$0xf]
      %v1897 = vld [vmem:[%s11 + $0x4] sm:$0xf]
      %v1898 = vld [vmem:[%s11 + $0x8] sm:$0xf]
      %v1899 = vld [vmem:[%s11 + $0xc] sm:$0xf]
      %v1900 = vld [vmem:[%s11 + $0x10] sm:$0xf]
      %v1901 = vld [vmem:[%s11 + $0x14] sm:$0xf]
      %v1902 = vld [vmem:[%s11 + $0x18] sm:$0xf]
      %v1903 = vld [vmem:[%s11 + $0x1c] sm:$0xf]
      %v1904 = vld [vmem:[%s12] sm:$0x1]
      %v1906 = vlaneseq
      %v1907 = vshrl.u32 %v1906, 7
      %v1908 = vsub.s32 0, %v1907
      %v1909 = vrot.slane %v1904, %v1908
      %v1919 = vunpack.c.l.b16 %v1896
      %v1920 = vunpack.c.l.b16 %v1897
      %v1921 = vunpack.c.l.b16 %v1898
      %v1922 = vunpack.c.l.b16 %v1899
      %v1923 = vunpack.c.l.b16 %v1900
      %v1924 = vunpack.c.l.b16 %v1901
      %v1925 = vunpack.c.l.b16 %v1902
      %v1926 = vunpack.c.l.b16 %v1903
      %v1927 = vpack.c.b16 %v1920, %v1919
      %v1928 = vpack.c.b16 %v1922, %v1921
      %v1929 = vpack.c.b16 %v1924, %v1923
      %v1930 = vpack.c.b16 %v1926, %v1925
      %v1936 = vsel %vm928, %v1892, 0
      %v1939 = vsel %vm928, %v1893, 0
      %v1942 = vsel %vm928, %v1894, 0
      %v1945 = vsel %vm928, %v1895, 0
      %1947 = vmatprep.subr.bf16.mxu0 0
      %1948 = vmatpush1.bf16.msra.mxu0 0
      %1949 = vmatprep.subr.bf16.mxu0 0
      %1950 = vmatpush1.bf16.msra.mxu0 0
      %1951 = vmatprep.subr.bf16.mxu0 0
      %1952 = vmatpush1.bf16.msra.mxu0 0
      %1953 = vmatprep.subr.bf16.mxu0 0
      %1954 = vmatpush1.bf16.msra.mxu0 0
      %1955 = vmatprep.subr.bf16.mxu0 0
      %1956 = vmatpush1.bf16.msra.mxu0 %v1930
      %1957 = vmatprep.subr.bf16.mxu0 0
      %1958 = vmatpush1.bf16.msra.mxu0 %v1929
      %1959 = vmatprep.subr.bf16.mxu0 0
      %1960 = vmatpush1.bf16.msra.mxu0 %v1928
      %1961 = vmatprep.subr.bf16.mxu0 0
      %1962 = vmatpush1.bf16.msra.mxu0 %v1927
      %1963 = vmatprep.subr.bf16.mxu0 0
      %1964 = vmatpush2.bf16.msra.mxu0 0
      %1965 = vmatprep.subr.bf16.mxu0 0
      %1966 = vmatpush2.bf16.msra.mxu0 0
      %1967 = vmatprep.subr.bf16.mxu0 0
      %1968 = vmatpush2.bf16.msra.mxu0 0
      %1969 = vmatprep.subr.bf16.mxu0 0
      %1970 = vmatpush2.bf16.msra.mxu0 0
      %1971 = vmatprep.subr.bf16.mxu0 0
      %1972 = vmatpush2.bf16.msra.mxu0 0
      %1973 = vmatprep.subr.bf16.mxu0 0
      %1974 = vmatpush2.bf16.msra.mxu0 0
      %1975 = vmatprep.subr.bf16.mxu0 0
      %1976 = vmatpush2.bf16.msra.mxu0 0
      %1977 = vmatprep.subr.bf16.mxu0 0
      %1978 = vmatpush2.bf16.msra.mxu0 0
      %1979 = vmatprep.mubr.bf16.mxu0 0
      %1980 = vmatmul.mubr.bf16.gmra.mxu0 %v1936
      %v1981 = vpop.f32.mrf.mxu0
      %v1982 = vadd.f32 %v1909, %v1981
      %v1983 = vpop.f32.mrf.mxu0
      %v1984 = vpop.f32.mrf.mxu0
      %v1985 = vadd.f32 %v1909, %v1984
      %v1986 = vpop.f32.mrf.mxu0
      %1987 = vmatprep.mubr.bf16.mxu0 0
      %1988 = vmatmul.mubr.bf16.gmra.mxu0 %v1939
      %v1989 = vpop.f32.mrf.mxu0
      %v1990 = vadd.f32 %v1909, %v1989
      %v1991 = vpop.f32.mrf.mxu0
      %v1992 = vpop.f32.mrf.mxu0
      %v1993 = vadd.f32 %v1909, %v1992
      %v1994 = vpop.f32.mrf.mxu0
      %1995 = vmatprep.mubr.bf16.mxu0 0
      %1996 = vmatmul.mubr.bf16.gmra.mxu0 %v1942
      %v1997 = vpop.f32.mrf.mxu0
      %v1998 = vadd.f32 %v1909, %v1997
      %v1999 = vpop.f32.mrf.mxu0
      %v2000 = vpop.f32.mrf.mxu0
      %v2001 = vadd.f32 %v1909, %v2000
      %v2002 = vpop.f32.mrf.mxu0
      %2003 = vmatprep.mubr.bf16.mxu0 0
      %2004 = vmatmul.mubr.bf16.gmra.mxu0 %v1945
      %v2005 = vpop.f32.mrf.mxu0
      %v2006 = vadd.f32 %v1909, %v2005
      %v2007 = vpop.f32.mrf.mxu0
      %v2008 = vpop.f32.mrf.mxu0
      %v2009 = vadd.f32 %v1909, %v2008
      %v2010 = vpop.f32.mrf.mxu0
      %2011 = vdwg.mxu0
      %v2012 = vpack.c.bf16 %v1985, %v1982
      %v2013 = vpack.c.bf16 %v2001, %v1998
      %v2014 = vld [vmem:[%s13] sm:$0xff]
      %v2015 = vld [vmem:[%s13 + $0x8] sm:$0xff]
      %v2016 = vld [vmem:[%s13 + $0x10] sm:$0xff]
      %v2017 = vld [vmem:[%s13 + $0x18] sm:$0xf]
      %v2018 = vld [vmem:[%s13 + $0x1c] sm:$0xff]
      %v2019 = vld [vmem:[%s13 + $0x24] sm:$0xff]
      %v2020 = vld [vmem:[%s13 + $0x2c] sm:$0xff]
      %v2021 = vld [vmem:[%s13 + $0x34] sm:$0xf]
      %v2022 = vld [vmem:[%s14] sm:$0xff]
      %v2024 = vlaneseq
      %v2025 = vshrl.u32 %v2024, 7
      %v2026 = vsub.s32 0, %v2025
      %v2027 = vrot.slane %v2022, %v2026
      %v2028 = vlaneseq
      %v2029 = vshrl.u32 %v2028, 7
      %v2030 = vsub.s32 1, %v2029
      %v2031 = vrot.slane %v2022, %v2030
      %v2032 = vlaneseq
      %v2033 = vshrl.u32 %v2032, 7
      %v2034 = vsub.s32 2, %v2033
      %v2035 = vrot.slane %v2022, %v2034
      %v2036 = vlaneseq
      %v2037 = vshrl.u32 %v2036, 7
      %v2038 = vsub.s32 3, %v2037
      %v2039 = vrot.slane %v2022, %v2038
      %v2040 = vlaneseq
      %v2041 = vshrl.u32 %v2040, 7
      %v2042 = vsub.s32 4, %v2041
      %v2043 = vrot.slane %v2022, %v2042
      %v2044 = vlaneseq
      %v2045 = vshrl.u32 %v2044, 7
      %v2046 = vsub.s32 5, %v2045
      %v2047 = vrot.slane %v2022, %v2046
      %v2048 = vlaneseq
      %v2049 = vshrl.u32 %v2048, 7
      %v2050 = vsub.s32 6, %v2049
      %v2051 = vrot.slane %v2022, %v2050
      %v2067 = vunpack.c.l.b16 %v2014
      %v2068 = vunpack.c.h.b16 %v2014
      %v2069 = vunpack.c.l.b16 %v2015
      %v2070 = vunpack.c.h.b16 %v2015
      %v2071 = vunpack.c.l.b16 %v2016
      %v2072 = vunpack.c.h.b16 %v2016
      %v2073 = vunpack.c.l.b16 %v2017
      %v2074 = vunpack.c.l.b16 %v2018
      %v2075 = vunpack.c.h.b16 %v2018
      %v2076 = vunpack.c.l.b16 %v2019
      %v2077 = vunpack.c.h.b16 %v2019
      %v2078 = vunpack.c.l.b16 %v2020
      %v2079 = vunpack.c.h.b16 %v2020
      %v2080 = vunpack.c.l.b16 %v2021
      %v2081 = vpack.c.b16 %v2074, %v2067
      %v2082 = vpack.c.b16 %v2075, %v2068
      %v2083 = vpack.c.b16 %v2076, %v2069
      %v2084 = vpack.c.b16 %v2077, %v2070
      %v2085 = vpack.c.b16 %v2078, %v2071
      %v2086 = vpack.c.b16 %v2079, %v2072
      %v2087 = vpack.c.b16 %v2080, %v2073
      %v2096 = vsel %vm1211, %v2012, 0
      %v2099 = vsel %vm1211, %v2013, 0
      %2101 = vmatprep.subr.bf16.mxu0 0
      %2102 = vmatpush1.bf16.msra.mxu0 0
      %2103 = vmatprep.subr.bf16.mxu0 0
      %2104 = vmatpush1.bf16.msra.mxu0 0
      %2105 = vmatprep.subr.bf16.mxu0 0
      %2106 = vmatpush1.bf16.msra.mxu0 0
      %2107 = vmatprep.subr.bf16.mxu0 0
      %2108 = vmatpush1.bf16.msra.mxu0 0
      %2109 = vmatprep.subr.bf16.mxu0 0
      %2110 = vmatpush1.bf16.msra.mxu0 0
      %2111 = vmatprep.subr.bf16.mxu0 0
      %2112 = vmatpush1.bf16.msra.mxu0 0
      %2113 = vmatprep.subr.bf16.mxu0 0
      %2114 = vmatpush1.bf16.msra.mxu0 0
      %2115 = vmatprep.subr.bf16.mxu0 %v2082
      %2116 = vmatpush1.bf16.msra.mxu0 %v2081
      %2117 = vmatprep.subr.bf16.mxu0 0
      %2118 = vmatpush2.bf16.msra.mxu0 0
      %2119 = vmatprep.subr.bf16.mxu0 0
      %2120 = vmatpush2.bf16.msra.mxu0 0
      %2121 = vmatprep.subr.bf16.mxu0 0
      %2122 = vmatpush2.bf16.msra.mxu0 0
      %2123 = vmatprep.subr.bf16.mxu0 0
      %2124 = vmatpush2.bf16.msra.mxu0 0
      %2125 = vmatprep.subr.bf16.mxu0 0
      %2126 = vmatpush2.bf16.msra.mxu0 0
      %2127 = vmatprep.subr.bf16.mxu0 0
      %2128 = vmatpush2.bf16.msra.mxu0 0
      %2129 = vmatprep.subr.bf16.mxu0 0
      %2130 = vmatpush2.bf16.msra.mxu0 0
      %2131 = vmatprep.subr.bf16.mxu0 0
      %2132 = vmatpush2.bf16.msra.mxu0 0
      %2133 = vmatprep.mubr.bf16.mxu0 0
      %2134 = vmatmul.mubr.bf16.gmra.mxu0 %v2096
      %v2135 = vpop.f32.mrf.mxu0
      %v2136 = vadd.f32 %v2027, %v2135
      %v2137 = vpop.f32.mrf.mxu0
      %v2138 = vadd.f32 %v2031, %v2137
      %v2139 = vpop.f32.mrf.mxu0
      %v2140 = vadd.f32 %v2027, %v2139
      %v2141 = vpop.f32.mrf.mxu0
      %v2142 = vadd.f32 %v2031, %v2141
      %2143 = vmatprep.mubr.bf16.mxu0 0
      %2144 = vmatmul.mubr.bf16.gmra.mxu0 %v2099
      %v2145 = vpop.f32.mrf.mxu0
      %v2146 = vadd.f32 %v2027, %v2145
      %v2147 = vpop.f32.mrf.mxu0
      %v2148 = vadd.f32 %v2031, %v2147
      %v2149 = vpop.f32.mrf.mxu0
      %v2150 = vadd.f32 %v2027, %v2149
      %v2151 = vpop.f32.mrf.mxu0
      %v2152 = vadd.f32 %v2031, %v2151
      %2153 = vdwg.mxu0
      %2154 = vmatprep.subr.bf16.mxu0 0
      %2155 = vmatpush1.bf16.msra.mxu0 0
      %2156 = vmatprep.subr.bf16.mxu0 0
      %2157 = vmatpush1.bf16.msra.mxu0 0
      %2158 = vmatprep.subr.bf16.mxu0 0
      %2159 = vmatpush1.bf16.msra.mxu0 0
      %2160 = vmatprep.subr.bf16.mxu0 0
      %2161 = vmatpush1.bf16.msra.mxu0 0
      %2162 = vmatprep.subr.bf16.mxu0 0
      %2163 = vmatpush1.bf16.msra.mxu0 0
      %2164 = vmatprep.subr.bf16.mxu0 0
      %2165 = vmatpush1.bf16.msra.mxu0 0
      %2166 = vmatprep.subr.bf16.mxu0 0
      %2167 = vmatpush1.bf16.msra.mxu0 0
      %2168 = vmatprep.subr.bf16.mxu0 %v2084
      %2169 = vmatpush1.bf16.msra.mxu0 %v2083
      %2170 = vmatprep.subr.bf16.mxu0 0
      %2171 = vmatpush2.bf16.msra.mxu0 0
      %2172 = vmatprep.subr.bf16.mxu0 0
      %2173 = vmatpush2.bf16.msra.mxu0 0
      %2174 = vmatprep.subr.bf16.mxu0 0
      %2175 = vmatpush2.bf16.msra.mxu0 0
      %2176 = vmatprep.subr.bf16.mxu0 0
      %2177 = vmatpush2.bf16.msra.mxu0 0
      %2178 = vmatprep.subr.bf16.mxu0 0
      %2179 = vmatpush2.bf16.msra.mxu0 0
      %2180 = vmatprep.subr.bf16.mxu0 0
      %2181 = vmatpush2.bf16.msra.mxu0 0
      %2182 = vmatprep.subr.bf16.mxu0 0
      %2183 = vmatpush2.bf16.msra.mxu0 0
      %2184 = vmatprep.subr.bf16.mxu0 0
      %2185 = vmatpush2.bf16.msra.mxu0 0
      %2186 = vmatprep.mubr.bf16.mxu0 0
      %2187 = vmatmul.mubr.bf16.gmra.mxu0 %v2096
      %v2188 = vpop.f32.mrf.mxu0
      %v2189 = vadd.f32 %v2035, %v2188
      %v2190 = vpop.f32.mrf.mxu0
      %v2191 = vadd.f32 %v2039, %v2190
      %v2192 = vpop.f32.mrf.mxu0
      %v2193 = vadd.f32 %v2035, %v2192
      %v2194 = vpop.f32.mrf.mxu0
      %v2195 = vadd.f32 %v2039, %v2194
      %2196 = vmatprep.mubr.bf16.mxu0 0
      %2197 = vmatmul.mubr.bf16.gmra.mxu0 %v2099
      %v2198 = vpop.f32.mrf.mxu0
      %v2199 = vadd.f32 %v2035, %v2198
      %v2200 = vpop.f32.mrf.mxu0
      %v2201 = vadd.f32 %v2039, %v2200
      %v2202 = vpop.f32.mrf.mxu0
      %v2203 = vadd.f32 %v2035, %v2202
      %v2204 = vpop.f32.mrf.mxu0
      %v2205 = vadd.f32 %v2039, %v2204
      %2206 = vdwg.mxu0
      %2207 = vmatprep.subr.bf16.mxu0 0
      %2208 = vmatpush1.bf16.msra.mxu0 0
      %2209 = vmatprep.subr.bf16.mxu0 0
      %2210 = vmatpush1.bf16.msra.mxu0 0
      %2211 = vmatprep.subr.bf16.mxu0 0
      %2212 = vmatpush1.bf16.msra.mxu0 0
      %2213 = vmatprep.subr.bf16.mxu0 0
      %2214 = vmatpush1.bf16.msra.mxu0 0
      %2215 = vmatprep.subr.bf16.mxu0 0
      %2216 = vmatpush1.bf16.msra.mxu0 0
      %2217 = vmatprep.subr.bf16.mxu0 0
      %2218 = vmatpush1.bf16.msra.mxu0 0
      %2219 = vmatprep.subr.bf16.mxu0 0
      %2220 = vmatpush1.bf16.msra.mxu0 0
      %2221 = vmatprep.subr.bf16.mxu0 %v2086
      %2222 = vmatpush1.bf16.msra.mxu0 %v2085
      %2223 = vmatprep.subr.bf16.mxu0 0
      %2224 = vmatpush2.bf16.msra.mxu0 0
      %2225 = vmatprep.subr.bf16.mxu0 0
      %2226 = vmatpush2.bf16.msra.mxu0 0
      %2227 = vmatprep.subr.bf16.mxu0 0
      %2228 = vmatpush2.bf16.msra.mxu0 0
      %2229 = vmatprep.subr.bf16.mxu0 0
      %2230 = vmatpush2.bf16.msra.mxu0 0
      %2231 = vmatprep.subr.bf16.mxu0 0
      %2232 = vmatpush2.bf16.msra.mxu0 0
      %2233 = vmatprep.subr.bf16.mxu0 0
      %2234 = vmatpush2.bf16.msra.mxu0 0
      %2235 = vmatprep.subr.bf16.mxu0 0
      %2236 = vmatpush2.bf16.msra.mxu0 0
      %2237 = vmatprep.subr.bf16.mxu0 0
      %2238 = vmatpush2.bf16.msra.mxu0 0
      %2239 = vmatprep.mubr.bf16.mxu0 0
      %2240 = vmatmul.mubr.bf16.gmra.mxu0 %v2096
      %v2241 = vpop.f32.mrf.mxu0
      %v2242 = vadd.f32 %v2043, %v2241
      %v2243 = vpop.f32.mrf.mxu0
      %v2244 = vadd.f32 %v2047, %v2243
      %v2245 = vpop.f32.mrf.mxu0
      %v2246 = vadd.f32 %v2043, %v2245
      %v2247 = vpop.f32.mrf.mxu0
      %v2248 = vadd.f32 %v2047, %v2247
      %2249 = vmatprep.mubr.bf16.mxu0 0
      %2250 = vmatmul.mubr.bf16.gmra.mxu0 %v2099
      %v2251 = vpop.f32.mrf.mxu0
      %v2252 = vadd.f32 %v2043, %v2251
      %v2253 = vpop.f32.mrf.mxu0
      %v2254 = vadd.f32 %v2047, %v2253
      %v2255 = vpop.f32.mrf.mxu0
      %v2256 = vadd.f32 %v2043, %v2255
      %v2257 = vpop.f32.mrf.mxu0
      %v2258 = vadd.f32 %v2047, %v2257
      %2259 = vdwg.mxu0
      %2260 = vmatprep.subr.bf16.mxu0 0
      %2261 = vmatpush1.bf16.msra.mxu0 0
      %2262 = vmatprep.subr.bf16.mxu0 0
      %2263 = vmatpush1.bf16.msra.mxu0 0
      %2264 = vmatprep.subr.bf16.mxu0 0
      %2265 = vmatpush1.bf16.msra.mxu0 0
      %2266 = vmatprep.subr.bf16.mxu0 0
      %2267 = vmatpush1.bf16.msra.mxu0 0
      %2268 = vmatprep.subr.bf16.mxu0 0
      %2269 = vmatpush1.bf16.msra.mxu0 0
      %2270 = vmatprep.subr.bf16.mxu0 0
      %2271 = vmatpush1.bf16.msra.mxu0 0
      %2272 = vmatprep.subr.bf16.mxu0 0
      %2273 = vmatpush1.bf16.msra.mxu0 0
      %2274 = vmatprep.subr.bf16.mxu0 0
      %2275 = vmatpush1.bf16.msra.mxu0 %v2087
      %2276 = vmatprep.subr.bf16.mxu0 0
      %2277 = vmatpush2.bf16.msra.mxu0 0
      %2278 = vmatprep.subr.bf16.mxu0 0
      %2279 = vmatpush2.bf16.msra.mxu0 0
      %2280 = vmatprep.subr.bf16.mxu0 0
      %2281 = vmatpush2.bf16.msra.mxu0 0
      %2282 = vmatprep.subr.bf16.mxu0 0
      %2283 = vmatpush2.bf16.msra.mxu0 0
      %2284 = vmatprep.subr.bf16.mxu0 0
      %2285 = vmatpush2.bf16.msra.mxu0 0
      %2286 = vmatprep.subr.bf16.mxu0 0
      %2287 = vmatpush2.bf16.msra.mxu0 0
      %2288 = vmatprep.subr.bf16.mxu0 0
      %2289 = vmatpush2.bf16.msra.mxu0 0
      %2290 = vmatprep.subr.bf16.mxu0 0
      %2291 = vmatpush2.bf16.msra.mxu0 0
      %2292 = vmatprep.mubr.bf16.mxu0 0
      %2293 = vmatmul.mubr.bf16.gmra.mxu0 %v2096
      %v2294 = vpop.f32.mrf.mxu0
      %v2295 = vadd.f32 %v2051, %v2294
      %v2296 = vpop.f32.mrf.mxu0
      %v2297 = vpop.f32.mrf.mxu0
      %v2298 = vadd.f32 %v2051, %v2297
      %v2299 = vpop.f32.mrf.mxu0
      %2300 = vmatprep.mubr.bf16.mxu0 0
      %2301 = vmatmul.mubr.bf16.gmra.mxu0 %v2099
      %v2302 = vpop.f32.mrf.mxu0
      %v2303 = vadd.f32 %v2051, %v2302
      %v2304 = vpop.f32.mrf.mxu0
      %v2305 = vpop.f32.mrf.mxu0
      %v2306 = vadd.f32 %v2051, %v2305
      %v2307 = vpop.f32.mrf.mxu0
      %2308 = vdwg.mxu0
      %v2313 = vrot.slane %v1884, 5
      %v2314 = vrot.slane %v1885, 5
      %v2315 = vsel %vm1516, %v2313, %v2314
      %v2316 = vrot.slane %v1888, 5
      %v2317 = vrot.slane %v1889, 5
      %v2318 = vsel %vm1516, %v2316, %v2317
      %v2325 = vsel %vm1516, 0.0, %v2313
      %v2326 = vsel %vm1516, 0.0, %v2316
      %v2327 = vsel %vm1516, %v2314, 0.0
      %v2328 = vsel %vm1516, %v2317, 0.0
      %v2329 = vmul.f32 %v2136, %v2325
      %v2330 = vmul.f32 %v2140, %v2315
      %v2331 = vmul.f32 %v2146, %v2326
      %v2332 = vmul.f32 %v2150, %v2318
      %v2333 = vadd.f32 %v2329, 0.0
      %v2334 = vadd.f32 %v2330, 0.0
      %v2335 = vadd.f32 %v2331, 0.0
      %v2336 = vadd.f32 %v2332, 0.0
      %v2341 = vrot.slane %v2325, 1
      %v2342 = vrot.slane %v2315, 1
      %v2343 = vsel %vm1565, %v2341, %v2342
      %v2344 = vrot.slane %v2327, 1
      %v2345 = vsel %vm1565, %v2342, %v2344
      %v2346 = vrot.slane %v2326, 1
      %v2347 = vrot.slane %v2318, 1
      %v2348 = vsel %vm1565, %v2346, %v2347
      %v2349 = vrot.slane %v2328, 1
      %v2350 = vsel %vm1565, %v2347, %v2349
      %v2355 = vmul.f32 %v2138, %v2343
      %v2356 = vmul.f32 %v2142, %v2345
      %v2357 = vmul.f32 %v2148, %v2348
      %v2358 = vmul.f32 %v2152, %v2350
      %v2359 = vadd.f32 %v2333, %v2355
      %v2360 = vadd.f32 %v2334, %v2356
      %v2361 = vadd.f32 %v2335, %v2357
      %v2362 = vadd.f32 %v2336, %v2358
      %v2363 = vrot.slane %v2325, 2
      %v2364 = vrot.slane %v2315, 2
      %v2365 = vsel %vm1608, %v2363, %v2364
      %v2366 = vrot.slane %v2327, 2
      %v2367 = vsel %vm1608, %v2364, %v2366
      %v2368 = vrot.slane %v2326, 2
      %v2369 = vrot.slane %v2318, 2
      %v2370 = vsel %vm1608, %v2368, %v2369
      %v2371 = vrot.slane %v2328, 2
      %v2372 = vsel %vm1608, %v2369, %v2371
      %v2377 = vmul.f32 %v2189, %v2365
      %v2378 = vmul.f32 %v2193, %v2367
      %v2379 = vmul.f32 %v2199, %v2370
      %v2380 = vmul.f32 %v2203, %v2372
      %v2381 = vadd.f32 %v2359, %v2377
      %v2382 = vadd.f32 %v2360, %v2378
      %v2383 = vadd.f32 %v2361, %v2379
      %v2384 = vadd.f32 %v2362, %v2380
      %v2385 = vrot.slane %v2325, 3
      %v2386 = vrot.slane %v2315, 3
      %v2387 = vsel %vm1651, %v2385, %v2386
      %v2388 = vrot.slane %v2327, 3
      %v2389 = vsel %vm1651, %v2386, %v2388
      %v2390 = vrot.slane %v2326, 3
      %v2391 = vrot.slane %v2318, 3
      %v2392 = vsel %vm1651, %v2390, %v2391
      %v2393 = vrot.slane %v2328, 3
      %v2394 = vsel %vm1651, %v2391, %v2393
      %v2399 = vmul.f32 %v2191, %v2387
      %v2400 = vmul.f32 %v2195, %v2389
      %v2401 = vmul.f32 %v2201, %v2392
      %v2402 = vmul.f32 %v2205, %v2394
      %v2403 = vadd.f32 %v2381, %v2399
      %v2404 = vadd.f32 %v2382, %v2400
      %v2405 = vadd.f32 %v2383, %v2401
      %v2406 = vadd.f32 %v2384, %v2402
      %v2407 = vrot.slane %v2325, 4
      %v2408 = vrot.slane %v2315, 4
      %v2409 = vsel %vm1694, %v2407, %v2408
      %v2410 = vrot.slane %v2327, 4
      %v2411 = vsel %vm1694, %v2408, %v2410
      %v2412 = vrot.slane %v2326, 4
      %v2413 = vrot.slane %v2318, 4
      %v2414 = vsel %vm1694, %v2412, %v2413
      %v2415 = vrot.slane %v2328, 4
      %v2416 = vsel %vm1694, %v2413, %v2415
      %v2421 = vmul.f32 %v2242, %v2409
      %v2422 = vmul.f32 %v2246, %v2411
      %v2423 = vmul.f32 %v2252, %v2414
      %v2424 = vmul.f32 %v2256, %v2416
      %v2425 = vadd.f32 %v2403, %v2421
      %v2426 = vadd.f32 %v2404, %v2422
      %v2427 = vadd.f32 %v2405, %v2423
      %v2428 = vadd.f32 %v2406, %v2424
      %v2429 = vrot.slane %v2325, 5
      %v2430 = vrot.slane %v2315, 5
      %v2431 = vsel %vm1516, %v2429, %v2430
      %v2432 = vrot.slane %v2327, 5
      %v2433 = vsel %vm1516, %v2430, %v2432
      %v2434 = vrot.slane %v2326, 5
      %v2435 = vrot.slane %v2318, 5
      %v2436 = vsel %vm1516, %v2434, %v2435
      %v2437 = vrot.slane %v2328, 5
      %v2438 = vsel %vm1516, %v2435, %v2437
      %v2443 = vmul.f32 %v2244, %v2431
      %v2444 = vmul.f32 %v2248, %v2433
      %v2445 = vmul.f32 %v2254, %v2436
      %v2446 = vmul.f32 %v2258, %v2438
      %v2447 = vadd.f32 %v2425, %v2443
      %v2448 = vadd.f32 %v2426, %v2444
      %v2449 = vadd.f32 %v2427, %v2445
      %v2450 = vadd.f32 %v2428, %v2446
      %v2451 = vrot.slane %v2325, 6
      %v2452 = vrot.slane %v2315, 6
      %v2453 = vsel %vm1779, %v2451, %v2452
      %v2454 = vrot.slane %v2327, 6
      %v2455 = vsel %vm1779, %v2452, %v2454
      %v2456 = vrot.slane %v2326, 6
      %v2457 = vrot.slane %v2318, 6
      %v2458 = vsel %vm1779, %v2456, %v2457
      %v2459 = vrot.slane %v2328, 6
      %v2460 = vsel %vm1779, %v2457, %v2459
      %v2465 = vmul.f32 %v2295, %v2453
      %v2466 = vmul.f32 %v2298, %v2455
      %v2467 = vmul.f32 %v2303, %v2458
      %v2468 = vmul.f32 %v2306, %v2460
      %v2469 = vadd.f32 %v2447, %v2465
      %v2470 = vadd.f32 %v2448, %v2466
      %v2471 = vadd.f32 %v2449, %v2467
      %v2472 = vadd.f32 %v2450, %v2468
      %v2473 = vpack.c.bf16 %v1993, %v1990
      %v2474 = vpack.c.bf16 %v2009, %v2006
      %v2475 = vld [vmem:[%s15] sm:$0xff]
      %v2476 = vld [vmem:[%s15 + $0x8] sm:$0xff]
      %v2477 = vld [vmem:[%s15 + $0x10] sm:$0xff]
      %v2478 = vld [vmem:[%s15 + $0x18] sm:$0xf]
      %v2479 = vld [vmem:[%s15 + $0x1c] sm:$0xff]
      %v2480 = vld [vmem:[%s15 + $0x24] sm:$0xff]
      %v2481 = vld [vmem:[%s15 + $0x2c] sm:$0xff]
      %v2482 = vld [vmem:[%s15 + $0x34] sm:$0xf]
      %v2483 = vld [vmem:[%s16] sm:$0xff]
      %v2485 = vlaneseq
      %v2486 = vshrl.u32 %v2485, 7
      %v2487 = vsub.s32 0, %v2486
      %v2488 = vrot.slane %v2483, %v2487
      %v2489 = vlaneseq
      %v2490 = vshrl.u32 %v2489, 7
      %v2491 = vsub.s32 1, %v2490
      %v2492 = vrot.slane %v2483, %v2491
      %v2493 = vlaneseq
      %v2494 = vshrl.u32 %v2493, 7
      %v2495 = vsub.s32 2, %v2494
      %v2496 = vrot.slane %v2483, %v2495
      %v2497 = vlaneseq
      %v2498 = vshrl.u32 %v2497, 7
      %v2499 = vsub.s32 3, %v2498
      %v2500 = vrot.slane %v2483, %v2499
      %v2501 = vlaneseq
      %v2502 = vshrl.u32 %v2501, 7
      %v2503 = vsub.s32 4, %v2502
      %v2504 = vrot.slane %v2483, %v2503
      %v2505 = vlaneseq
      %v2506 = vshrl.u32 %v2505, 7
      %v2507 = vsub.s32 5, %v2506
      %v2508 = vrot.slane %v2483, %v2507
      %v2509 = vlaneseq
      %v2510 = vshrl.u32 %v2509, 7
      %v2511 = vsub.s32 6, %v2510
      %v2512 = vrot.slane %v2483, %v2511
      %2522 = vrot.lane.b32.xlu0 %v2473, 112
      %v2523 = vpop.permute.xlu0 %2522
      %2524 = vrot.lane.b32.xlu0 %v2474, 112
      %v2525 = vpop.permute.xlu0 %2524
      %v2534 = vunpack.c.l.b16 %v2475
      %v2535 = vunpack.c.h.b16 %v2475
      %v2536 = vunpack.c.l.b16 %v2476
      %v2537 = vunpack.c.h.b16 %v2476
      %v2538 = vunpack.c.l.b16 %v2477
      %v2539 = vunpack.c.h.b16 %v2477
      %v2540 = vunpack.c.l.b16 %v2478
      %v2541 = vunpack.c.l.b16 %v2479
      %v2542 = vunpack.c.h.b16 %v2479
      %v2543 = vunpack.c.l.b16 %v2480
      %v2544 = vunpack.c.h.b16 %v2480
      %v2545 = vunpack.c.l.b16 %v2481
      %v2546 = vunpack.c.h.b16 %v2481
      %v2547 = vunpack.c.l.b16 %v2482
      %v2548 = vpack.c.b16 %v2541, %v2534
      %v2549 = vpack.c.b16 %v2542, %v2535
      %v2550 = vpack.c.b16 %v2543, %v2536
      %v2551 = vpack.c.b16 %v2544, %v2537
      %v2552 = vpack.c.b16 %v2545, %v2538
      %v2553 = vpack.c.b16 %v2546, %v2539
      %v2554 = vpack.c.b16 %v2547, %v2540
      %v2563 = vsel %vm1211, %v2523, 0
      %v2566 = vsel %vm1211, %v2525, 0
      %2568 = vmatprep.subr.bf16.mxu0 0
      %2569 = vmatpush1.bf16.msra.mxu0 0
      %2570 = vmatprep.subr.bf16.mxu0 0
      %2571 = vmatpush1.bf16.msra.mxu0 0
      %2572 = vmatprep.subr.bf16.mxu0 0
      %2573 = vmatpush1.bf16.msra.mxu0 0
      %2574 = vmatprep.subr.bf16.mxu0 0
      %2575 = vmatpush1.bf16.msra.mxu0 0
      %2576 = vmatprep.subr.bf16.mxu0 0
      %2577 = vmatpush1.bf16.msra.mxu0 0
      %2578 = vmatprep.subr.bf16.mxu0 0
      %2579 = vmatpush1.bf16.msra.mxu0 0
      %2580 = vmatprep.subr.bf16.mxu0 0
      %2581 = vmatpush1.bf16.msra.mxu0 0
      %2582 = vmatprep.subr.bf16.mxu0 %v2549
      %2583 = vmatpush1.bf16.msra.mxu0 %v2548
      %2584 = vmatprep.subr.bf16.mxu0 0
      %2585 = vmatpush2.bf16.msra.mxu0 0
      %2586 = vmatprep.subr.bf16.mxu0 0
      %2587 = vmatpush2.bf16.msra.mxu0 0
      %2588 = vmatprep.subr.bf16.mxu0 0
      %2589 = vmatpush2.bf16.msra.mxu0 0
      %2590 = vmatprep.subr.bf16.mxu0 0
      %2591 = vmatpush2.bf16.msra.mxu0 0
      %2592 = vmatprep.subr.bf16.mxu0 0
      %2593 = vmatpush2.bf16.msra.mxu0 0
      %2594 = vmatprep.subr.bf16.mxu0 0
      %2595 = vmatpush2.bf16.msra.mxu0 0
      %2596 = vmatprep.subr.bf16.mxu0 0
      %2597 = vmatpush2.bf16.msra.mxu0 0
      %2598 = vmatprep.subr.bf16.mxu0 0
      %2599 = vmatpush2.bf16.msra.mxu0 0
      %2600 = vmatprep.mubr.bf16.mxu0 0
      %2601 = vmatmul.mubr.bf16.gmra.mxu0 %v2563
      %v2602 = vpop.f32.mrf.mxu0
      %v2603 = vadd.f32 %v2488, %v2602
      %v2604 = vpop.f32.mrf.mxu0
      %v2605 = vadd.f32 %v2492, %v2604
      %v2606 = vpop.f32.mrf.mxu0
      %v2607 = vadd.f32 %v2488, %v2606
      %v2608 = vpop.f32.mrf.mxu0
      %v2609 = vadd.f32 %v2492, %v2608
      %2610 = vmatprep.mubr.bf16.mxu0 0
      %2611 = vmatmul.mubr.bf16.gmra.mxu0 %v2566
      %v2612 = vpop.f32.mrf.mxu0
      %v2613 = vadd.f32 %v2488, %v2612
      %v2614 = vpop.f32.mrf.mxu0
      %v2615 = vadd.f32 %v2492, %v2614
      %v2616 = vpop.f32.mrf.mxu0
      %v2617 = vadd.f32 %v2488, %v2616
      %v2618 = vpop.f32.mrf.mxu0
      %v2619 = vadd.f32 %v2492, %v2618
      %2620 = vdwg.mxu0
      %2621 = vmatprep.subr.bf16.mxu0 0
      %2622 = vmatpush1.bf16.msra.mxu0 0
      %2623 = vmatprep.subr.bf16.mxu0 0
      %2624 = vmatpush1.bf16.msra.mxu0 0
      %2625 = vmatprep.subr.bf16.mxu0 0
      %2626 = vmatpush1.bf16.msra.mxu0 0
      %2627 = vmatprep.subr.bf16.mxu0 0
      %2628 = vmatpush1.bf16.msra.mxu0 0
      %2629 = vmatprep.subr.bf16.mxu0 0
      %2630 = vmatpush1.bf16.msra.mxu0 0
      %2631 = vmatprep.subr.bf16.mxu0 0
      %2632 = vmatpush1.bf16.msra.mxu0 0
      %2633 = vmatprep.subr.bf16.mxu0 0
      %2634 = vmatpush1.bf16.msra.mxu0 0
      %2635 = vmatprep.subr.bf16.mxu0 %v2551
      %2636 = vmatpush1.bf16.msra.mxu0 %v2550
      %2637 = vmatprep.subr.bf16.mxu0 0
      %2638 = vmatpush2.bf16.msra.mxu0 0
      %2639 = vmatprep.subr.bf16.mxu0 0
      %2640 = vmatpush2.bf16.msra.mxu0 0
      %2641 = vmatprep.subr.bf16.mxu0 0
      %2642 = vmatpush2.bf16.msra.mxu0 0
      %2643 = vmatprep.subr.bf16.mxu0 0
      %2644 = vmatpush2.bf16.msra.mxu0 0
      %2645 = vmatprep.subr.bf16.mxu0 0
      %2646 = vmatpush2.bf16.msra.mxu0 0
      %2647 = vmatprep.subr.bf16.mxu0 0
      %2648 = vmatpush2.bf16.msra.mxu0 0
      %2649 = vmatprep.subr.bf16.mxu0 0
      %2650 = vmatpush2.bf16.msra.mxu0 0
      %2651 = vmatprep.subr.bf16.mxu0 0
      %2652 = vmatpush2.bf16.msra.mxu0 0
      %2653 = vmatprep.mubr.bf16.mxu0 0
      %2654 = vmatmul.mubr.bf16.gmra.mxu0 %v2563
      %v2655 = vpop.f32.mrf.mxu0
      %v2656 = vadd.f32 %v2496, %v2655
      %v2657 = vpop.f32.mrf.mxu0
      %v2658 = vadd.f32 %v2500, %v2657
      %v2659 = vpop.f32.mrf.mxu0
      %v2660 = vadd.f32 %v2496, %v2659
      %v2661 = vpop.f32.mrf.mxu0
      %v2662 = vadd.f32 %v2500, %v2661
      %2663 = vmatprep.mubr.bf16.mxu0 0
      %2664 = vmatmul.mubr.bf16.gmra.mxu0 %v2566
      %v2665 = vpop.f32.mrf.mxu0
      %v2666 = vadd.f32 %v2496, %v2665
      %v2667 = vpop.f32.mrf.mxu0
      %v2668 = vadd.f32 %v2500, %v2667
      %v2669 = vpop.f32.mrf.mxu0
      %v2670 = vadd.f32 %v2496, %v2669
      %v2671 = vpop.f32.mrf.mxu0
      %v2672 = vadd.f32 %v2500, %v2671
      %2673 = vdwg.mxu0
      %2674 = vmatprep.subr.bf16.mxu0 0
      %2675 = vmatpush1.bf16.msra.mxu0 0
      %2676 = vmatprep.subr.bf16.mxu0 0
      %2677 = vmatpush1.bf16.msra.mxu0 0
      %2678 = vmatprep.subr.bf16.mxu0 0
      %2679 = vmatpush1.bf16.msra.mxu0 0
      %2680 = vmatprep.subr.bf16.mxu0 0
      %2681 = vmatpush1.bf16.msra.mxu0 0
      %2682 = vmatprep.subr.bf16.mxu0 0
      %2683 = vmatpush1.bf16.msra.mxu0 0
      %2684 = vmatprep.subr.bf16.mxu0 0
      %2685 = vmatpush1.bf16.msra.mxu0 0
      %2686 = vmatprep.subr.bf16.mxu0 0
      %2687 = vmatpush1.bf16.msra.mxu0 0
      %2688 = vmatprep.subr.bf16.mxu0 %v2553
      %2689 = vmatpush1.bf16.msra.mxu0 %v2552
      %2690 = vmatprep.subr.bf16.mxu0 0
      %2691 = vmatpush2.bf16.msra.mxu0 0
      %2692 = vmatprep.subr.bf16.mxu0 0
      %2693 = vmatpush2.bf16.msra.mxu0 0
      %2694 = vmatprep.subr.bf16.mxu0 0
      %2695 = vmatpush2.bf16.msra.mxu0 0
      %2696 = vmatprep.subr.bf16.mxu0 0
      %2697 = vmatpush2.bf16.msra.mxu0 0
      %2698 = vmatprep.subr.bf16.mxu0 0
      %2699 = vmatpush2.bf16.msra.mxu0 0
      %2700 = vmatprep.subr.bf16.mxu0 0
      %2701 = vmatpush2.bf16.msra.mxu0 0
      %2702 = vmatprep.subr.bf16.mxu0 0
      %2703 = vmatpush2.bf16.msra.mxu0 0
      %2704 = vmatprep.subr.bf16.mxu0 0
      %2705 = vmatpush2.bf16.msra.mxu0 0
      %2706 = vmatprep.mubr.bf16.mxu0 0
      %2707 = vmatmul.mubr.bf16.gmra.mxu0 %v2563
      %v2708 = vpop.f32.mrf.mxu0
      %v2709 = vadd.f32 %v2504, %v2708
      %v2710 = vpop.f32.mrf.mxu0
      %v2711 = vadd.f32 %v2508, %v2710
      %v2712 = vpop.f32.mrf.mxu0
      %v2713 = vadd.f32 %v2504, %v2712
      %v2714 = vpop.f32.mrf.mxu0
      %v2715 = vadd.f32 %v2508, %v2714
      %2716 = vmatprep.mubr.bf16.mxu0 0
      %2717 = vmatmul.mubr.bf16.gmra.mxu0 %v2566
      %v2718 = vpop.f32.mrf.mxu0
      %v2719 = vadd.f32 %v2504, %v2718
      %v2720 = vpop.f32.mrf.mxu0
      %v2721 = vadd.f32 %v2508, %v2720
      %v2722 = vpop.f32.mrf.mxu0
      %v2723 = vadd.f32 %v2504, %v2722
      %v2724 = vpop.f32.mrf.mxu0
      %v2725 = vadd.f32 %v2508, %v2724
      %2726 = vdwg.mxu0
      %2727 = vmatprep.subr.bf16.mxu0 0
      %2728 = vmatpush1.bf16.msra.mxu0 0
      %2729 = vmatprep.subr.bf16.mxu0 0
      %2730 = vmatpush1.bf16.msra.mxu0 0
      %2731 = vmatprep.subr.bf16.mxu0 0
      %2732 = vmatpush1.bf16.msra.mxu0 0
      %2733 = vmatprep.subr.bf16.mxu0 0
      %2734 = vmatpush1.bf16.msra.mxu0 0
      %2735 = vmatprep.subr.bf16.mxu0 0
      %2736 = vmatpush1.bf16.msra.mxu0 0
      %2737 = vmatprep.subr.bf16.mxu0 0
      %2738 = vmatpush1.bf16.msra.mxu0 0
      %2739 = vmatprep.subr.bf16.mxu0 0
      %2740 = vmatpush1.bf16.msra.mxu0 0
      %2741 = vmatprep.subr.bf16.mxu0 0
      %2742 = vmatpush1.bf16.msra.mxu0 %v2554
      %2743 = vmatprep.subr.bf16.mxu0 0
      %2744 = vmatpush2.bf16.msra.mxu0 0
      %2745 = vmatprep.subr.bf16.mxu0 0
      %2746 = vmatpush2.bf16.msra.mxu0 0
      %2747 = vmatprep.subr.bf16.mxu0 0
      %2748 = vmatpush2.bf16.msra.mxu0 0
      %2749 = vmatprep.subr.bf16.mxu0 0
      %2750 = vmatpush2.bf16.msra.mxu0 0
      %2751 = vmatprep.subr.bf16.mxu0 0
      %2752 = vmatpush2.bf16.msra.mxu0 0
      %2753 = vmatprep.subr.bf16.mxu0 0
      %2754 = vmatpush2.bf16.msra.mxu0 0
      %2755 = vmatprep.subr.bf16.mxu0 0
      %2756 = vmatpush2.bf16.msra.mxu0 0
      %2757 = vmatprep.subr.bf16.mxu0 0
      %2758 = vmatpush2.bf16.msra.mxu0 0
      %2759 = vmatprep.mubr.bf16.mxu0 0
      %2760 = vmatmul.mubr.bf16.gmra.mxu0 %v2563
      %v2761 = vpop.f32.mrf.mxu0
      %v2762 = vadd.f32 %v2512, %v2761
      %v2763 = vpop.f32.mrf.mxu0
      %v2764 = vpop.f32.mrf.mxu0
      %v2765 = vadd.f32 %v2512, %v2764
      %v2766 = vpop.f32.mrf.mxu0
      %2767 = vmatprep.mubr.bf16.mxu0 0
      %2768 = vmatmul.mubr.bf16.gmra.mxu0 %v2566
      %v2769 = vpop.f32.mrf.mxu0
      %v2770 = vadd.f32 %v2512, %v2769
      %v2771 = vpop.f32.mrf.mxu0
      %v2772 = vpop.f32.mrf.mxu0
      %v2773 = vadd.f32 %v2512, %v2772
      %v2774 = vpop.f32.mrf.mxu0
      %2775 = vdwg.mxu0
      %v2780 = vrot.slane %v1886, 5
      %v2781 = vrot.slane %v1887, 5
      %v2782 = vsel %vm1516, %v2780, %v2781
      %v2783 = vrot.slane %v1890, 5
      %v2784 = vrot.slane %v1891, 5
      %v2785 = vsel %vm1516, %v2783, %v2784
      %v2792 = vsel %vm1516, 0.0, %v2780
      %v2793 = vsel %vm1516, 0.0, %v2783
      %v2794 = vsel %vm1516, %v2781, 0.0
      %v2795 = vsel %vm1516, %v2784, 0.0
      %v2796 = vmul.f32 %v2603, %v2792
      %v2797 = vmul.f32 %v2607, %v2782
      %v2798 = vmul.f32 %v2613, %v2793
      %v2799 = vmul.f32 %v2617, %v2785
      %v2800 = vadd.f32 %v2796, 0.0
      %v2801 = vadd.f32 %v2797, 0.0
      %v2802 = vadd.f32 %v2798, 0.0
      %v2803 = vadd.f32 %v2799, 0.0
      %v2808 = vrot.slane %v2792, 1
      %v2809 = vrot.slane %v2782, 1
      %v2810 = vsel %vm1565, %v2808, %v2809
      %v2811 = vrot.slane %v2794, 1
      %v2812 = vsel %vm1565, %v2809, %v2811
      %v2813 = vrot.slane %v2793, 1
      %v2814 = vrot.slane %v2785, 1
      %v2815 = vsel %vm1565, %v2813, %v2814
      %v2816 = vrot.slane %v2795, 1
      %v2817 = vsel %vm1565, %v2814, %v2816
      %v2822 = vmul.f32 %v2605, %v2810
      %v2823 = vmul.f32 %v2609, %v2812
      %v2824 = vmul.f32 %v2615, %v2815
      %v2825 = vmul.f32 %v2619, %v2817
      %v2826 = vadd.f32 %v2800, %v2822
      %v2827 = vadd.f32 %v2801, %v2823
      %v2828 = vadd.f32 %v2802, %v2824
      %v2829 = vadd.f32 %v2803, %v2825
      %v2830 = vrot.slane %v2792, 2
      %v2831 = vrot.slane %v2782, 2
      %v2832 = vsel %vm1608, %v2830, %v2831
      %v2833 = vrot.slane %v2794, 2
      %v2834 = vsel %vm1608, %v2831, %v2833
      %v2835 = vrot.slane %v2793, 2
      %v2836 = vrot.slane %v2785, 2
      %v2837 = vsel %vm1608, %v2835, %v2836
      %v2838 = vrot.slane %v2795, 2
      %v2839 = vsel %vm1608, %v2836, %v2838
      %v2844 = vmul.f32 %v2656, %v2832
      %v2845 = vmul.f32 %v2660, %v2834
      %v2846 = vmul.f32 %v2666, %v2837
      %v2847 = vmul.f32 %v2670, %v2839
      %v2848 = vadd.f32 %v2826, %v2844
      %v2849 = vadd.f32 %v2827, %v2845
      %v2850 = vadd.f32 %v2828, %v2846
      %v2851 = vadd.f32 %v2829, %v2847
      %v2852 = vrot.slane %v2792, 3
      %v2853 = vrot.slane %v2782, 3
      %v2854 = vsel %vm1651, %v2852, %v2853
      %v2855 = vrot.slane %v2794, 3
      %v2856 = vsel %vm1651, %v2853, %v2855
      %v2857 = vrot.slane %v2793, 3
      %v2858 = vrot.slane %v2785, 3
      %v2859 = vsel %vm1651, %v2857, %v2858
      %v2860 = vrot.slane %v2795, 3
      %v2861 = vsel %vm1651, %v2858, %v2860
      %v2866 = vmul.f32 %v2658, %v2854
      %v2867 = vmul.f32 %v2662, %v2856
      %v2868 = vmul.f32 %v2668, %v2859
      %v2869 = vmul.f32 %v2672, %v2861
      %v2870 = vadd.f32 %v2848, %v2866
      %v2871 = vadd.f32 %v2849, %v2867
      %v2872 = vadd.f32 %v2850, %v2868
      %v2873 = vadd.f32 %v2851, %v2869
      %v2874 = vrot.slane %v2792, 4
      %v2875 = vrot.slane %v2782, 4
      %v2876 = vsel %vm1694, %v2874, %v2875
      %v2877 = vrot.slane %v2794, 4
      %v2878 = vsel %vm1694, %v2875, %v2877
      %v2879 = vrot.slane %v2793, 4
      %v2880 = vrot.slane %v2785, 4
      %v2881 = vsel %vm1694, %v2879, %v2880
      %v2882 = vrot.slane %v2795, 4
      %v2883 = vsel %vm1694, %v2880, %v2882
      %v2888 = vmul.f32 %v2709, %v2876
      %v2889 = vmul.f32 %v2713, %v2878
      %v2890 = vmul.f32 %v2719, %v2881
      %v2891 = vmul.f32 %v2723, %v2883
      %v2892 = vadd.f32 %v2870, %v2888
      %v2893 = vadd.f32 %v2871, %v2889
      %v2894 = vadd.f32 %v2872, %v2890
      %v2895 = vadd.f32 %v2873, %v2891
      %v2896 = vrot.slane %v2792, 5
      %v2897 = vrot.slane %v2782, 5
      %v2898 = vsel %vm1516, %v2896, %v2897
      %v2899 = vrot.slane %v2794, 5
      %v2900 = vsel %vm1516, %v2897, %v2899
      %v2901 = vrot.slane %v2793, 5
      %v2902 = vrot.slane %v2785, 5
      %v2903 = vsel %vm1516, %v2901, %v2902
      %v2904 = vrot.slane %v2795, 5
      %v2905 = vsel %vm1516, %v2902, %v2904
      %v2910 = vmul.f32 %v2711, %v2898
      %v2911 = vmul.f32 %v2715, %v2900
      %v2912 = vmul.f32 %v2721, %v2903
      %v2913 = vmul.f32 %v2725, %v2905
      %v2914 = vadd.f32 %v2892, %v2910
      %v2915 = vadd.f32 %v2893, %v2911
      %v2916 = vadd.f32 %v2894, %v2912
      %v2917 = vadd.f32 %v2895, %v2913
      %v2918 = vrot.slane %v2792, 6
      %v2919 = vrot.slane %v2782, 6
      %v2920 = vsel %vm1779, %v2918, %v2919
      %v2921 = vrot.slane %v2794, 6
      %v2922 = vsel %vm1779, %v2919, %v2921
      %v2923 = vrot.slane %v2793, 6
      %v2924 = vrot.slane %v2785, 6
      %v2925 = vsel %vm1779, %v2923, %v2924
      %v2926 = vrot.slane %v2795, 6
      %v2927 = vsel %vm1779, %v2924, %v2926
      %v2932 = vmul.f32 %v2762, %v2920
      %v2933 = vmul.f32 %v2765, %v2922
      %v2934 = vmul.f32 %v2770, %v2925
      %v2935 = vmul.f32 %v2773, %v2927
      %v2936 = vadd.f32 %v2914, %v2932
      %v2937 = vadd.f32 %v2915, %v2933
      %v2938 = vadd.f32 %v2916, %v2934
      %v2939 = vadd.f32 %v2917, %v2935
      %v2940 = vpack.c.bf16 %v2470, %v2469
      %v2941 = vpack.c.bf16 %v2937, %v2936
      %v2942 = vpack.c.bf16 %v2472, %v2471
      %v2943 = vpack.c.bf16 %v2939, %v2938
      %v2944 = vld [vmem:[%s17] sm:$0xf]
      %v2945 = vld [vmem:[%s17 + $0x4] sm:$0xf]
      %v2946 = vld [vmem:[%s17 + $0x8] sm:$0xf]
      %v2947 = vld [vmem:[%s17 + $0xc] sm:$0xf]
      %v2948 = vld [vmem:[%s17 + $0x10] sm:$0xf]
      %v2949 = vld [vmem:[%s17 + $0x14] sm:$0xf]
      %v2950 = vld [vmem:[%s17 + $0x18] sm:$0xf]
      %v2951 = vld [vmem:[%s17 + $0x1c] sm:$0xf]
      %v2952 = vld [vmem:[%s18] sm:$0x1]
      %v2954 = vlaneseq
      %v2955 = vshrl.u32 %v2954, 7
      %v2956 = vsub.s32 0, %v2955
      %v2957 = vrot.slane %v2952, %v2956
      %v2967 = vunpack.c.l.b16 %v2944
      %v2968 = vunpack.c.l.b16 %v2945
      %v2969 = vunpack.c.l.b16 %v2946
      %v2970 = vunpack.c.l.b16 %v2947
      %v2971 = vunpack.c.l.b16 %v2948
      %v2972 = vunpack.c.l.b16 %v2949
      %v2973 = vunpack.c.l.b16 %v2950
      %v2974 = vunpack.c.l.b16 %v2951
      %v2975 = vpack.c.b16 %v2968, %v2967
      %v2976 = vpack.c.b16 %v2970, %v2969
      %v2977 = vpack.c.b16 %v2972, %v2971
      %v2978 = vpack.c.b16 %v2974, %v2973
      %v2984 = vsel %vm928, %v2940, 0
      %v2987 = vsel %vm928, %v2941, 0
      %v2990 = vsel %vm928, %v2942, 0
      %v2993 = vsel %vm928, %v2943, 0
      %2995 = vmatprep.subr.bf16.mxu0 0
      %2996 = vmatpush1.bf16.msra.mxu0 0
      %2997 = vmatprep.subr.bf16.mxu0 0
      %2998 = vmatpush1.bf16.msra.mxu0 0
      %2999 = vmatprep.subr.bf16.mxu0 0
      %3000 = vmatpush1.bf16.msra.mxu0 0
      %3001 = vmatprep.subr.bf16.mxu0 0
      %3002 = vmatpush1.bf16.msra.mxu0 0
      %3003 = vmatprep.subr.bf16.mxu0 0
      %3004 = vmatpush1.bf16.msra.mxu0 %v2978
      %3005 = vmatprep.subr.bf16.mxu0 0
      %3006 = vmatpush1.bf16.msra.mxu0 %v2977
      %3007 = vmatprep.subr.bf16.mxu0 0
      %3008 = vmatpush1.bf16.msra.mxu0 %v2976
      %3009 = vmatprep.subr.bf16.mxu0 0
      %3010 = vmatpush1.bf16.msra.mxu0 %v2975
      %3011 = vmatprep.subr.bf16.mxu0 0
      %3012 = vmatpush2.bf16.msra.mxu0 0
      %3013 = vmatprep.subr.bf16.mxu0 0
      %3014 = vmatpush2.bf16.msra.mxu0 0
      %3015 = vmatprep.subr.bf16.mxu0 0
      %3016 = vmatpush2.bf16.msra.mxu0 0
      %3017 = vmatprep.subr.bf16.mxu0 0
      %3018 = vmatpush2.bf16.msra.mxu0 0
      %3019 = vmatprep.subr.bf16.mxu0 0
      %3020 = vmatpush2.bf16.msra.mxu0 0
      %3021 = vmatprep.subr.bf16.mxu0 0
      %3022 = vmatpush2.bf16.msra.mxu0 0
      %3023 = vmatprep.subr.bf16.mxu0 0
      %3024 = vmatpush2.bf16.msra.mxu0 0
      %3025 = vmatprep.subr.bf16.mxu0 0
      %3026 = vmatpush2.bf16.msra.mxu0 0
      %3027 = vmatprep.mubr.bf16.mxu0 0
      %3028 = vmatmul.mubr.bf16.gmra.mxu0 %v2984
      %v3029 = vpop.f32.mrf.mxu0
      %v3030 = vadd.f32 %v2957, %v3029
      %v3031 = vpop.f32.mrf.mxu0
      %v3032 = vpop.f32.mrf.mxu0
      %v3033 = vadd.f32 %v2957, %v3032
      %v3034 = vpop.f32.mrf.mxu0
      %3035 = vmatprep.mubr.bf16.mxu0 0
      %3036 = vmatmul.mubr.bf16.gmra.mxu0 %v2987
      %v3037 = vpop.f32.mrf.mxu0
      %v3038 = vadd.f32 %v2957, %v3037
      %v3039 = vpop.f32.mrf.mxu0
      %v3040 = vpop.f32.mrf.mxu0
      %v3041 = vadd.f32 %v2957, %v3040
      %v3042 = vpop.f32.mrf.mxu0
      %3043 = vmatprep.mubr.bf16.mxu0 0
      %3044 = vmatmul.mubr.bf16.gmra.mxu0 %v2990
      %v3045 = vpop.f32.mrf.mxu0
      %v3046 = vadd.f32 %v2957, %v3045
      %v3047 = vpop.f32.mrf.mxu0
      %v3048 = vpop.f32.mrf.mxu0
      %v3049 = vadd.f32 %v2957, %v3048
      %v3050 = vpop.f32.mrf.mxu0
      %3051 = vmatprep.mubr.bf16.mxu0 0
      %3052 = vmatmul.mubr.bf16.gmra.mxu0 %v2993
      %v3053 = vpop.f32.mrf.mxu0
      %v3054 = vadd.f32 %v2957, %v3053
      %v3055 = vpop.f32.mrf.mxu0
      %v3056 = vpop.f32.mrf.mxu0
      %v3057 = vadd.f32 %v2957, %v3056
      %v3058 = vpop.f32.mrf.mxu0
      %3059 = vdwg.mxu0
      %v3060 = vsub.f32 0.0, %v3030
      %v3061 = vsub.f32 0.0, %v3033
      %v3062 = vsub.f32 0.0, %v3046
      %v3063 = vsub.f32 0.0, %v3049
      %v3064 = vmul.f32 %v3060, 1.442695
      %v3065 = vpow.pop %v3064
      %v3066 = vmul.f32 %v3061, 1.442695
      %v3067 = vpow.pop %v3066
      %v3068 = vmul.f32 %v3062, 1.442695
      %v3069 = vpow.pop %v3068
      %v3070 = vmul.f32 %v3063, 1.442695
      %v3071 = vpow.pop %v3070
      %v3072 = vadd.f32 %v3065, 1.0
      %v3073 = vadd.f32 %v3067, 1.0
      %v3074 = vadd.f32 %v3069, 1.0
      %v3075 = vadd.f32 %v3071, 1.0
      %v3076 = vrcp.pop %v3072
      %v3077 = vmul.f32 1.0, %v3076
      %v3078 = vrcp.pop %v3073
      %v3079 = vmul.f32 1.0, %v3078
      %v3080 = vrcp.pop %v3074
      %v3081 = vmul.f32 1.0, %v3080
      %v3082 = vrcp.pop %v3075
      %v3083 = vmul.f32 1.0, %v3082
      %v3084 = vsub.f32 0.0, %v3038
      %v3085 = vsub.f32 0.0, %v3041
      %v3086 = vsub.f32 0.0, %v3054
      %v3087 = vsub.f32 0.0, %v3057
      %v3088 = vmul.f32 %v3084, 1.442695
      %v3089 = vpow.pop %v3088
      %v3090 = vmul.f32 %v3085, 1.442695
      %v3091 = vpow.pop %v3090
      %v3092 = vmul.f32 %v3086, 1.442695
      %v3093 = vpow.pop %v3092
      %v3094 = vmul.f32 %v3087, 1.442695
      %v3095 = vpow.pop %v3094
      %v3096 = vadd.f32 %v3089, 1.0
      %v3097 = vadd.f32 %v3091, 1.0
      %v3098 = vadd.f32 %v3093, 1.0
      %v3099 = vadd.f32 %v3095, 1.0
      %v3100 = vrcp.pop %v3096
      %v3101 = vmul.f32 1.0, %v3100
      %v3102 = vrcp.pop %v3097
      %v3103 = vmul.f32 1.0, %v3102
      %v3104 = vrcp.pop %v3098
      %v3105 = vmul.f32 1.0, %v3104
      %v3106 = vrcp.pop %v3099
      %v3107 = vmul.f32 1.0, %v3106
      %v3108 = vld [vmem:[%s2] sm:$0xff]
      %v3109 = vld [vmem:[%s2 + $0x8] sm:$0xff]
      %v3110 = vld [vmem:[%s2 + $0x10] sm:$0xff]
      %v3111 = vld [vmem:[%s2 + $0x18] sm:$0xff]
      %v3112 = vld [vmem:[%s2 + $0x20] sm:$0xff]
      %v3113 = vld [vmem:[%s2 + $0x28] sm:$0xff]
      %v3114 = vld [vmem:[%s2 + $0x30] sm:$0xff]
      %v3115 = vld [vmem:[%s2 + $0x38] sm:$0xff]
      %3116 = vxpose.xlu0.b32.start [1/16] %v3077, 128
      %3117 = vxpose.xlu0.b32.cont [2/16] %v3079, 128
      %3118 = vxpose.xlu0.b32.cont [3/16] 0.0, 128
      %3119 = vxpose.xlu0.b32.cont [4/16] 0.0, 128
      %3120 = vxpose.xlu0.b32.cont [5/16] 0.0, 128
      %3121 = vxpose.xlu0.b32.cont [6/16] 0.0, 128
      %3122 = vxpose.xlu0.b32.cont [7/16] 0.0, 128
      %3123 = vxpose.xlu0.b32.cont [8/16] 0.0, 128
      %3124 = vxpose.xlu0.b32.cont [9/16] 0.0, 128
      %3125 = vxpose.xlu0.b32.cont [10/16] 0.0, 128
      %3126 = vxpose.xlu0.b32.cont [11/16] 0.0, 128
      %3127 = vxpose.xlu0.b32.cont [12/16] 0.0, 128
      %3128 = vxpose.xlu0.b32.cont [13/16] 0.0, 128
      %3129 = vxpose.xlu0.b32.cont [14/16] 0.0, 128
      %3130 = vxpose.xlu0.b32.cont [15/16] 0.0, 128
      %3131 = vxpose.xlu0.b32.end [16/16] 0.0, 128
      %v3132 = vpop.trf.xlu0
      %v3133 = vpop.trf.xlu0
      %v3134 = vpop.trf.xlu0
      %v3135 = vpop.trf.xlu0
      %v3136 = vpop.trf.xlu0
      %v3137 = vpop.trf.xlu0
      %v3138 = vpop.trf.xlu0
      %v3139 = vpop.trf.xlu0
      %v3140 = vpop.trf.xlu0
      %v3141 = vpop.trf.xlu0
      %v3142 = vpop.trf.xlu0
      %v3143 = vpop.trf.xlu0
      %v3144 = vpop.trf.xlu0
      %v3145 = vpop.trf.xlu0
      %v3146 = vpop.trf.xlu0
      %v3147 = vpop.trf.xlu0
      %3148 = vxpose.xlu0.b32.start [1/16] %v3081, 128
      %3149 = vxpose.xlu0.b32.cont [2/16] %v3083, 128
      %3150 = vxpose.xlu0.b32.cont [3/16] 0.0, 128
      %3151 = vxpose.xlu0.b32.cont [4/16] 0.0, 128
      %3152 = vxpose.xlu0.b32.cont [5/16] 0.0, 128
      %3153 = vxpose.xlu0.b32.cont [6/16] 0.0, 128
      %3154 = vxpose.xlu0.b32.cont [7/16] 0.0, 128
      %3155 = vxpose.xlu0.b32.cont [8/16] 0.0, 128
      %3156 = vxpose.xlu0.b32.cont [9/16] 0.0, 128
      %3157 = vxpose.xlu0.b32.cont [10/16] 0.0, 128
      %3158 = vxpose.xlu0.b32.cont [11/16] 0.0, 128
      %3159 = vxpose.xlu0.b32.cont [12/16] 0.0, 128
      %3160 = vxpose.xlu0.b32.cont [13/16] 0.0, 128
      %3161 = vxpose.xlu0.b32.cont [14/16] 0.0, 128
      %3162 = vxpose.xlu0.b32.cont [15/16] 0.0, 128
      %3163 = vxpose.xlu0.b32.end [16/16] 0.0, 128
      %v3164 = vpop.trf.xlu0
      %v3165 = vpop.trf.xlu0
      %v3166 = vpop.trf.xlu0
      %v3167 = vpop.trf.xlu0
      %v3168 = vpop.trf.xlu0
      %v3169 = vpop.trf.xlu0
      %v3170 = vpop.trf.xlu0
      %v3171 = vpop.trf.xlu0
      %v3172 = vpop.trf.xlu0
      %v3173 = vpop.trf.xlu0
      %v3174 = vpop.trf.xlu0
      %v3175 = vpop.trf.xlu0
      %v3176 = vpop.trf.xlu0
      %v3177 = vpop.trf.xlu0
      %v3178 = vpop.trf.xlu0
      %v3179 = vpop.trf.xlu0
      %v3181 = vsel %vm1211, %v3132, 0
      %v3184 = vsel %vm1211, %v3133, 0
      %v3187 = vsel %vm1211, %v3134, 0
      %v3190 = vsel %vm1211, %v3135, 0
      %v3193 = vsel %vm1211, %v3136, 0
      %v3196 = vsel %vm1211, %v3137, 0
      %v3199 = vsel %vm1211, %v3138, 0
      %v3202 = vsel %vm1211, %v3139, 0
      %v3205 = vsel %vm1211, %v3164, 0
      %v3208 = vsel %vm1211, %v3165, 0
      %v3211 = vsel %vm1211, %v3166, 0
      %v3214 = vsel %vm1211, %v3167, 0
      %v3217 = vsel %vm1211, %v3168, 0
      %v3220 = vsel %vm1211, %v3169, 0
      %v3223 = vsel %vm1211, %v3170, 0
      %v3226 = vsel %vm1211, %v3171, 0
      %3228 = vmatprep.subr.mxu0 0.0
      %3229 = vmatpush1.msra.mxu0 0.0
      %3230 = vmatprep.subr.mxu0 0.0
      %3231 = vmatpush1.msra.mxu0 0.0
      %3232 = vmatprep.subr.mxu0 0.0
      %3233 = vmatpush1.msra.mxu0 0.0
      %3234 = vmatprep.subr.mxu0 0.0
      %3235 = vmatpush1.msra.mxu0 0.0
      %3236 = vmatprep.subr.mxu0 0.0
      %3237 = vmatpush1.msra.mxu0 0.0
      %3238 = vmatprep.subr.mxu0 0.0
      %3239 = vmatpush1.msra.mxu0 0.0
      %3240 = vmatprep.subr.mxu0 0.0
      %3241 = vmatpush1.msra.mxu0 0.0
      %3242 = vmatprep.subr.mxu0 0.0
      %3243 = vmatpush1.msra.mxu0 0.0
      %3244 = vmatprep.subr.mxu0 0.0
      %3245 = vmatpush1.msra.mxu0 0.0
      %3246 = vmatprep.subr.mxu0 0.0
      %3247 = vmatpush1.msra.mxu0 0.0
      %3248 = vmatprep.subr.mxu0 0.0
      %3249 = vmatpush1.msra.mxu0 0.0
      %3250 = vmatprep.subr.mxu0 0.0
      %3251 = vmatpush1.msra.mxu0 0.0
      %3252 = vmatprep.subr.mxu0 0.0
      %3253 = vmatpush1.msra.mxu0 0.0
      %3254 = vmatprep.subr.mxu0 0.0
      %3255 = vmatpush1.msra.mxu0 0.0
      %3256 = vmatprep.subr.mxu0 %v3111
      %3257 = vmatpush1.msra.mxu0 %v3110
      %3258 = vmatprep.subr.mxu0 %v3109
      %3259 = vmatpush1.msra.mxu0 %v3108
      %3260 = vmatprep.subr.mxu0 0.0
      %3261 = vmatpush2.msra.mxu0 0.0
      %3262 = vmatprep.subr.mxu0 0.0
      %3263 = vmatpush2.msra.mxu0 0.0
      %3264 = vmatprep.subr.mxu0 0.0
      %3265 = vmatpush2.msra.mxu0 0.0
      %3266 = vmatprep.subr.mxu0 0.0
      %3267 = vmatpush2.msra.mxu0 0.0
      %3268 = vmatprep.subr.mxu0 0.0
      %3269 = vmatpush2.msra.mxu0 0.0
      %3270 = vmatprep.subr.mxu0 0.0
      %3271 = vmatpush2.msra.mxu0 0.0
      %3272 = vmatprep.subr.mxu0 0.0
      %3273 = vmatpush2.msra.mxu0 0.0
      %3274 = vmatprep.subr.mxu0 0.0
      %3275 = vmatpush2.msra.mxu0 0.0
      %3276 = vmatprep.subr.mxu0 0.0
      %3277 = vmatpush2.msra.mxu0 0.0
      %3278 = vmatprep.subr.mxu0 0.0
      %3279 = vmatpush2.msra.mxu0 0.0
      %3280 = vmatprep.subr.mxu0 0.0
      %3281 = vmatpush2.msra.mxu0 0.0
      %3282 = vmatprep.subr.mxu0 0.0
      %3283 = vmatpush2.msra.mxu0 0.0
      %3284 = vmatprep.subr.mxu0 0.0
      %3285 = vmatpush2.msra.mxu0 0.0
      %3286 = vmatprep.subr.mxu0 0.0
      %3287 = vmatpush2.msra.mxu0 0.0
      %3288 = vmatprep.subr.mxu0 0.0
      %3289 = vmatpush2.msra.mxu0 0.0
      %3290 = vmatprep.subr.mxu0 0.0
      %3291 = vmatpush2.msra.mxu0 0.0
      %3292 = vmatprep.mubr.f32.mxu0 0.0
      %3293 = vmatmul.mubr.f32.gmra.mxu0 %v3181
      %v3294 = vpop.f32.mrf.mxu0
      %v3295 = vadd.f32 0.0, %v3294
      %v3296 = vpop.f32.mrf.mxu0
      %v3297 = vadd.f32 0.0, %v3296
      %3298 = vmatprep.mubr.f32.mxu0 0.0
      %3299 = vmatmul.mubr.f32.gmra.mxu0 %v3184
      %v3300 = vpop.f32.mrf.mxu0
      %v3301 = vadd.f32 0.0, %v3300
      %v3302 = vpop.f32.mrf.mxu0
      %v3303 = vadd.f32 0.0, %v3302
      %3304 = vmatprep.mubr.f32.mxu0 0.0
      %3305 = vmatmul.mubr.f32.gmra.mxu0 %v3187
      %v3306 = vpop.f32.mrf.mxu0
      %v3307 = vadd.f32 0.0, %v3306
      %v3308 = vpop.f32.mrf.mxu0
      %v3309 = vadd.f32 0.0, %v3308
      %3310 = vmatprep.mubr.f32.mxu0 0.0
      %3311 = vmatmul.mubr.f32.gmra.mxu0 %v3190
      %v3312 = vpop.f32.mrf.mxu0
      %v3313 = vadd.f32 0.0, %v3312
      %v3314 = vpop.f32.mrf.mxu0
      %v3315 = vadd.f32 0.0, %v3314
      %3316 = vmatprep.mubr.f32.mxu0 0.0
      %3317 = vmatmul.mubr.f32.gmra.mxu0 %v3193
      %v3318 = vpop.f32.mrf.mxu0
      %v3319 = vadd.f32 0.0, %v3318
      %v3320 = vpop.f32.mrf.mxu0
      %v3321 = vadd.f32 0.0, %v3320
      %3322 = vmatprep.mubr.f32.mxu0 0.0
      %3323 = vmatmul.mubr.f32.gmra.mxu0 %v3196
      %v3324 = vpop.f32.mrf.mxu0
      %v3325 = vadd.f32 0.0, %v3324
      %v3326 = vpop.f32.mrf.mxu0
      %v3327 = vadd.f32 0.0, %v3326
      %3328 = vmatprep.mubr.f32.mxu0 0.0
      %3329 = vmatmul.mubr.f32.gmra.mxu0 %v3199
      %v3330 = vpop.f32.mrf.mxu0
      %v3331 = vadd.f32 0.0, %v3330
      %v3332 = vpop.f32.mrf.mxu0
      %v3333 = vadd.f32 0.0, %v3332
      %3334 = vmatprep.mubr.f32.mxu0 0.0
      %3335 = vmatmul.mubr.f32.gmra.mxu0 %v3202
      %v3336 = vpop.f32.mrf.mxu0
      %v3337 = vadd.f32 0.0, %v3336
      %v3338 = vpop.f32.mrf.mxu0
      %v3339 = vadd.f32 0.0, %v3338
      %3340 = vmatprep.mubr.f32.mxu0 0.0
      %3341 = vmatmul.mubr.f32.gmra.mxu0 %v3205
      %v3342 = vpop.f32.mrf.mxu0
      %v3343 = vadd.f32 0.0, %v3342
      %v3344 = vpop.f32.mrf.mxu0
      %v3345 = vadd.f32 0.0, %v3344
      %3346 = vmatprep.mubr.f32.mxu0 0.0
      %3347 = vmatmul.mubr.f32.gmra.mxu0 %v3208
      %v3348 = vpop.f32.mrf.mxu0
      %v3349 = vadd.f32 0.0, %v3348
      %v3350 = vpop.f32.mrf.mxu0
      %v3351 = vadd.f32 0.0, %v3350
      %3352 = vmatprep.mubr.f32.mxu0 0.0
      %3353 = vmatmul.mubr.f32.gmra.mxu0 %v3211
      %v3354 = vpop.f32.mrf.mxu0
      %v3355 = vadd.f32 0.0, %v3354
      %v3356 = vpop.f32.mrf.mxu0
      %v3357 = vadd.f32 0.0, %v3356
      %3358 = vmatprep.mubr.f32.mxu0 0.0
      %3359 = vmatmul.mubr.f32.gmra.mxu0 %v3214
      %v3360 = vpop.f32.mrf.mxu0
      %v3361 = vadd.f32 0.0, %v3360
      %v3362 = vpop.f32.mrf.mxu0
      %v3363 = vadd.f32 0.0, %v3362
      %3364 = vmatprep.mubr.f32.mxu0 0.0
      %3365 = vmatmul.mubr.f32.gmra.mxu0 %v3217
      %v3366 = vpop.f32.mrf.mxu0
      %v3367 = vadd.f32 0.0, %v3366
      %v3368 = vpop.f32.mrf.mxu0
      %v3369 = vadd.f32 0.0, %v3368
      %3370 = vmatprep.mubr.f32.mxu0 0.0
      %3371 = vmatmul.mubr.f32.gmra.mxu0 %v3220
      %v3372 = vpop.f32.mrf.mxu0
      %v3373 = vadd.f32 0.0, %v3372
      %v3374 = vpop.f32.mrf.mxu0
      %v3375 = vadd.f32 0.0, %v3374
      %3376 = vmatprep.mubr.f32.mxu0 0.0
      %3377 = vmatmul.mubr.f32.gmra.mxu0 %v3223
      %v3378 = vpop.f32.mrf.mxu0
      %v3379 = vadd.f32 0.0, %v3378
      %v3380 = vpop.f32.mrf.mxu0
      %v3381 = vadd.f32 0.0, %v3380
      %3382 = vmatprep.mubr.f32.mxu0 0.0
      %3383 = vmatmul.mubr.f32.gmra.mxu0 %v3226
      %v3384 = vpop.f32.mrf.mxu0
      %v3385 = vadd.f32 0.0, %v3384
      %v3386 = vpop.f32.mrf.mxu0
      %v3387 = vadd.f32 0.0, %v3386
      %3388 = vdwg.mxu0
      %3393 = vrot.lane.b32.xlu0 %v3101, 64
      %v3394 = vpop.permute.xlu0 %3393
      %3395 = vrot.lane.b32.xlu0 %v3103, 64
      %v3396 = vpop.permute.xlu0 %3395
      %3397 = vrot.lane.b32.xlu0 %v3105, 64
      %v3398 = vpop.permute.xlu0 %3397
      %3399 = vrot.lane.b32.xlu0 %v3107, 64
      %v3400 = vpop.permute.xlu0 %3399
      %3405 = vxpose.xlu0.b32.start [1/16] %v3394, 128
      %3406 = vxpose.xlu0.b32.cont [2/16] %v3396, 128
      %3407 = vxpose.xlu0.b32.cont [3/16] 0.0, 128
      %3408 = vxpose.xlu0.b32.cont [4/16] 0.0, 128
      %3409 = vxpose.xlu0.b32.cont [5/16] 0.0, 128
      %3410 = vxpose.xlu0.b32.cont [6/16] 0.0, 128
      %3411 = vxpose.xlu0.b32.cont [7/16] 0.0, 128
      %3412 = vxpose.xlu0.b32.cont [8/16] 0.0, 128
      %3413 = vxpose.xlu0.b32.cont [9/16] 0.0, 128
      %3414 = vxpose.xlu0.b32.cont [10/16] 0.0, 128
      %3415 = vxpose.xlu0.b32.cont [11/16] 0.0, 128
      %3416 = vxpose.xlu0.b32.cont [12/16] 0.0, 128
      %3417 = vxpose.xlu0.b32.cont [13/16] 0.0, 128
      %3418 = vxpose.xlu0.b32.cont [14/16] 0.0, 128
      %3419 = vxpose.xlu0.b32.cont [15/16] 0.0, 128
      %3420 = vxpose.xlu0.b32.end [16/16] 0.0, 128
      %v3421 = vpop.trf.xlu0
      %v3422 = vpop.trf.xlu0
      %v3423 = vpop.trf.xlu0
      %v3424 = vpop.trf.xlu0
      %v3425 = vpop.trf.xlu0
      %v3426 = vpop.trf.xlu0
      %v3427 = vpop.trf.xlu0
      %v3428 = vpop.trf.xlu0
      %v3429 = vpop.trf.xlu0
      %v3430 = vpop.trf.xlu0
      %v3431 = vpop.trf.xlu0
      %v3432 = vpop.trf.xlu0
      %v3433 = vpop.trf.xlu0
      %v3434 = vpop.trf.xlu0
      %v3435 = vpop.trf.xlu0
      %v3436 = vpop.trf.xlu0
      %3437 = vxpose.xlu0.b32.start [1/16] %v3398, 128
      %3438 = vxpose.xlu0.b32.cont [2/16] %v3400, 128
      %3439 = vxpose.xlu0.b32.cont [3/16] 0.0, 128
      %3440 = vxpose.xlu0.b32.cont [4/16] 0.0, 128
      %3441 = vxpose.xlu0.b32.cont [5/16] 0.0, 128
      %3442 = vxpose.xlu0.b32.cont [6/16] 0.0, 128
      %3443 = vxpose.xlu0.b32.cont [7/16] 0.0, 128
      %3444 = vxpose.xlu0.b32.cont [8/16] 0.0, 128
      %3445 = vxpose.xlu0.b32.cont [9/16] 0.0, 128
      %3446 = vxpose.xlu0.b32.cont [10/16] 0.0, 128
      %3447 = vxpose.xlu0.b32.cont [11/16] 0.0, 128
      %3448 = vxpose.xlu0.b32.cont [12/16] 0.0, 128
      %3449 = vxpose.xlu0.b32.cont [13/16] 0.0, 128
      %3450 = vxpose.xlu0.b32.cont [14/16] 0.0, 128
      %3451 = vxpose.xlu0.b32.cont [15/16] 0.0, 128
      %3452 = vxpose.xlu0.b32.end [16/16] 0.0, 128
      %v3453 = vpop.trf.xlu0
      %v3454 = vpop.trf.xlu0
      %v3455 = vpop.trf.xlu0
      %v3456 = vpop.trf.xlu0
      %v3457 = vpop.trf.xlu0
      %v3458 = vpop.trf.xlu0
      %v3459 = vpop.trf.xlu0
      %v3460 = vpop.trf.xlu0
      %v3461 = vpop.trf.xlu0
      %v3462 = vpop.trf.xlu0
      %v3463 = vpop.trf.xlu0
      %v3464 = vpop.trf.xlu0
      %v3465 = vpop.trf.xlu0
      %v3466 = vpop.trf.xlu0
      %v3467 = vpop.trf.xlu0
      %v3468 = vpop.trf.xlu0
      %v3470 = vsel %vm1211, %v3421, 0
      %v3473 = vsel %vm1211, %v3422, 0
      %v3476 = vsel %vm1211, %v3423, 0
      %v3479 = vsel %vm1211, %v3424, 0
      %v3482 = vsel %vm1211, %v3425, 0
      %v3485 = vsel %vm1211, %v3426, 0
      %v3488 = vsel %vm1211, %v3427, 0
      %v3491 = vsel %vm1211, %v3428, 0
      %v3494 = vsel %vm1211, %v3453, 0
      %v3497 = vsel %vm1211, %v3454, 0
      %v3500 = vsel %vm1211, %v3455, 0
      %v3503 = vsel %vm1211, %v3456, 0
      %v3506 = vsel %vm1211, %v3457, 0
      %v3509 = vsel %vm1211, %v3458, 0
      %v3512 = vsel %vm1211, %v3459, 0
      %v3515 = vsel %vm1211, %v3460, 0
      %3517 = vmatprep.subr.mxu0 0.0
      %3518 = vmatpush1.msra.mxu0 0.0
      %3519 = vmatprep.subr.mxu0 0.0
      %3520 = vmatpush1.msra.mxu0 0.0
      %3521 = vmatprep.subr.mxu0 0.0
      %3522 = vmatpush1.msra.mxu0 0.0
      %3523 = vmatprep.subr.mxu0 0.0
      %3524 = vmatpush1.msra.mxu0 0.0
      %3525 = vmatprep.subr.mxu0 0.0
      %3526 = vmatpush1.msra.mxu0 0.0
      %3527 = vmatprep.subr.mxu0 0.0
      %3528 = vmatpush1.msra.mxu0 0.0
      %3529 = vmatprep.subr.mxu0 0.0
      %3530 = vmatpush1.msra.mxu0 0.0
      %3531 = vmatprep.subr.mxu0 0.0
      %3532 = vmatpush1.msra.mxu0 0.0
      %3533 = vmatprep.subr.mxu0 0.0
      %3534 = vmatpush1.msra.mxu0 0.0
      %3535 = vmatprep.subr.mxu0 0.0
      %3536 = vmatpush1.msra.mxu0 0.0
      %3537 = vmatprep.subr.mxu0 0.0
      %3538 = vmatpush1.msra.mxu0 0.0
      %3539 = vmatprep.subr.mxu0 0.0
      %3540 = vmatpush1.msra.mxu0 0.0
      %3541 = vmatprep.subr.mxu0 0.0
      %3542 = vmatpush1.msra.mxu0 0.0
      %3543 = vmatprep.subr.mxu0 0.0
      %3544 = vmatpush1.msra.mxu0 0.0
      %3545 = vmatprep.subr.mxu0 %v3115
      %3546 = vmatpush1.msra.mxu0 %v3114
      %3547 = vmatprep.subr.mxu0 %v3113
      %3548 = vmatpush1.msra.mxu0 %v3112
      %3549 = vmatprep.subr.mxu0 0.0
      %3550 = vmatpush2.msra.mxu0 0.0
      %3551 = vmatprep.subr.mxu0 0.0
      %3552 = vmatpush2.msra.mxu0 0.0
      %3553 = vmatprep.subr.mxu0 0.0
      %3554 = vmatpush2.msra.mxu0 0.0
      %3555 = vmatprep.subr.mxu0 0.0
      %3556 = vmatpush2.msra.mxu0 0.0
      %3557 = vmatprep.subr.mxu0 0.0
      %3558 = vmatpush2.msra.mxu0 0.0
      %3559 = vmatprep.subr.mxu0 0.0
      %3560 = vmatpush2.msra.mxu0 0.0
      %3561 = vmatprep.subr.mxu0 0.0
      %3562 = vmatpush2.msra.mxu0 0.0
      %3563 = vmatprep.subr.mxu0 0.0
      %3564 = vmatpush2.msra.mxu0 0.0
      %3565 = vmatprep.subr.mxu0 0.0
      %3566 = vmatpush2.msra.mxu0 0.0
      %3567 = vmatprep.subr.mxu0 0.0
      %3568 = vmatpush2.msra.mxu0 0.0
      %3569 = vmatprep.subr.mxu0 0.0
      %3570 = vmatpush2.msra.mxu0 0.0
      %3571 = vmatprep.subr.mxu0 0.0
      %3572 = vmatpush2.msra.mxu0 0.0
      %3573 = vmatprep.subr.mxu0 0.0
      %3574 = vmatpush2.msra.mxu0 0.0
      %3575 = vmatprep.subr.mxu0 0.0
      %3576 = vmatpush2.msra.mxu0 0.0
      %3577 = vmatprep.subr.mxu0 0.0
      %3578 = vmatpush2.msra.mxu0 0.0
      %3579 = vmatprep.subr.mxu0 0.0
      %3580 = vmatpush2.msra.mxu0 0.0
      %3581 = vmatprep.mubr.f32.mxu0 0.0
      %3582 = vmatmul.mubr.f32.gmra.mxu0 %v3470
      %v3583 = vpop.f32.mrf.mxu0
      %v3584 = vadd.f32 0.0, %v3583
      %v3585 = vpop.f32.mrf.mxu0
      %v3586 = vadd.f32 0.0, %v3585
      %3587 = vmatprep.mubr.f32.mxu0 0.0
      %3588 = vmatmul.mubr.f32.gmra.mxu0 %v3473
      %v3589 = vpop.f32.mrf.mxu0
      %v3590 = vadd.f32 0.0, %v3589
      %v3591 = vpop.f32.mrf.mxu0
      %v3592 = vadd.f32 0.0, %v3591
      %3593 = vmatprep.mubr.f32.mxu0 0.0
      %3594 = vmatmul.mubr.f32.gmra.mxu0 %v3476
      %v3595 = vpop.f32.mrf.mxu0
      %v3596 = vadd.f32 0.0, %v3595
      %v3597 = vpop.f32.mrf.mxu0
      %v3598 = vadd.f32 0.0, %v3597
      %3599 = vmatprep.mubr.f32.mxu0 0.0
      %3600 = vmatmul.mubr.f32.gmra.mxu0 %v3479
      %v3601 = vpop.f32.mrf.mxu0
      %v3602 = vadd.f32 0.0, %v3601
      %v3603 = vpop.f32.mrf.mxu0
      %v3604 = vadd.f32 0.0, %v3603
      %3605 = vmatprep.mubr.f32.mxu0 0.0
      %3606 = vmatmul.mubr.f32.gmra.mxu0 %v3482
      %v3607 = vpop.f32.mrf.mxu0
      %v3608 = vadd.f32 0.0, %v3607
      %v3609 = vpop.f32.mrf.mxu0
      %v3610 = vadd.f32 0.0, %v3609
      %3611 = vmatprep.mubr.f32.mxu0 0.0
      %3612 = vmatmul.mubr.f32.gmra.mxu0 %v3485
      %v3613 = vpop.f32.mrf.mxu0
      %v3614 = vadd.f32 0.0, %v3613
      %v3615 = vpop.f32.mrf.mxu0
      %v3616 = vadd.f32 0.0, %v3615
      %3617 = vmatprep.mubr.f32.mxu0 0.0
      %3618 = vmatmul.mubr.f32.gmra.mxu0 %v3488
      %v3619 = vpop.f32.mrf.mxu0
      %v3620 = vadd.f32 0.0, %v3619
      %v3621 = vpop.f32.mrf.mxu0
      %v3622 = vadd.f32 0.0, %v3621
      %3623 = vmatprep.mubr.f32.mxu0 0.0
      %3624 = vmatmul.mubr.f32.gmra.mxu0 %v3491
      %v3625 = vpop.f32.mrf.mxu0
      %v3626 = vadd.f32 0.0, %v3625
      %v3627 = vpop.f32.mrf.mxu0
      %v3628 = vadd.f32 0.0, %v3627
      %3629 = vmatprep.mubr.f32.mxu0 0.0
      %3630 = vmatmul.mubr.f32.gmra.mxu0 %v3494
      %v3631 = vpop.f32.mrf.mxu0
      %v3632 = vadd.f32 0.0, %v3631
      %v3633 = vpop.f32.mrf.mxu0
      %v3634 = vadd.f32 0.0, %v3633
      %3635 = vmatprep.mubr.f32.mxu0 0.0
      %3636 = vmatmul.mubr.f32.gmra.mxu0 %v3497
      %v3637 = vpop.f32.mrf.mxu0
      %v3638 = vadd.f32 0.0, %v3637
      %v3639 = vpop.f32.mrf.mxu0
      %v3640 = vadd.f32 0.0, %v3639
      %3641 = vmatprep.mubr.f32.mxu0 0.0
      %3642 = vmatmul.mubr.f32.gmra.mxu0 %v3500
      %v3643 = vpop.f32.mrf.mxu0
      %v3644 = vadd.f32 0.0, %v3643
      %v3645 = vpop.f32.mrf.mxu0
      %v3646 = vadd.f32 0.0, %v3645
      %3647 = vmatprep.mubr.f32.mxu0 0.0
      %3648 = vmatmul.mubr.f32.gmra.mxu0 %v3503
      %v3649 = vpop.f32.mrf.mxu0
      %v3650 = vadd.f32 0.0, %v3649
      %v3651 = vpop.f32.mrf.mxu0
      %v3652 = vadd.f32 0.0, %v3651
      %3653 = vmatprep.mubr.f32.mxu0 0.0
      %3654 = vmatmul.mubr.f32.gmra.mxu0 %v3506
      %v3655 = vpop.f32.mrf.mxu0
      %v3656 = vadd.f32 0.0, %v3655
      %v3657 = vpop.f32.mrf.mxu0
      %v3658 = vadd.f32 0.0, %v3657
      %3659 = vmatprep.mubr.f32.mxu0 0.0
      %3660 = vmatmul.mubr.f32.gmra.mxu0 %v3509
      %v3661 = vpop.f32.mrf.mxu0
      %v3662 = vadd.f32 0.0, %v3661
      %v3663 = vpop.f32.mrf.mxu0
      %v3664 = vadd.f32 0.0, %v3663
      %3665 = vmatprep.mubr.f32.mxu0 0.0
      %3666 = vmatmul.mubr.f32.gmra.mxu0 %v3512
      %v3667 = vpop.f32.mrf.mxu0
      %v3668 = vadd.f32 0.0, %v3667
      %v3669 = vpop.f32.mrf.mxu0
      %v3670 = vadd.f32 0.0, %v3669
      %3671 = vmatprep.mubr.f32.mxu0 0.0
      %3672 = vmatmul.mubr.f32.gmra.mxu0 %v3515
      %v3673 = vpop.f32.mrf.mxu0
      %v3674 = vadd.f32 0.0, %v3673
      %v3675 = vpop.f32.mrf.mxu0
      %v3676 = vadd.f32 0.0, %v3675
      %3677 = vdwg.mxu0
      %v3678 = vmul.f32 %v3295, %v3584
      %v3679 = vmul.f32 %v3297, %v3586
      %v3680 = vmul.f32 %v3301, %v3590
      %v3681 = vmul.f32 %v3303, %v3592
      %v3682 = vmul.f32 %v3307, %v3596
      %v3683 = vmul.f32 %v3309, %v3598
      %v3684 = vmul.f32 %v3313, %v3602
      %v3685 = vmul.f32 %v3315, %v3604
      %v3686 = vmul.f32 %v3319, %v3608
      %v3687 = vmul.f32 %v3321, %v3610
      %v3688 = vmul.f32 %v3325, %v3614
      %v3689 = vmul.f32 %v3327, %v3616
      %v3690 = vmul.f32 %v3331, %v3620
      %v3691 = vmul.f32 %v3333, %v3622
      %v3692 = vmul.f32 %v3337, %v3626
      %v3693 = vmul.f32 %v3339, %v3628
      %v3694 = vmul.f32 %v3343, %v3632
      %v3695 = vmul.f32 %v3345, %v3634
      %v3696 = vmul.f32 %v3349, %v3638
      %v3697 = vmul.f32 %v3351, %v3640
      %v3698 = vmul.f32 %v3355, %v3644
      %v3699 = vmul.f32 %v3357, %v3646
      %v3700 = vmul.f32 %v3361, %v3650
      %v3701 = vmul.f32 %v3363, %v3652
      %v3702 = vmul.f32 %v3367, %v3656
      %v3703 = vmul.f32 %v3369, %v3658
      %v3704 = vmul.f32 %v3373, %v3662
      %v3705 = vmul.f32 %v3375, %v3664
      %v3706 = vmul.f32 %v3379, %v3668
      %v3707 = vmul.f32 %v3381, %v3670
      %v3708 = vmul.f32 %v3385, %v3674
      %v3709 = vmul.f32 %v3387, %v3676
      %v3710 = vmul.f32 %v612, %v3678
      %v3711 = vmul.f32 %v613, %v3679
      %v3712 = vmul.f32 %v614, %v3680
      %v3713 = vmul.f32 %v615, %v3681
      %v3714 = vmul.f32 %v616, %v3682
      %v3715 = vmul.f32 %v617, %v3683
      %v3716 = vmul.f32 %v618, %v3684
      %v3717 = vmul.f32 %v619, %v3685
      %v3718 = vmul.f32 %v620, %v3686
      %v3719 = vmul.f32 %v621, %v3687
      %v3720 = vmul.f32 %v622, %v3688
      %v3721 = vmul.f32 %v623, %v3689
      %v3722 = vmul.f32 %v624, %v3690
      %v3723 = vmul.f32 %v625, %v3691
      %v3724 = vmul.f32 %v626, %v3692
      %v3725 = vmul.f32 %v627, %v3693
      %v3726 = vmul.f32 %v628, %v3694
      %v3727 = vmul.f32 %v629, %v3695
      %v3728 = vmul.f32 %v630, %v3696
      %v3729 = vmul.f32 %v631, %v3697
      %v3730 = vmul.f32 %v632, %v3698
      %v3731 = vmul.f32 %v633, %v3699
      %v3732 = vmul.f32 %v634, %v3700
      %v3733 = vmul.f32 %v635, %v3701
      %v3734 = vmul.f32 %v636, %v3702
      %v3735 = vmul.f32 %v637, %v3703
      %v3736 = vmul.f32 %v638, %v3704
      %v3737 = vmul.f32 %v639, %v3705
      %v3738 = vmul.f32 %v640, %v3706
      %v3739 = vmul.f32 %v641, %v3707
      %v3740 = vmul.f32 %v642, %v3708
      %v3741 = vmul.f32 %v643, %v3709
      %3742 = vst [vmem:[%s609] sm:$0xff] %v3710
      %3743 = vst [vmem:[%s609 + $0x8] sm:$0xff] %v3711
      %3744 = vst [vmem:[%s609 + $0x10] sm:$0xff] %v3712
      %3745 = vst [vmem:[%s609 + $0x18] sm:$0xff] %v3713
      %3746 = vst [vmem:[%s609 + $0x20] sm:$0xff] %v3714
      %3747 = vst [vmem:[%s609 + $0x28] sm:$0xff] %v3715
      %3748 = vst [vmem:[%s609 + $0x30] sm:$0xff] %v3716
      %3749 = vst [vmem:[%s609 + $0x38] sm:$0xff] %v3717
      %3750 = vst [vmem:[%s609 + $0x40] sm:$0xff] %v3718
      %3751 = vst [vmem:[%s609 + $0x48] sm:$0xff] %v3719
      %3752 = vst [vmem:[%s609 + $0x50] sm:$0xff] %v3720
      %3753 = vst [vmem:[%s609 + $0x58] sm:$0xff] %v3721
      %3754 = vst [vmem:[%s609 + $0x60] sm:$0xff] %v3722
      %3755 = vst [vmem:[%s609 + $0x68] sm:$0xff] %v3723
      %3756 = vst [vmem:[%s609 + $0x70] sm:$0xff] %v3724
      %3757 = vst [vmem:[%s609 + $0x78] sm:$0xff] %v3725
      %3758 = vst [vmem:[%s609 + $0x80] sm:$0xff] %v3726
      %3759 = vst [vmem:[%s609 + $0x88] sm:$0xff] %v3727
      %3760 = vst [vmem:[%s609 + $0x90] sm:$0xff] %v3728
      %3761 = vst [vmem:[%s609 + $0x98] sm:$0xff] %v3729
      %3762 = vst [vmem:[%s609 + $0xa0] sm:$0xff] %v3730
      %3763 = vst [vmem:[%s609 + $0xa8] sm:$0xff] %v3731
      %3764 = vst [vmem:[%s609 + $0xb0] sm:$0xff] %v3732
      %3765 = vst [vmem:[%s609 + $0xb8] sm:$0xff] %v3733
      %3766 = vst [vmem:[%s609 + $0xc0] sm:$0xff] %v3734
      %3767 = vst [vmem:[%s609 + $0xc8] sm:$0xff] %v3735
      %3768 = vst [vmem:[%s609 + $0xd0] sm:$0xff] %v3736
      %3769 = vst [vmem:[%s609 + $0xd8] sm:$0xff] %v3737
      %3770 = vst [vmem:[%s609 + $0xe0] sm:$0xff] %v3738
      %3771 = vst [vmem:[%s609 + $0xe8] sm:$0xff] %v3739
      %3772 = vst [vmem:[%s609 + $0xf0] sm:$0xff] %v3740
      %3773 = vst [vmem:[%s609 + $0xf8] sm:$0xff] %v3741
      %s3774 = smul.u32 2, %s30
      %p3775 = scmp.lt.s32.totalorder %s3774, 3
      %s3776 = scalar_select %p3775, %s3774, 3
      %s3777 = smul.addr %s3776, 16
      %s3778 = smul.addr %s3777, 8
      %s3779 = scalar_lea.vmem %s19, %s3778
      // Predicated region
      $region97: #{coord_att_forward.1} parent=95 // pred_check
        %p3780 = pneg %p452
      $region98: #{coord_att_forward.1} parent=95 // pred_check_branch
        %3782 = sbr.rel (%p3780) target = $region100
      $region99: #{coord_att_forward.1} parent=95 // pred_region
        %s3783 = smul.u32 2, %s30
      $region100: #{coord_att_forward.1} parent=95 // pred_fallthru
        _
    $region96: #{coord_att_forward.1} parent=5 // pred_fallthru
      _
    %p3784 = scmp.le.s32.totalorder 2, %s25
    // Predicated region
    $region101: #{coord_att_forward.1} parent=5 // pred_check
      %p3785 = pneg %p3784
    $region102: #{coord_att_forward.1} parent=5 // pred_check_branch
      %3787 = sbr.rel (%p3785) target = $region104
    $region103: #{coord_att_forward.1} parent=5 // pred_region
      %s3788 = ssub.s32 %s25, 2
      // Predicated region
      $region105: #{coord_att_forward.1} parent=103 // pred_check
        %p3789 = pneg %p458
      $region106: #{coord_att_forward.1} parent=103 // pred_check_branch
        %3791 = sbr.rel (%p3789) target = $region108
      $region107: #{coord_att_forward.1} parent=103 // pred_region
        %s3792 = smul.u32 2, %s31
        %p3793 = scmp.lt.s32.totalorder %s3792, 3
        %s3794 = scalar_select %p3793, %s3792, 3
        %s3795 = smul.addr %s3794, 16
        %s3796 = smul.addr %s3795, 8
        %s3797 = scalar_lea.vmem %s19, %s3796
      $region108: #{coord_att_forward.1} parent=103 // pred_fallthru
        _
    $region104: #{coord_att_forward.1} parent=5 // pred_fallthru
      _
  $region6: #{coord_att_forward.1} parent=0 // loop_footer
    %s29 = sadd.s32 1, %s25
  $region7: #{coord_att_forward.1} parent=0 // loop_footer_branch
    %24 = sbr.rel target = $region3
  $region8: #{coord_att_forward.1} parent=0 // loop_exit
    _

</llo_original>
